<compile_context>
chip_gen: v5e
topology: v5e:2x2
jax: 0.10.0
libtpu: 0.0.40
codegen_flags: <defaults>
</compile_context>

<pallas_src>
import functools

import jax
import jax.numpy as jnp
from jax.experimental import pallas as pl
from jax.experimental.pallas import tpu as pltpu

# Padded hidden sizes (logical: 500, 500, 2000) -> (8,128)-aligned.
H1 = 512
H2 = 512
H3 = 2048

_FUSED_MAX_ROWS_SMALL_VMEM = 512    # v7x (64 MiB physical VMEM)
_FUSED_MAX_ROWS_LARGE_VMEM = 1024   # v5e / v6e (128 MiB physical VMEM)


def _round_up(x, m):
    return ((x + m - 1) // m) * m


@functools.lru_cache(maxsize=1)
def _vmem_limit():
    """Generation-aware scoped-VMEM limit (~75% of physical, capped at 100 MiB)."""
    try:
        cap = int(pltpu.get_tpu_info().vmem_capacity_bytes)
        return max(32 << 20, min(3 * cap // 4, 100 << 20))
    except Exception:
        return 32 << 20


def _compiler_params(dimension_semantics=None):
    return pltpu.CompilerParams(
        dimension_semantics=dimension_semantics,
        vmem_limit_bytes=_vmem_limit())


def _const_spec(arr):
    """Weights stay VMEM-resident: constant block index across the whole grid."""
    zeros = (0,) * arr.ndim
    return pl.BlockSpec(arr.shape, lambda *_: zeros)


# ----------------------------------------------------------------------------
# Kernel bodies
# ----------------------------------------------------------------------------
def _mlp_body(x, w1, b1, w2, b2, w3, b3, wg):
    """MLP encoder + GConv 'support' = relu-MLP(x) @ Wg, f32 accumulation."""
    f32, bf16 = jnp.float32, jnp.bfloat16
    h = jnp.maximum(jnp.dot(x, w1, preferred_element_type=f32) + b1, 0.0)
    h = jnp.maximum(jnp.dot(h.astype(bf16), w2, preferred_element_type=f32) + b2, 0.0)
    h = jnp.maximum(jnp.dot(h.astype(bf16), w3, preferred_element_type=f32) + b3, 0.0)
    return jnp.dot(h.astype(bf16), wg, preferred_element_type=f32)   # (rows, z_pad)


def _heads(g, wh, bh, z_pad):
    """Fused mu|logvar head; softplus only on the (lane-aligned) logvar half."""
    head = jnp.dot(g, wh, preferred_element_type=jnp.float32) + bh
    mu = head[:, :z_pad]
    lv = head[:, z_pad:]
    lv = jnp.maximum(lv, 0.0) + jnp.log1p(jnp.exp(-jnp.abs(lv)))   # stable softplus
    return mu, lv


def _mlp_support_kernel(x_ref, w1_ref, b1_ref, w2_ref, b2_ref, w3_ref, b3_ref,
                        wg_ref, support_ref):
    support = _mlp_body(x_ref[...], w1_ref[...], b1_ref[...], w2_ref[...],
                        b2_ref[...], w3_ref[...], b3_ref[...], wg_ref[...])
    support_ref[...] = support.astype(support_ref.dtype)            # bf16 store


def _gconv_heads_kernel(adj_ref, support_ref, bg_ref, wh_ref, bh_ref, out_ref,
                        acc_ref, *, z_pad):
    """g = relu(adj @ support + bg); heads, K-tiled over adj columns."""
    k = pl.program_id(1)

    @pl.when(k == 0)
    def _():
        acc_ref[...] = jnp.zeros_like(acc_ref)

    acc_ref[...] += jnp.dot(adj_ref[...], support_ref[...],
                            preferred_element_type=jnp.float32)

    @pl.when(k == pl.num_programs(1) - 1)
    def _():
        g = jnp.maximum(acc_ref[...] + bg_ref[...], 0.0)
        mu, lv = _heads(g, wh_ref[...], bh_ref[...], z_pad)
        out_ref[:, :z_pad] = mu.astype(out_ref.dtype)
        out_ref[:, z_pad:] = lv.astype(out_ref.dtype)


def _fused_kernel(x_ref, adj_ref, w1_ref, b1_ref, w2_ref, b2_ref, w3_ref, b3_ref,
                  wg_ref, bg_ref, wh_ref, bh_ref, out_ref, *, z_pad):
    """Small-N fast path: whole forward pass in one launch (grid-less)."""
    support = _mlp_body(x_ref[...], w1_ref[...], b1_ref[...], w2_ref[...],
                        b2_ref[...], w3_ref[...], b3_ref[...], wg_ref[...])
    g = jnp.dot(adj_ref[...], support.astype(jnp.bfloat16),
                preferred_element_type=jnp.float32) + bg_ref[...]
    g = jnp.maximum(g, 0.0)
    mu, lv = _heads(g, wh_ref[...], bh_ref[...], z_pad)
    out_ref[:, :z_pad] = mu.astype(out_ref.dtype)
    out_ref[:, z_pad:] = lv.astype(out_ref.dtype)


# ----------------------------------------------------------------------------
# Tiling helpers
# ----------------------------------------------------------------------------
def _two_stage_tiles(n):
    """(stage1 row tile, stage2 row tile, padded N). Guarantees >= 2 row blocks
    for N >= 16 so 'parallel' semantics can engage both v7x TensorCores."""
    if n >= 1024:
        return 512, 256, _round_up(n, 512)
    if n >= 512:
        return 256, 256, _round_up(n, 256)
    if n >= 16:
        tm = _round_up((n + 1) // 2, 8)
        return tm, tm, _round_up(n, tm)
    tm = max(8, _round_up(n, 8))
    return tm, tm, tm


def _k_tile(n_pad):
    """adj-column (reduction) tile for stage 2; bounds the per-step adj slab."""
    for t in (2048, 1024, 512, 256, 128):
        if n_pad > t and n_pad % t == 0:
            return t
    return n_pad


# ----------------------------------------------------------------------------
# Wrapper
# ----------------------------------------------------------------------------
@functools.partial(jax.jit, static_argnames=("z_dim", "force_two_stage"))
def view_specific_encoder_gaussian(x, adj, params, z_dim, force_two_stage=False):
    """Forward pass of view_specific_encoder_Gaussian. Returns (mu, logvar)."""
    n, view_dim = x.shape
    z_pad = params["wg"].shape[1]       # latent dim padded to a 128-lane multiple
    f32, bf16 = jnp.float32, jnp.bfloat16

    w_args = (params["w1"], params["b1"], params["w2"], params["b2"],
              params["w3"], params["b3"], params["wg"])
    h_args = (params["bg"], params["wh"], params["bh"])
    w_bytes = sum(int(a.size) * a.dtype.itemsize for a in w_args + h_args)

    fused_max = (_FUSED_MAX_ROWS_LARGE_VMEM if _vmem_limit() >= (80 << 20)
                 else _FUSED_MAX_ROWS_SMALL_VMEM)

    if not force_two_stage and n <= fused_max:
        # -------- small-N fast path: one launch, no HBM support round-trip ----
        n_pad = max(8, _round_up(n, 8))
        x_p = jnp.pad(x, ((0, n_pad - n), (0, 0)))
        adj_p = jnp.pad(adj, ((0, n_pad - n), (0, n_pad - n))).astype(bf16)

        flops = 2 * n_pad * (view_dim * H1 + H1 * H2 + H2 * H3 + H3 * z_pad
                             + n_pad * z_pad + z_pad * 2 * z_pad)
        bytes_acc = (int(x_p.size) * 4 + int(adj_p.size) * 2 + w_bytes
                     + n_pad * 2 * z_pad * 4)

        out = pl.pallas_call(
            functools.partial(_fused_kernel, z_pad=z_pad),
            out_shape=jax.ShapeDtypeStruct((n_pad, 2 * z_pad), f32),
            compiler_params=_compiler_params(),
            cost_estimate=pl.CostEstimate(
                flops=flops, transcendentals=2 * n_pad * z_pad,
                bytes_accessed=bytes_acc),
        )(x_p, adj_p, *w_args, *h_args)

        return out[:n, :z_dim], out[:n, z_pad:z_pad + z_dim]

    # -------- two-stage path (large N) -----------------------------------------
    tm1, tm2, n_pad = _two_stage_tiles(n)
    tk = _k_tile(n_pad)

    x_p = jnp.pad(x, ((0, n_pad - n), (0, 0)))
    adj_p = jnp.pad(adj, ((0, n_pad - n), (0, n_pad - n))).astype(bf16)

    # stage 1: per-row MLP + GConv support = MLP(x) @ Wg (row-parallel, weights resident)
    flops1 = 2 * n_pad * (view_dim * H1 + H1 * H2 + H2 * H3 + H3 * z_pad)
    bytes1 = int(x_p.size) * 4 + w_bytes + n_pad * z_pad * 2

    support = pl.pallas_call(
        _mlp_support_kernel,
        out_shape=jax.ShapeDtypeStruct((n_pad, z_pad), bf16),
        grid=(n_pad // tm1,),
        in_specs=[pl.BlockSpec((tm1, view_dim), lambda i: (i, 0))]
                 + [_const_spec(a) for a in w_args],
        out_specs=pl.BlockSpec((tm1, z_pad), lambda i: (i, 0)),
        compiler_params=_compiler_params(("parallel",)),
        cost_estimate=pl.CostEstimate(flops=flops1, transcendentals=0,
                                      bytes_accessed=bytes1),
    )(x_p, *w_args)

    # stage 2: g = relu(adj @ support + bg); fused [mu | softplus(logvar)] heads.
    flops2 = 2 * n_pad * (n_pad * z_pad + z_pad * 2 * z_pad)
    bytes2 = (int(adj_p.size) * 2 + (n_pad // tm2) * n_pad * z_pad * 2
              + sum(int(a.size) * a.dtype.itemsize for a in h_args)
              + n_pad * 2 * z_pad * 4)

    out = pl.pallas_call(
        functools.partial(_gconv_heads_kernel, z_pad=z_pad),
        out_shape=jax.ShapeDtypeStruct((n_pad, 2 * z_pad), f32),
        grid=(n_pad // tm2, n_pad // tk),
        in_specs=[pl.BlockSpec((tm2, tk), lambda i, k: (i, k)),
                  pl.BlockSpec((tk, z_pad), lambda i, k: (k, 0))]
                 + [_const_spec(a) for a in h_args],
        out_specs=pl.BlockSpec((tm2, 2 * z_pad), lambda i, k: (i, 0)),
        scratch_shapes=[pltpu.VMEM((tm2, z_pad), f32)],
        compiler_params=_compiler_params(("parallel", "arbitrary")),
        cost_estimate=pl.CostEstimate(flops=flops2,
                                      transcendentals=2 * n_pad * z_pad,
                                      bytes_accessed=bytes2),
    )(adj_p, support, *h_args)

    return out[:n, :z_dim], out[:n, z_pad:z_pad + z_dim]


# ----------------------------------------------------------------------------
# Parameter init (PyTorch-equivalent bounds; hidden dims padded to 512/2048 and
# latent lanes padded to a multiple of 128; big weights stored bf16).  Weights
# are math-style (in_features, out_features): y = x @ W + b.
# ----------------------------------------------------------------------------
def init_params(key, view_dim, latent_dim):
    z_pad = max(128, _round_up(latent_dim, 128))

    def uniform(k, shape, bound):
        return jax.random.uniform(k, shape, jnp.float32, -bound, bound)

    def pad_to(a, shape):
        return jnp.pad(a, [(0, t - s) for s, t in zip(a.shape, shape)])

    def linear(k, fan_in, fan_out, pad_in, pad_out):
        kw, kb = jax.random.split(k)
        bound = 1.0 / (fan_in ** 0.5)          # nn.Linear default
        w = pad_to(uniform(kw, (fan_in, fan_out), bound), (pad_in, pad_out))
        b = pad_to(uniform(kb, (1, fan_out), bound), (1, pad_out))
        return w, b

    k1, k2, k3, k4, k5, k6 = jax.random.split(key, 6)

    w1, b1 = linear(k1, view_dim, 500, view_dim, H1)
    w2, b2 = linear(k2, 500, 500, H1, H2)
    w3, b3 = linear(k3, 500, 2000, H2, H3)

    # GConv.reset_parameters: U(-1/sqrt(out_features), 1/sqrt(out_features))
    kgw, kgb = jax.random.split(k4)
    gb = 1.0 / (latent_dim ** 0.5)
    wg = pad_to(uniform(kgw, (2000, latent_dim), gb), (H3, z_pad))
    bg = pad_to(uniform(kgb, (1, latent_dim), gb), (1, z_pad))

    wmu, bmu = linear(k5, latent_dim, latent_dim, z_pad, z_pad)
    wlv, blv = linear(k6, latent_dim, latent_dim, z_pad, z_pad)
    wh = jnp.concatenate([wmu, wlv], axis=1)   # (z_pad, 2*z_pad) fused head weight
    bh = jnp.concatenate([bmu, blv], axis=1)   # (1, 2*z_pad)

    return dict(
        w1=w1, b1=b1,
        w2=w2.astype(jnp.bfloat16), b2=b2,
        w3=w3.astype(jnp.bfloat16), b3=b3,
        wg=wg.astype(jnp.bfloat16), bg=bg,
        wh=wh, bh=bh,
    )


# ----------------------------------------------------------------------------
# Pure-JAX f32 reference (same stored weights, promoted to f32, f32 adj)
# ----------------------------------------------------------------------------
def reference_forward(x, adj, p, z_dim):
    f32 = jnp.float32
    h = jax.nn.relu(x @ p["w1"].astype(f32) + p["b1"])
    h = jax.nn.relu(h @ p["w2"].astype(f32) + p["b2"])
    h = jax.nn.relu(h @ p["w3"].astype(f32) + p["b3"])
    g = jax.nn.relu(adj @ (h @ p["wg"].astype(f32)) + p["bg"])
    z_pad = p["wg"].shape[1]
    head = g @ p["wh"] + p["bh"]
    mu = head[:, :z_dim]
    logvar = jax.nn.softplus(head[:, z_pad:z_pad + z_dim])
    return mu, logvar


if __name__ == "__main__":
    VIEW_DIM = 32  # input feature dim of this view
    Z_DIM = 16     # latent dim

    key = jax.random.PRNGKey(0)
    kx, kadj, kp = jax.random.split(key, 3)
    params = init_params(kp, VIEW_DIM, Z_DIM)

    def make_inputs(k1, k2, n):
        x = jax.random.normal(k1, (n, VIEW_DIM), jnp.float32)
        a = jax.random.uniform(k2, (n, n), jnp.float32)
        a = 0.5 * (a + a.T) + jnp.eye(n, dtype=jnp.float32)   # symmetric + self-loops
        adj = a / jnp.sum(a, axis=1, keepdims=True)           # row-normalized
        return x, adj

    # 1) small-N fused fast path (single pallas_call)
    N = 8
    x, adj = make_inputs(kx, kadj, N)
    mu, logvar = view_specific_encoder_gaussian(x, adj, params, z_dim=Z_DIM)
    jax.block_until_ready((mu, logvar))
    mu_ref, lv_ref = reference_forward(x, adj, params, Z_DIM)
    assert mu.shape == (N, Z_DIM) and logvar.shape == (N, Z_DIM)
    # bf16 weights / adj / support -> loosened tolerance vs f32 reference
    assert jnp.allclose(mu, mu_ref, atol=3e-2, rtol=3e-2)
    assert jnp.allclose(logvar, lv_ref, atol=3e-2, rtol=3e-2)

    # 2) two-stage path (row-parallel stage 1 + K-tiled adj reduction in stage 2)
    N2 = 256
    kx2, kadj2 = jax.random.split(jax.random.PRNGKey(1))
    x2, adj2 = make_inputs(kx2, kadj2, N2)
    mu2, lv2 = view_specific_encoder_gaussian(x2, adj2, params, z_dim=Z_DIM,
                                              force_two_stage=True)
    jax.block_until_ready((mu2, lv2))
    mu2_ref, lv2_ref = reference_forward(x2, adj2, params, Z_DIM)
    assert mu2.shape == (N2, Z_DIM) and lv2.shape == (N2, Z_DIM)
    assert jnp.allclose(mu2, mu2_ref, atol=3e-2, rtol=3e-2)
    assert jnp.allclose(lv2, lv2_ref, atol=3e-2, rtol=3e-2)

    print("KERNEL_OK")
</pallas_src>

<mosaic_0001>
module attributes {stable_mosaic.version = 11 : i64} {
  func.func @_fused_kernel(%arg0: memref<8x32xf32, #tpu.memory_space<vmem>>, %arg1: memref<8x8xbf16, #tpu.memory_space<vmem>>, %arg2: memref<32x512xf32, #tpu.memory_space<vmem>>, %arg3: memref<1x512xf32, #tpu.memory_space<vmem>>, %arg4: memref<512x512xbf16, #tpu.memory_space<vmem>>, %arg5: memref<1x512xf32, #tpu.memory_space<vmem>>, %arg6: memref<512x2048xbf16, #tpu.memory_space<vmem>>, %arg7: memref<1x2048xf32, #tpu.memory_space<vmem>>, %arg8: memref<2048x128xbf16, #tpu.memory_space<vmem>>, %arg9: memref<1x128xf32, #tpu.memory_space<vmem>>, %arg10: memref<128x256xf32, #tpu.memory_space<vmem>>, %arg11: memref<1x256xf32, #tpu.memory_space<vmem>>, %arg12: memref<8x256xf32, #tpu.memory_space<vmem>>) attributes {dimension_semantics = [], scalar_prefetch = 0 : i64, scratch_operands = 0 : i64, tpu.core_type = #tpu.core_type<tc>} {
    %c0 = arith.constant 0 : index
    %c0_0 = arith.constant 0 : index
    %0 = vector.load %arg0[%c0, %c0_0] : memref<8x32xf32, #tpu.memory_space<vmem>>, vector<8x32xf32>
    %c0_1 = arith.constant 0 : index
    %c0_2 = arith.constant 0 : index
    %1 = vector.load %arg2[%c0_1, %c0_2] : memref<32x512xf32, #tpu.memory_space<vmem>>, vector<32x512xf32>
    %c0_3 = arith.constant 0 : index
    %c0_4 = arith.constant 0 : index
    %2 = vector.load %arg3[%c0_3, %c0_4] : memref<1x512xf32, #tpu.memory_space<vmem>>, vector<1x512xf32>
    %c0_5 = arith.constant 0 : index
    %c0_6 = arith.constant 0 : index
    %3 = vector.load %arg4[%c0_5, %c0_6] : memref<512x512xbf16, #tpu.memory_space<vmem>>, vector<512x512xbf16>
    %c0_7 = arith.constant 0 : index
    %c0_8 = arith.constant 0 : index
    %4 = vector.load %arg5[%c0_7, %c0_8] : memref<1x512xf32, #tpu.memory_space<vmem>>, vector<1x512xf32>
    %c0_9 = arith.constant 0 : index
    %c0_10 = arith.constant 0 : index
    %5 = vector.load %arg6[%c0_9, %c0_10] : memref<512x2048xbf16, #tpu.memory_space<vmem>>, vector<512x2048xbf16>
    %c0_11 = arith.constant 0 : index
    %c0_12 = arith.constant 0 : index
    %6 = vector.load %arg7[%c0_11, %c0_12] : memref<1x2048xf32, #tpu.memory_space<vmem>>, vector<1x2048xf32>
    %c0_13 = arith.constant 0 : index
    %c0_14 = arith.constant 0 : index
    %7 = vector.load %arg8[%c0_13, %c0_14] : memref<2048x128xbf16, #tpu.memory_space<vmem>>, vector<2048x128xbf16>
    %cst = arith.constant dense<0.000000e+00> : vector<8x512xf32>
    %8 = tpu.matmul %0, %1, %cst {dimension_numbers = #tpu.dot_dimension_numbers<[1], [0], [0], [1], [0, 0, 1, 1], [], []>} : vector<8x32xf32>, vector<32x512xf32>, vector<8x512xf32> -> vector<8x512xf32>
    %9 = vector.broadcast %2 : vector<1x512xf32> to vector<8x512xf32>
    %10 = arith.addf %8, %9 : vector<8x512xf32>
    %cst_15 = arith.constant 0.000000e+00 : f32
    %11 = vector.broadcast %cst_15 : f32 to vector<8x512xf32>
    %12 = arith.maximumf %10, %11 : vector<8x512xf32>
    %13 = arith.truncf %12 : vector<8x512xf32> to vector<8x512xbf16>
    %cst_16 = arith.constant dense<0.000000e+00> : vector<8x512xf32>
    %14 = tpu.matmul %13, %3, %cst_16 {dimension_numbers = #tpu.dot_dimension_numbers<[1], [0], [0], [1], [0, 0, 1, 1], [], []>} : vector<8x512xbf16>, vector<512x512xbf16>, vector<8x512xf32> -> vector<8x512xf32>
    %15 = vector.broadcast %4 : vector<1x512xf32> to vector<8x512xf32>
    %16 = arith.addf %14, %15 : vector<8x512xf32>
    %cst_17 = arith.constant 0.000000e+00 : f32
    %17 = vector.broadcast %cst_17 : f32 to vector<8x512xf32>
    %18 = arith.maximumf %16, %17 : vector<8x512xf32>
    %19 = arith.truncf %18 : vector<8x512xf32> to vector<8x512xbf16>
    %cst_18 = arith.constant dense<0.000000e+00> : vector<8x2048xf32>
    %20 = tpu.matmul %19, %5, %cst_18 {dimension_numbers = #tpu.dot_dimension_numbers<[1], [0], [0], [1], [0, 0, 1, 1], [], []>} : vector<8x512xbf16>, vector<512x2048xbf16>, vector<8x2048xf32> -> vector<8x2048xf32>
    %21 = vector.broadcast %6 : vector<1x2048xf32> to vector<8x2048xf32>
    %22 = arith.addf %20, %21 : vector<8x2048xf32>
    %cst_19 = arith.constant 0.000000e+00 : f32
    %23 = vector.broadcast %cst_19 : f32 to vector<8x2048xf32>
    %24 = arith.maximumf %22, %23 : vector<8x2048xf32>
    %25 = arith.truncf %24 : vector<8x2048xf32> to vector<8x2048xbf16>
    %cst_20 = arith.constant dense<0.000000e+00> : vector<8x128xf32>
    %26 = tpu.matmul %25, %7, %cst_20 {dimension_numbers = #tpu.dot_dimension_numbers<[1], [0], [0], [1], [0, 0, 1, 1], [], []>} : vector<8x2048xbf16>, vector<2048x128xbf16>, vector<8x128xf32> -> vector<8x128xf32>
    %c0_21 = arith.constant 0 : index
    %c0_22 = arith.constant 0 : index
    %27 = vector.load %arg1[%c0_21, %c0_22] : memref<8x8xbf16, #tpu.memory_space<vmem>>, vector<8x8xbf16>
    %28 = arith.truncf %26 : vector<8x128xf32> to vector<8x128xbf16>
    %cst_23 = arith.constant dense<0.000000e+00> : vector<8x128xf32>
    %29 = tpu.matmul %27, %28, %cst_23 {dimension_numbers = #tpu.dot_dimension_numbers<[1], [0], [0], [1], [0, 0, 1, 1], [], []>} : vector<8x8xbf16>, vector<8x128xbf16>, vector<8x128xf32> -> vector<8x128xf32>
    %c0_24 = arith.constant 0 : index
    %c0_25 = arith.constant 0 : index
    %30 = vector.load %arg9[%c0_24, %c0_25] : memref<1x128xf32, #tpu.memory_space<vmem>>, vector<1x128xf32>
    %31 = vector.broadcast %30 : vector<1x128xf32> to vector<8x128xf32>
    %32 = arith.addf %29, %31 : vector<8x128xf32>
    %cst_26 = arith.constant 0.000000e+00 : f32
    %33 = vector.broadcast %cst_26 : f32 to vector<8x128xf32>
    %34 = arith.maximumf %32, %33 : vector<8x128xf32>
    %c0_27 = arith.constant 0 : index
    %c0_28 = arith.constant 0 : index
    %35 = vector.load %arg10[%c0_27, %c0_28] : memref<128x256xf32, #tpu.memory_space<vmem>>, vector<128x256xf32>
    %c0_29 = arith.constant 0 : index
    %c0_30 = arith.constant 0 : index
    %36 = vector.load %arg11[%c0_29, %c0_30] : memref<1x256xf32, #tpu.memory_space<vmem>>, vector<1x256xf32>
    %cst_31 = arith.constant dense<0.000000e+00> : vector<8x256xf32>
    %37 = tpu.matmul %34, %35, %cst_31 {dimension_numbers = #tpu.dot_dimension_numbers<[1], [0], [0], [1], [0, 0, 1, 1], [], []>} : vector<8x128xf32>, vector<128x256xf32>, vector<8x256xf32> -> vector<8x256xf32>
    %38 = vector.broadcast %36 : vector<1x256xf32> to vector<8x256xf32>
    %39 = arith.addf %37, %38 : vector<8x256xf32>
    %40 = vector.extract_strided_slice %39 {offsets = [0, 0], sizes = [8, 128], strides = [1, 1]} : vector<8x256xf32> to vector<8x128xf32>
    %41 = vector.extract_strided_slice %39 {offsets = [0, 128], sizes = [8, 128], strides = [1, 1]} : vector<8x256xf32> to vector<8x128xf32>
    %cst_32 = arith.constant 0.000000e+00 : f32
    %42 = vector.broadcast %cst_32 : f32 to vector<8x128xf32>
    %43 = arith.maximumf %41, %42 : vector<8x128xf32>
    %44 = math.absf %41 : vector<8x128xf32>
    %cst_33 = arith.constant 0.000000e+00 : f32
    %45 = vector.broadcast %cst_33 : f32 to vector<8x128xf32>
    %46 = arith.subf %45, %44 : vector<8x128xf32>
    %47 = math.exp %46 : vector<8x128xf32>
    %48 = math.log1p %47 : vector<8x128xf32>
    %49 = arith.addf %43, %48 : vector<8x128xf32>
    %c0_34 = arith.constant 0 : index
    %c0_35 = arith.constant 0 : index
    %50 = vector.load %arg12[%c0_34, %c0_35] : memref<8x256xf32, #tpu.memory_space<vmem>>, vector<8x128xf32>
    tpu.vector_store %arg12[%c0_34, %c0_35], %40 {strides = array<i32>} : memref<8x256xf32, #tpu.memory_space<vmem>>, vector<8x128xf32>,
    %c0_36 = arith.constant 0 : index
    %c128 = arith.constant 128 : index
    %51 = vector.load %arg12[%c0_36, %c128] : memref<8x256xf32, #tpu.memory_space<vmem>>, vector<8x128xf32>
    tpu.vector_store %arg12[%c0_36, %c128], %49 {strides = array<i32>} : memref<8x256xf32, #tpu.memory_space<vmem>>, vector<8x128xf32>,
    return
  }
}

</mosaic_0001>

<llo_original>
// kernel: view_specific_encoder_gaussian.1
$region0: #{view_specific_encoder_gaussian.1}
  #allocation0 [shape = 'u32[]', space=smem, size = 0x4, offset = 0x4, fixed_abs, tag = 'smem constant byte address 0x4 - core index']
  #allocation1 [shape = 'u32[72,128]{1,0:T(1,128)}', space=vmem, size = 0x9000, scoped, tag = 'internal scratch']
  %s0 = inlined_call_operand.hbm [shape: f32[8,32], index: 0, kind: input, shape index: {}]
  %s1 = inlined_call_operand.vmem [shape: bf16[8,8], index: 1, kind: input, shape index: {}]
  %s2 = inlined_call_operand.hbm [shape: f32[32,512], index: 2, kind: input, shape index: {}]
  %s3 = inlined_call_operand.hbm [shape: f32[1,512], index: 3, kind: input, shape index: {}]
  %s4 = inlined_call_operand.hbm [shape: bf16[512,512], index: 4, kind: input, shape index: {}]
  %s5 = inlined_call_operand.hbm [shape: f32[1,512], index: 5, kind: input, shape index: {}]
  %s6 = inlined_call_operand.hbm [shape: bf16[512,2048], index: 6, kind: input, shape index: {}]
  %s7 = inlined_call_operand.hbm [shape: f32[1,2048], index: 7, kind: input, shape index: {}]
  %s8 = inlined_call_operand.hbm [shape: bf16[2048,128], index: 8, kind: input, shape index: {}]
  %s9 = inlined_call_operand.hbm [shape: f32[1,128], index: 9, kind: input, shape index: {}]
  %s10 = inlined_call_operand.hbm [shape: f32[128,256], index: 10, kind: input, shape index: {}]
  %s11 = inlined_call_operand.hbm [shape: f32[1,256], index: 11, kind: input, shape index: {}]
  %s12 = inlined_call_operand.vmem [shape: f32[8,256], index: 12, kind: output, shape index: {}]
  %s13 = sld [smem:[#allocation0]]
  $region102: #{view_specific_encoder_gaussian.1} parent=0
    _
  %s15 = ssub.s32 1, %s13
  %s16 = scalar_select 0, %s15, %s13
  $region1: #{view_specific_encoder_gaussian.1} parent=0
    #allocation2 [shape = 'u8[4096]{0}', space=vmem, size = 0x1000, scoped, tag = 'input window, operand 0, single buffered']
    #allocation3 [shape = 's32[1]{0}', space=sflag, size = 0x4, scoped, tag = 'scoped memory for view_specific_encoder_gaussian.1']
    #allocation4 [shape = 'u8[65536]{0}', space=vmem, size = 0x10000, scoped, tag = 'input window, operand 2, single buffered']
    #allocation5 [shape = 's32[1]{0}', space=sflag, size = 0x4, scoped, tag = 'scoped memory for view_specific_encoder_gaussian.1']
    #allocation6 [shape = 'u8[2048]{0}', space=vmem, size = 0x800, scoped, tag = 'input window, operand 3, single buffered']
    #allocation7 [shape = 'u8[524288]{0}', space=vmem, size = 0x80000, scoped, tag = 'input window, operand 4, single buffered']
    #allocation8 [shape = 's32[1]{0}', space=sflag, size = 0x4, scoped, tag = 'scoped memory for view_specific_encoder_gaussian.1']
    #allocation9 [shape = 'u8[2048]{0}', space=vmem, size = 0x800, scoped, tag = 'input window, operand 5, single buffered']
    #allocation10 [shape = 'u8[2097152]{0}', space=vmem, size = 0x200000, scoped, tag = 'input window, operand 6, single buffered']
    #allocation11 [shape = 's32[1]{0}', space=sflag, size = 0x4, scoped, tag = 'scoped memory for view_specific_encoder_gaussian.1']
    #allocation12 [shape = 'u8[8192]{0}', space=vmem, size = 0x2000, scoped, tag = 'input window, operand 7, single buffered']
    #allocation13 [shape = 'u8[524288]{0}', space=vmem, size = 0x80000, scoped, tag = 'input window, operand 8, single buffered']
    #allocation14 [shape = 's32[1]{0}', space=sflag, size = 0x4, scoped, tag = 'scoped memory for view_specific_encoder_gaussian.1']
    #allocation15 [shape = 'u8[512]{0}', space=vmem, size = 0x400, scoped, tag = 'input window, operand 9, single buffered']
    #allocation16 [shape = 'u8[131072]{0}', space=vmem, size = 0x20000, scoped, tag = 'input window, operand 10, single buffered']
    #allocation17 [shape = 's32[1]{0}', space=sflag, size = 0x4, scoped, tag = 'scoped memory for view_specific_encoder_gaussian.1']
    #allocation18 [shape = 'u8[1024]{0}', space=vmem, size = 0x400, scoped, tag = 'input window, operand 11, single buffered']
    %17 = vsyncpa [#allocation3], 0
    %18 = vsyncpa [#allocation5], 0
    %19 = vsyncpa [#allocation8], 0
    %20 = vsyncpa [#allocation11], 0
    %21 = vsyncpa [#allocation14], 0
    %22 = vsyncpa [#allocation17], 0
    // Predicated region
    $region2: #{view_specific_encoder_gaussian.1} parent=1 // pred_check
      _
    $region3: #{view_specific_encoder_gaussian.1} parent=1 // pred_check_branch
      %24 = sbr.rel (0) target = $region5
    $region4: #{view_specific_encoder_gaussian.1} parent=1 // pred_region
      %26 = vsyncadd [#allocation3], 0
      %s28 = sshll.u32 %s0, 4
      %s29 = int_to_ptr.hbm [resolvable:$true] %s28
      %s30 = sshll.u32 [#allocation2], 4
      %s31 = int_to_ptr.vmem [resolvable:$true] %s30
      %33 = dma.hbm_to_vmem [thread:$0]  %s29, 128, %s31, [#allocation3]
    $region5: #{view_specific_encoder_gaussian.1} parent=1 // pred_fallthru
      _
    // Predicated region
    $region6: #{view_specific_encoder_gaussian.1} parent=1 // pred_check
      _
    $region7: #{view_specific_encoder_gaussian.1} parent=1 // pred_check_branch
      %35 = sbr.rel (0) target = $region9
    $region8: #{view_specific_encoder_gaussian.1} parent=1 // pred_region
      _
    $region9: #{view_specific_encoder_gaussian.1} parent=1 // pred_fallthru
      _
    // Predicated region
    $region10: #{view_specific_encoder_gaussian.1} parent=1 // pred_check
      _
    $region11: #{view_specific_encoder_gaussian.1} parent=1 // pred_check_branch
      %37 = sbr.rel (0) target = $region13
    $region12: #{view_specific_encoder_gaussian.1} parent=1 // pred_region
      %39 = vsyncadd [#allocation5], 0
      %s40 = sshll.u32 %s2, 4
      %s41 = int_to_ptr.hbm [resolvable:$true] %s40
      %s42 = sshll.u32 [#allocation4], 4
      %s43 = int_to_ptr.vmem [resolvable:$true] %s42
      %48 = dma.hbm_to_vmem [thread:$0]  %s41, 2048, %s43, [#allocation5], 512, 512, 32
    $region13: #{view_specific_encoder_gaussian.1} parent=1 // pred_fallthru
      _
    // Predicated region
    $region14: #{view_specific_encoder_gaussian.1} parent=1 // pred_check
      _
    $region15: #{view_specific_encoder_gaussian.1} parent=1 // pred_check_branch
      %50 = sbr.rel (0) target = $region17
    $region16: #{view_specific_encoder_gaussian.1} parent=1 // pred_region
      %52 = vsyncadd [#allocation5], 0
      %s54 = sshll.u32 %s3, 4
      %s55 = int_to_ptr.hbm [resolvable:$true] %s54
      %s56 = sshll.u32 [#allocation6], 4
      %s57 = int_to_ptr.vmem [resolvable:$true] %s56
      %59 = dma.hbm_to_vmem [thread:$0]  %s55, 64, %s57, [#allocation5]
    $region17: #{view_specific_encoder_gaussian.1} parent=1 // pred_fallthru
      _
    // Predicated region
    $region18: #{view_specific_encoder_gaussian.1} parent=1 // pred_check
      _
    $region19: #{view_specific_encoder_gaussian.1} parent=1 // pred_check_branch
      %61 = sbr.rel (0) target = $region21
    $region20: #{view_specific_encoder_gaussian.1} parent=1 // pred_region
      %63 = vsyncadd [#allocation8], 0
      %s64 = sshll.u32 %s4, 4
      %s65 = int_to_ptr.hbm [resolvable:$true] %s64
      %s66 = sshll.u32 [#allocation7], 4
      %s67 = int_to_ptr.vmem [resolvable:$true] %s66
      %72 = dma.hbm_to_vmem [thread:$0]  %s65, 16384, %s67, [#allocation8], 256, 256, 16
    $region21: #{view_specific_encoder_gaussian.1} parent=1 // pred_fallthru
      _
    // Predicated region
    $region22: #{view_specific_encoder_gaussian.1} parent=1 // pred_check
      _
    $region23: #{view_specific_encoder_gaussian.1} parent=1 // pred_check_branch
      %74 = sbr.rel (0) target = $region25
    $region24: #{view_specific_encoder_gaussian.1} parent=1 // pred_region
      %76 = vsyncadd [#allocation8], 0
      %s78 = sshll.u32 %s5, 4
      %s79 = int_to_ptr.hbm [resolvable:$true] %s78
      %s80 = sshll.u32 [#allocation9], 4
      %s81 = int_to_ptr.vmem [resolvable:$true] %s80
      %83 = dma.hbm_to_vmem [thread:$0]  %s79, 64, %s81, [#allocation8]
    $region25: #{view_specific_encoder_gaussian.1} parent=1 // pred_fallthru
      _
    // Predicated region
    $region26: #{view_specific_encoder_gaussian.1} parent=1 // pred_check
      _
    $region27: #{view_specific_encoder_gaussian.1} parent=1 // pred_check_branch
      %85 = sbr.rel (0) target = $region29
    $region28: #{view_specific_encoder_gaussian.1} parent=1 // pred_region
      %87 = vsyncadd [#allocation11], 0
      %s88 = sshll.u32 %s6, 4
      %s89 = int_to_ptr.hbm [resolvable:$true] %s88
      %s90 = sshll.u32 [#allocation10], 4
      %s91 = int_to_ptr.vmem [resolvable:$true] %s90
      %96 = dma.hbm_to_vmem [thread:$0]  %s89, 65536, %s91, [#allocation11], 1024, 1024, 64
    $region29: #{view_specific_encoder_gaussian.1} parent=1 // pred_fallthru
      _
    // Predicated region
    $region30: #{view_specific_encoder_gaussian.1} parent=1 // pred_check
      _
    $region31: #{view_specific_encoder_gaussian.1} parent=1 // pred_check_branch
      %98 = sbr.rel (0) target = $region33
    $region32: #{view_specific_encoder_gaussian.1} parent=1 // pred_region
      %100 = vsyncadd [#allocation11], 0
      %s102 = sshll.u32 %s7, 4
      %s103 = int_to_ptr.hbm [resolvable:$true] %s102
      %s104 = sshll.u32 [#allocation12], 4
      %s105 = int_to_ptr.vmem [resolvable:$true] %s104
      %107 = dma.hbm_to_vmem [thread:$0]  %s103, 256, %s105, [#allocation11]
    $region33: #{view_specific_encoder_gaussian.1} parent=1 // pred_fallthru
      _
    // Predicated region
    $region34: #{view_specific_encoder_gaussian.1} parent=1 // pred_check
      _
    $region35: #{view_specific_encoder_gaussian.1} parent=1 // pred_check_branch
      %109 = sbr.rel (0) target = $region37
    $region36: #{view_specific_encoder_gaussian.1} parent=1 // pred_region
      %111 = vsyncadd [#allocation14], 0
      %s112 = sshll.u32 %s8, 4
      %s113 = int_to_ptr.hbm [resolvable:$true] %s112
      %s114 = sshll.u32 [#allocation13], 4
      %s115 = int_to_ptr.vmem [resolvable:$true] %s114
      %120 = dma.hbm_to_vmem [thread:$0]  %s113, 16384, %s115, [#allocation14], 64, 64, 4
    $region37: #{view_specific_encoder_gaussian.1} parent=1 // pred_fallthru
      _
    // Predicated region
    $region38: #{view_specific_encoder_gaussian.1} parent=1 // pred_check
      _
    $region39: #{view_specific_encoder_gaussian.1} parent=1 // pred_check_branch
      %122 = sbr.rel (0) target = $region41
    $region40: #{view_specific_encoder_gaussian.1} parent=1 // pred_region
      %124 = vsyncadd [#allocation14], 0
      %s126 = sshll.u32 %s9, 4
      %s127 = int_to_ptr.hbm [resolvable:$true] %s126
      %s128 = sshll.u32 [#allocation15], 4
      %s129 = int_to_ptr.vmem [resolvable:$true] %s128
      %131 = dma.hbm_to_vmem [thread:$0]  %s127, 16, %s129, [#allocation14]
    $region41: #{view_specific_encoder_gaussian.1} parent=1 // pred_fallthru
      _
    // Predicated region
    $region42: #{view_specific_encoder_gaussian.1} parent=1 // pred_check
      _
    $region43: #{view_specific_encoder_gaussian.1} parent=1 // pred_check_branch
      %133 = sbr.rel (0) target = $region45
    $region44: #{view_specific_encoder_gaussian.1} parent=1 // pred_region
      %135 = vsyncadd [#allocation17], 0
      %s136 = sshll.u32 %s10, 4
      %s137 = int_to_ptr.hbm [resolvable:$true] %s136
      %s138 = sshll.u32 [#allocation16], 4
      %s139 = int_to_ptr.vmem [resolvable:$true] %s138
      %144 = dma.hbm_to_vmem [thread:$0]  %s137, 4096, %s139, [#allocation17], 256, 256, 16
    $region45: #{view_specific_encoder_gaussian.1} parent=1 // pred_fallthru
      _
    // Predicated region
    $region46: #{view_specific_encoder_gaussian.1} parent=1 // pred_check
      _
    $region47: #{view_specific_encoder_gaussian.1} parent=1 // pred_check_branch
      %146 = sbr.rel (0) target = $region49
    $region48: #{view_specific_encoder_gaussian.1} parent=1 // pred_region
      %148 = vsyncadd [#allocation17], 0
      %s150 = sshll.u32 %s11, 4
      %s151 = int_to_ptr.hbm [resolvable:$true] %s150
      %s152 = sshll.u32 [#allocation18], 4
      %s153 = int_to_ptr.vmem [resolvable:$true] %s152
      %155 = dma.hbm_to_vmem [thread:$0]  %s151, 32, %s153, [#allocation17]
    $region49: #{view_specific_encoder_gaussian.1} parent=1 // pred_fallthru
      _
    // Predicated region
    $region50: #{view_specific_encoder_gaussian.1} parent=1 // pred_check
      _
    $region51: #{view_specific_encoder_gaussian.1} parent=1 // pred_check_branch
      %157 = sbr.rel (0) target = $region53
    $region52: #{view_specific_encoder_gaussian.1} parent=1 // pred_region
      %159 = dma.done [#allocation3], 128
    $region53: #{view_specific_encoder_gaussian.1} parent=1 // pred_fallthru
      _
    // Predicated region
    $region54: #{view_specific_encoder_gaussian.1} parent=1 // pred_check
      _
    $region55: #{view_specific_encoder_gaussian.1} parent=1 // pred_check_branch
      %161 = sbr.rel (0) target = $region57
    $region56: #{view_specific_encoder_gaussian.1} parent=1 // pred_region
      %163 = dma.done [#allocation5], 2048
    $region57: #{view_specific_encoder_gaussian.1} parent=1 // pred_fallthru
      _
    // Predicated region
    $region58: #{view_specific_encoder_gaussian.1} parent=1 // pred_check
      _
    $region59: #{view_specific_encoder_gaussian.1} parent=1 // pred_check_branch
      %165 = sbr.rel (0) target = $region61
    $region60: #{view_specific_encoder_gaussian.1} parent=1 // pred_region
      %167 = dma.done [#allocation5], 64
    $region61: #{view_specific_encoder_gaussian.1} parent=1 // pred_fallthru
      _
    // Predicated region
    $region62: #{view_specific_encoder_gaussian.1} parent=1 // pred_check
      _
    $region63: #{view_specific_encoder_gaussian.1} parent=1 // pred_check_branch
      %169 = sbr.rel (0) target = $region65
    $region64: #{view_specific_encoder_gaussian.1} parent=1 // pred_region
      %171 = dma.done [#allocation8], 16384
    $region65: #{view_specific_encoder_gaussian.1} parent=1 // pred_fallthru
      _
    // Predicated region
    $region66: #{view_specific_encoder_gaussian.1} parent=1 // pred_check
      _
    $region67: #{view_specific_encoder_gaussian.1} parent=1 // pred_check_branch
      %173 = sbr.rel (0) target = $region69
    $region68: #{view_specific_encoder_gaussian.1} parent=1 // pred_region
      %175 = dma.done [#allocation8], 64
    $region69: #{view_specific_encoder_gaussian.1} parent=1 // pred_fallthru
      _
    // Predicated region
    $region70: #{view_specific_encoder_gaussian.1} parent=1 // pred_check
      _
    $region71: #{view_specific_encoder_gaussian.1} parent=1 // pred_check_branch
      %177 = sbr.rel (0) target = $region73
    $region72: #{view_specific_encoder_gaussian.1} parent=1 // pred_region
      %179 = dma.done [#allocation11], 65536
    $region73: #{view_specific_encoder_gaussian.1} parent=1 // pred_fallthru
      _
    // Predicated region
    $region74: #{view_specific_encoder_gaussian.1} parent=1 // pred_check
      _
    $region75: #{view_specific_encoder_gaussian.1} parent=1 // pred_check_branch
      %181 = sbr.rel (0) target = $region77
    $region76: #{view_specific_encoder_gaussian.1} parent=1 // pred_region
      %183 = dma.done [#allocation11], 256
    $region77: #{view_specific_encoder_gaussian.1} parent=1 // pred_fallthru
      _
    // Predicated region
    $region78: #{view_specific_encoder_gaussian.1} parent=1 // pred_check
      _
    $region79: #{view_specific_encoder_gaussian.1} parent=1 // pred_check_branch
      %185 = sbr.rel (0) target = $region81
    $region80: #{view_specific_encoder_gaussian.1} parent=1 // pred_region
      %187 = dma.done [#allocation14], 16384
    $region81: #{view_specific_encoder_gaussian.1} parent=1 // pred_fallthru
      _
    // Predicated region
    $region82: #{view_specific_encoder_gaussian.1} parent=1 // pred_check
      _
    $region83: #{view_specific_encoder_gaussian.1} parent=1 // pred_check_branch
      %189 = sbr.rel (0) target = $region85
    $region84: #{view_specific_encoder_gaussian.1} parent=1 // pred_region
      %191 = dma.done [#allocation14], 16
    $region85: #{view_specific_encoder_gaussian.1} parent=1 // pred_fallthru
      _
    // Predicated region
    $region86: #{view_specific_encoder_gaussian.1} parent=1 // pred_check
      _
    $region87: #{view_specific_encoder_gaussian.1} parent=1 // pred_check_branch
      %193 = sbr.rel (0) target = $region89
    $region88: #{view_specific_encoder_gaussian.1} parent=1 // pred_region
      %195 = dma.done [#allocation17], 4096
    $region89: #{view_specific_encoder_gaussian.1} parent=1 // pred_fallthru
      _
    // Predicated region
    $region90: #{view_specific_encoder_gaussian.1} parent=1 // pred_check
      _
    $region91: #{view_specific_encoder_gaussian.1} parent=1 // pred_check_branch
      %197 = sbr.rel (0) target = $region93
    $region92: #{view_specific_encoder_gaussian.1} parent=1 // pred_region
      %199 = dma.done [#allocation17], 32
    $region93: #{view_specific_encoder_gaussian.1} parent=1 // pred_fallthru
      _
    %v201 = vld [vmem:[#allocation2] sm:$0xff]
    %v202 = vld [vmem:[#allocation4] sm:$0xff]
    %v203 = vld [vmem:[#allocation4 + $0x8] sm:$0xff]
    %v204 = vld [vmem:[#allocation4 + $0x10] sm:$0xff]
    %v205 = vld [vmem:[#allocation4 + $0x18] sm:$0xff]
    %v206 = vld [vmem:[#allocation4 + $0x20] sm:$0xff]
    %v207 = vld [vmem:[#allocation4 + $0x28] sm:$0xff]
    %v208 = vld [vmem:[#allocation4 + $0x30] sm:$0xff]
    %v209 = vld [vmem:[#allocation4 + $0x38] sm:$0xff]
    %v210 = vld [vmem:[#allocation4 + $0x40] sm:$0xff]
    %v211 = vld [vmem:[#allocation4 + $0x48] sm:$0xff]
    %v212 = vld [vmem:[#allocation4 + $0x50] sm:$0xff]
    %v213 = vld [vmem:[#allocation4 + $0x58] sm:$0xff]
    %v214 = vld [vmem:[#allocation4 + $0x60] sm:$0xff]
    %v215 = vld [vmem:[#allocation4 + $0x68] sm:$0xff]
    %v216 = vld [vmem:[#allocation4 + $0x70] sm:$0xff]
    %v217 = vld [vmem:[#allocation4 + $0x78] sm:$0xff]
    %v218 = vld [vmem:[#allocation6] sm:$0xf]
    %v219 = vld [vmem:[#allocation7] sm:$0xff]
    %v220 = vld [vmem:[#allocation7 + $0x8] sm:$0xff]
    %v221 = vld [vmem:[#allocation7 + $0x10] sm:$0xff]
    %v222 = vld [vmem:[#allocation7 + $0x18] sm:$0xff]
    %v223 = vld [vmem:[#allocation7 + $0x20] sm:$0xff]
    %v224 = vld [vmem:[#allocation7 + $0x28] sm:$0xff]
    %v225 = vld [vmem:[#allocation7 + $0x30] sm:$0xff]
    %v226 = vld [vmem:[#allocation7 + $0x38] sm:$0xff]
    %v227 = vld [vmem:[#allocation7 + $0x40] sm:$0xff]
    %v228 = vld [vmem:[#allocation7 + $0x48] sm:$0xff]
    %v229 = vld [vmem:[#allocation7 + $0x50] sm:$0xff]
    %v230 = vld [vmem:[#allocation7 + $0x58] sm:$0xff]
    %v231 = vld [vmem:[#allocation7 + $0x60] sm:$0xff]
    %v232 = vld [vmem:[#allocation7 + $0x68] sm:$0xff]
    %v233 = vld [vmem:[#allocation7 + $0x70] sm:$0xff]
    %v234 = vld [vmem:[#allocation7 + $0x78] sm:$0xff]
    %v235 = vld [vmem:[#allocation7 + $0x80] sm:$0xff]
    %v236 = vld [vmem:[#allocation7 + $0x88] sm:$0xff]
    %v237 = vld [vmem:[#allocation7 + $0x90] sm:$0xff]
    %v238 = vld [vmem:[#allocation7 + $0x98] sm:$0xff]
    %v239 = vld [vmem:[#allocation7 + $0xa0] sm:$0xff]
    %v240 = vld [vmem:[#allocation7 + $0xa8] sm:$0xff]
    %v241 = vld [vmem:[#allocation7 + $0xb0] sm:$0xff]
    %v242 = vld [vmem:[#allocation7 + $0xb8] sm:$0xff]
    %v243 = vld [vmem:[#allocation7 + $0xc0] sm:$0xff]
    %v244 = vld [vmem:[#allocation7 + $0xc8] sm:$0xff]
    %v245 = vld [vmem:[#allocation7 + $0xd0] sm:$0xff]
    %v246 = vld [vmem:[#allocation7 + $0xd8] sm:$0xff]
    %v247 = vld [vmem:[#allocation7 + $0xe0] sm:$0xff]
    %v248 = vld [vmem:[#allocation7 + $0xe8] sm:$0xff]
    %v249 = vld [vmem:[#allocation7 + $0xf0] sm:$0xff]
    %v250 = vld [vmem:[#allocation7 + $0xf8] sm:$0xff]
    %v251 = vld [vmem:[#allocation7 + $0x100] sm:$0xff]
    %v252 = vld [vmem:[#allocation7 + $0x108] sm:$0xff]
    %v253 = vld [vmem:[#allocation7 + $0x110] sm:$0xff]
    %v254 = vld [vmem:[#allocation7 + $0x118] sm:$0xff]
    %v255 = vld [vmem:[#allocation7 + $0x120] sm:$0xff]
    %v256 = vld [vmem:[#allocation7 + $0x128] sm:$0xff]
    %v257 = vld [vmem:[#allocation7 + $0x130] sm:$0xff]
    %v258 = vld [vmem:[#allocation7 + $0x138] sm:$0xff]
    %v259 = vld [vmem:[#allocation7 + $0x140] sm:$0xff]
    %v260 = vld [vmem:[#allocation7 + $0x148] sm:$0xff]
    %v261 = vld [vmem:[#allocation7 + $0x150] sm:$0xff]
    %v262 = vld [vmem:[#allocation7 + $0x158] sm:$0xff]
    %v263 = vld [vmem:[#allocation7 + $0x160] sm:$0xff]
    %v264 = vld [vmem:[#allocation7 + $0x168] sm:$0xff]
    %v265 = vld [vmem:[#allocation7 + $0x170] sm:$0xff]
    %v266 = vld [vmem:[#allocation7 + $0x178] sm:$0xff]
    %v267 = vld [vmem:[#allocation7 + $0x180] sm:$0xff]
    %v268 = vld [vmem:[#allocation7 + $0x188] sm:$0xff]
    %v269 = vld [vmem:[#allocation7 + $0x190] sm:$0xff]
    %v270 = vld [vmem:[#allocation7 + $0x198] sm:$0xff]
    %v271 = vld [vmem:[#allocation7 + $0x1a0] sm:$0xff]
    %v272 = vld [vmem:[#allocation7 + $0x1a8] sm:$0xff]
    %v273 = vld [vmem:[#allocation7 + $0x1b0] sm:$0xff]
    %v274 = vld [vmem:[#allocation7 + $0x1b8] sm:$0xff]
    %v275 = vld [vmem:[#allocation7 + $0x1c0] sm:$0xff]
    %v276 = vld [vmem:[#allocation7 + $0x1c8] sm:$0xff]
    %v277 = vld [vmem:[#allocation7 + $0x1d0] sm:$0xff]
    %v278 = vld [vmem:[#allocation7 + $0x1d8] sm:$0xff]
    %v279 = vld [vmem:[#allocation7 + $0x1e0] sm:$0xff]
    %v280 = vld [vmem:[#allocation7 + $0x1e8] sm:$0xff]
    %v281 = vld [vmem:[#allocation7 + $0x1f0] sm:$0xff]
    %v282 = vld [vmem:[#allocation7 + $0x1f8] sm:$0xff]
    %v283 = vld [vmem:[#allocation7 + $0x200] sm:$0xff]
    %v284 = vld [vmem:[#allocation7 + $0x208] sm:$0xff]
    %v285 = vld [vmem:[#allocation7 + $0x210] sm:$0xff]
    %v286 = vld [vmem:[#allocation7 + $0x218] sm:$0xff]
    %v287 = vld [vmem:[#allocation7 + $0x220] sm:$0xff]
    %v288 = vld [vmem:[#allocation7 + $0x228] sm:$0xff]
    %v289 = vld [vmem:[#allocation7 + $0x230] sm:$0xff]
    %v290 = vld [vmem:[#allocation7 + $0x238] sm:$0xff]
    %v291 = vld [vmem:[#allocation7 + $0x240] sm:$0xff]
    %v292 = vld [vmem:[#allocation7 + $0x248] sm:$0xff]
    %v293 = vld [vmem:[#allocation7 + $0x250] sm:$0xff]
    %v294 = vld [vmem:[#allocation7 + $0x258] sm:$0xff]
    %v295 = vld [vmem:[#allocation7 + $0x260] sm:$0xff]
    %v296 = vld [vmem:[#allocation7 + $0x268] sm:$0xff]
    %v297 = vld [vmem:[#allocation7 + $0x270] sm:$0xff]
    %v298 = vld [vmem:[#allocation7 + $0x278] sm:$0xff]
    %v299 = vld [vmem:[#allocation7 + $0x280] sm:$0xff]
    %v300 = vld [vmem:[#allocation7 + $0x288] sm:$0xff]
    %v301 = vld [vmem:[#allocation7 + $0x290] sm:$0xff]
    %v302 = vld [vmem:[#allocation7 + $0x298] sm:$0xff]
    %v303 = vld [vmem:[#allocation7 + $0x2a0] sm:$0xff]
    %v304 = vld [vmem:[#allocation7 + $0x2a8] sm:$0xff]
    %v305 = vld [vmem:[#allocation7 + $0x2b0] sm:$0xff]
    %v306 = vld [vmem:[#allocation7 + $0x2b8] sm:$0xff]
    %v307 = vld [vmem:[#allocation7 + $0x2c0] sm:$0xff]
    %v308 = vld [vmem:[#allocation7 + $0x2c8] sm:$0xff]
    %v309 = vld [vmem:[#allocation7 + $0x2d0] sm:$0xff]
    %v310 = vld [vmem:[#allocation7 + $0x2d8] sm:$0xff]
    %v311 = vld [vmem:[#allocation7 + $0x2e0] sm:$0xff]
    %v312 = vld [vmem:[#allocation7 + $0x2e8] sm:$0xff]
    %v313 = vld [vmem:[#allocation7 + $0x2f0] sm:$0xff]
    %v314 = vld [vmem:[#allocation7 + $0x2f8] sm:$0xff]
    %v315 = vld [vmem:[#allocation7 + $0x300] sm:$0xff]
    %v316 = vld [vmem:[#allocation7 + $0x308] sm:$0xff]
    %v317 = vld [vmem:[#allocation7 + $0x310] sm:$0xff]
    %v318 = vld [vmem:[#allocation7 + $0x318] sm:$0xff]
    %v319 = vld [vmem:[#allocation7 + $0x320] sm:$0xff]
    %v320 = vld [vmem:[#allocation7 + $0x328] sm:$0xff]
    %v321 = vld [vmem:[#allocation7 + $0x330] sm:$0xff]
    %v322 = vld [vmem:[#allocation7 + $0x338] sm:$0xff]
    %v323 = vld [vmem:[#allocation7 + $0x340] sm:$0xff]
    %v324 = vld [vmem:[#allocation7 + $0x348] sm:$0xff]
    %v325 = vld [vmem:[#allocation7 + $0x350] sm:$0xff]
    %v326 = vld [vmem:[#allocation7 + $0x358] sm:$0xff]
    %v327 = vld [vmem:[#allocation7 + $0x360] sm:$0xff]
    %v328 = vld [vmem:[#allocation7 + $0x368] sm:$0xff]
    %v329 = vld [vmem:[#allocation7 + $0x370] sm:$0xff]
    %v330 = vld [vmem:[#allocation7 + $0x378] sm:$0xff]
    %v331 = vld [vmem:[#allocation7 + $0x380] sm:$0xff]
    %v332 = vld [vmem:[#allocation7 + $0x388] sm:$0xff]
    %v333 = vld [vmem:[#allocation7 + $0x390] sm:$0xff]
    %v334 = vld [vmem:[#allocation7 + $0x398] sm:$0xff]
    %v335 = vld [vmem:[#allocation7 + $0x3a0] sm:$0xff]
    %v336 = vld [vmem:[#allocation7 + $0x3a8] sm:$0xff]
    %v337 = vld [vmem:[#allocation7 + $0x3b0] sm:$0xff]
    %v338 = vld [vmem:[#allocation7 + $0x3b8] sm:$0xff]
    %v339 = vld [vmem:[#allocation7 + $0x3c0] sm:$0xff]
    %v340 = vld [vmem:[#allocation7 + $0x3c8] sm:$0xff]
    %v341 = vld [vmem:[#allocation7 + $0x3d0] sm:$0xff]
    %v342 = vld [vmem:[#allocation7 + $0x3d8] sm:$0xff]
    %v343 = vld [vmem:[#allocation7 + $0x3e0] sm:$0xff]
    %v344 = vld [vmem:[#allocation7 + $0x3e8] sm:$0xff]
    %v345 = vld [vmem:[#allocation7 + $0x3f0] sm:$0xff]
    %v346 = vld [vmem:[#allocation7 + $0x3f8] sm:$0xff]
    %v347 = vld [vmem:[#allocation9] sm:$0xf]
    %v348 = vld [vmem:[#allocation10] sm:$0xff]
    %v349 = vld [vmem:[#allocation10 + $0x8] sm:$0xff]
    %v350 = vld [vmem:[#allocation10 + $0x10] sm:$0xff]
    %v351 = vld [vmem:[#allocation10 + $0x18] sm:$0xff]
    %v352 = vld [vmem:[#allocation10 + $0x20] sm:$0xff]
    %v353 = vld [vmem:[#allocation10 + $0x28] sm:$0xff]
    %v354 = vld [vmem:[#allocation10 + $0x30] sm:$0xff]
    %v355 = vld [vmem:[#allocation10 + $0x38] sm:$0xff]
    %v356 = vld [vmem:[#allocation10 + $0x40] sm:$0xff]
    %v357 = vld [vmem:[#allocation10 + $0x48] sm:$0xff]
    %v358 = vld [vmem:[#allocation10 + $0x50] sm:$0xff]
    %v359 = vld [vmem:[#allocation10 + $0x58] sm:$0xff]
    %v360 = vld [vmem:[#allocation10 + $0x60] sm:$0xff]
    %v361 = vld [vmem:[#allocation10 + $0x68] sm:$0xff]
    %v362 = vld [vmem:[#allocation10 + $0x70] sm:$0xff]
    %v363 = vld [vmem:[#allocation10 + $0x78] sm:$0xff]
    %v364 = vld [vmem:[#allocation10 + $0x80] sm:$0xff]
    %v365 = vld [vmem:[#allocation10 + $0x88] sm:$0xff]
    %v366 = vld [vmem:[#allocation10 + $0x90] sm:$0xff]
    %v367 = vld [vmem:[#allocation10 + $0x98] sm:$0xff]
    %v368 = vld [vmem:[#allocation10 + $0xa0] sm:$0xff]
    %v369 = vld [vmem:[#allocation10 + $0xa8] sm:$0xff]
    %v370 = vld [vmem:[#allocation10 + $0xb0] sm:$0xff]
    %v371 = vld [vmem:[#allocation10 + $0xb8] sm:$0xff]
    %v372 = vld [vmem:[#allocation10 + $0xc0] sm:$0xff]
    %v373 = vld [vmem:[#allocation10 + $0xc8] sm:$0xff]
    %v374 = vld [vmem:[#allocation10 + $0xd0] sm:$0xff]
    %v375 = vld [vmem:[#allocation10 + $0xd8] sm:$0xff]
    %v376 = vld [vmem:[#allocation10 + $0xe0] sm:$0xff]
    %v377 = vld [vmem:[#allocation10 + $0xe8] sm:$0xff]
    %v378 = vld [vmem:[#allocation10 + $0xf0] sm:$0xff]
    %v379 = vld [vmem:[#allocation10 + $0xf8] sm:$0xff]
    %v380 = vld [vmem:[#allocation10 + $0x100] sm:$0xff]
    %v381 = vld [vmem:[#allocation10 + $0x108] sm:$0xff]
    %v382 = vld [vmem:[#allocation10 + $0x110] sm:$0xff]
    %v383 = vld [vmem:[#allocation10 + $0x118] sm:$0xff]
    %v384 = vld [vmem:[#allocation10 + $0x120] sm:$0xff]
    %v385 = vld [vmem:[#allocation10 + $0x128] sm:$0xff]
    %v386 = vld [vmem:[#allocation10 + $0x130] sm:$0xff]
    %v387 = vld [vmem:[#allocation10 + $0x138] sm:$0xff]
    %v388 = vld [vmem:[#allocation10 + $0x140] sm:$0xff]
    %v389 = vld [vmem:[#allocation10 + $0x148] sm:$0xff]
    %v390 = vld [vmem:[#allocation10 + $0x150] sm:$0xff]
    %v391 = vld [vmem:[#allocation10 + $0x158] sm:$0xff]
    %v392 = vld [vmem:[#allocation10 + $0x160] sm:$0xff]
    %v393 = vld [vmem:[#allocation10 + $0x168] sm:$0xff]
    %v394 = vld [vmem:[#allocation10 + $0x170] sm:$0xff]
    %v395 = vld [vmem:[#allocation10 + $0x178] sm:$0xff]
    %v396 = vld [vmem:[#allocation10 + $0x180] sm:$0xff]
    %v397 = vld [vmem:[#allocation10 + $0x188] sm:$0xff]
    %v398 = vld [vmem:[#allocation10 + $0x190] sm:$0xff]
    %v399 = vld [vmem:[#allocation10 + $0x198] sm:$0xff]
    %v400 = vld [vmem:[#allocation10 + $0x1a0] sm:$0xff]
    %v401 = vld [vmem:[#allocation10 + $0x1a8] sm:$0xff]
    %v402 = vld [vmem:[#allocation10 + $0x1b0] sm:$0xff]
    %v403 = vld [vmem:[#allocation10 + $0x1b8] sm:$0xff]
    %v404 = vld [vmem:[#allocation10 + $0x1c0] sm:$0xff]
    %v405 = vld [vmem:[#allocation10 + $0x1c8] sm:$0xff]
    %v406 = vld [vmem:[#allocation10 + $0x1d0] sm:$0xff]
    %v407 = vld [vmem:[#allocation10 + $0x1d8] sm:$0xff]
    %v408 = vld [vmem:[#allocation10 + $0x1e0] sm:$0xff]
    %v409 = vld [vmem:[#allocation10 + $0x1e8] sm:$0xff]
    %v410 = vld [vmem:[#allocation10 + $0x1f0] sm:$0xff]
    %v411 = vld [vmem:[#allocation10 + $0x1f8] sm:$0xff]
    %v412 = vld [vmem:[#allocation10 + $0x200] sm:$0xff]
    %v413 = vld [vmem:[#allocation10 + $0x208] sm:$0xff]
    %v414 = vld [vmem:[#allocation10 + $0x210] sm:$0xff]
    %v415 = vld [vmem:[#allocation10 + $0x218] sm:$0xff]
    %v416 = vld [vmem:[#allocation10 + $0x220] sm:$0xff]
    %v417 = vld [vmem:[#allocation10 + $0x228] sm:$0xff]
    %v418 = vld [vmem:[#allocation10 + $0x230] sm:$0xff]
    %v419 = vld [vmem:[#allocation10 + $0x238] sm:$0xff]
    %v420 = vld [vmem:[#allocation10 + $0x240] sm:$0xff]
    %v421 = vld [vmem:[#allocation10 + $0x248] sm:$0xff]
    %v422 = vld [vmem:[#allocation10 + $0x250] sm:$0xff]
    %v423 = vld [vmem:[#allocation10 + $0x258] sm:$0xff]
    %v424 = vld [vmem:[#allocation10 + $0x260] sm:$0xff]
    %v425 = vld [vmem:[#allocation10 + $0x268] sm:$0xff]
    %v426 = vld [vmem:[#allocation10 + $0x270] sm:$0xff]
    %v427 = vld [vmem:[#allocation10 + $0x278] sm:$0xff]
    %v428 = vld [vmem:[#allocation10 + $0x280] sm:$0xff]
    %v429 = vld [vmem:[#allocation10 + $0x288] sm:$0xff]
    %v430 = vld [vmem:[#allocation10 + $0x290] sm:$0xff]
    %v431 = vld [vmem:[#allocation10 + $0x298] sm:$0xff]
    %v432 = vld [vmem:[#allocation10 + $0x2a0] sm:$0xff]
    %v433 = vld [vmem:[#allocation10 + $0x2a8] sm:$0xff]
    %v434 = vld [vmem:[#allocation10 + $0x2b0] sm:$0xff]
    %v435 = vld [vmem:[#allocation10 + $0x2b8] sm:$0xff]
    %v436 = vld [vmem:[#allocation10 + $0x2c0] sm:$0xff]
    %v437 = vld [vmem:[#allocation10 + $0x2c8] sm:$0xff]
    %v438 = vld [vmem:[#allocation10 + $0x2d0] sm:$0xff]
    %v439 = vld [vmem:[#allocation10 + $0x2d8] sm:$0xff]
    %v440 = vld [vmem:[#allocation10 + $0x2e0] sm:$0xff]
    %v441 = vld [vmem:[#allocation10 + $0x2e8] sm:$0xff]
    %v442 = vld [vmem:[#allocation10 + $0x2f0] sm:$0xff]
    %v443 = vld [vmem:[#allocation10 + $0x2f8] sm:$0xff]
    %v444 = vld [vmem:[#allocation10 + $0x300] sm:$0xff]
    %v445 = vld [vmem:[#allocation10 + $0x308] sm:$0xff]
    %v446 = vld [vmem:[#allocation10 + $0x310] sm:$0xff]
    %v447 = vld [vmem:[#allocation10 + $0x318] sm:$0xff]
    %v448 = vld [vmem:[#allocation10 + $0x320] sm:$0xff]
    %v449 = vld [vmem:[#allocation10 + $0x328] sm:$0xff]
    %v450 = vld [vmem:[#allocation10 + $0x330] sm:$0xff]
    %v451 = vld [vmem:[#allocation10 + $0x338] sm:$0xff]
    %v452 = vld [vmem:[#allocation10 + $0x340] sm:$0xff]
    %v453 = vld [vmem:[#allocation10 + $0x348] sm:$0xff]
    %v454 = vld [vmem:[#allocation10 + $0x350] sm:$0xff]
    %v455 = vld [vmem:[#allocation10 + $0x358] sm:$0xff]
    %v456 = vld [vmem:[#allocation10 + $0x360] sm:$0xff]
    %v457 = vld [vmem:[#allocation10 + $0x368] sm:$0xff]
    %v458 = vld [vmem:[#allocation10 + $0x370] sm:$0xff]
    %v459 = vld [vmem:[#allocation10 + $0x378] sm:$0xff]
    %v460 = vld [vmem:[#allocation10 + $0x380] sm:$0xff]
    %v461 = vld [vmem:[#allocation10 + $0x388] sm:$0xff]
    %v462 = vld [vmem:[#allocation10 + $0x390] sm:$0xff]
    %v463 = vld [vmem:[#allocation10 + $0x398] sm:$0xff]
    %v464 = vld [vmem:[#allocation10 + $0x3a0] sm:$0xff]
    %v465 = vld [vmem:[#allocation10 + $0x3a8] sm:$0xff]
    %v466 = vld [vmem:[#allocation10 + $0x3b0] sm:$0xff]
    %v467 = vld [vmem:[#allocation10 + $0x3b8] sm:$0xff]
    %v468 = vld [vmem:[#allocation10 + $0x3c0] sm:$0xff]
    %v469 = vld [vmem:[#allocation10 + $0x3c8] sm:$0xff]
    %v470 = vld [vmem:[#allocation10 + $0x3d0] sm:$0xff]
    %v471 = vld [vmem:[#allocation10 + $0x3d8] sm:$0xff]
    %v472 = vld [vmem:[#allocation10 + $0x3e0] sm:$0xff]
    %v473 = vld [vmem:[#allocation10 + $0x3e8] sm:$0xff]
    %v474 = vld [vmem:[#allocation10 + $0x3f0] sm:$0xff]
    %v475 = vld [vmem:[#allocation10 + $0x3f8] sm:$0xff]
    %v476 = vld [vmem:[#allocation10 + $0x400] sm:$0xff]
    %v477 = vld [vmem:[#allocation10 + $0x408] sm:$0xff]
    %v478 = vld [vmem:[#allocation10 + $0x410] sm:$0xff]
    %v479 = vld [vmem:[#allocation10 + $0x418] sm:$0xff]
    %v480 = vld [vmem:[#allocation10 + $0x420] sm:$0xff]
    %v481 = vld [vmem:[#allocation10 + $0x428] sm:$0xff]
    %v482 = vld [vmem:[#allocation10 + $0x430] sm:$0xff]
    %v483 = vld [vmem:[#allocation10 + $0x438] sm:$0xff]
    %v484 = vld [vmem:[#allocation10 + $0x440] sm:$0xff]
    %v485 = vld [vmem:[#allocation10 + $0x448] sm:$0xff]
    %v486 = vld [vmem:[#allocation10 + $0x450] sm:$0xff]
    %v487 = vld [vmem:[#allocation10 + $0x458] sm:$0xff]
    %v488 = vld [vmem:[#allocation10 + $0x460] sm:$0xff]
    %v489 = vld [vmem:[#allocation10 + $0x468] sm:$0xff]
    %v490 = vld [vmem:[#allocation10 + $0x470] sm:$0xff]
    %v491 = vld [vmem:[#allocation10 + $0x478] sm:$0xff]
    %v492 = vld [vmem:[#allocation10 + $0x480] sm:$0xff]
    %v493 = vld [vmem:[#allocation10 + $0x488] sm:$0xff]
    %v494 = vld [vmem:[#allocation10 + $0x490] sm:$0xff]
    %v495 = vld [vmem:[#allocation10 + $0x498] sm:$0xff]
    %v496 = vld [vmem:[#allocation10 + $0x4a0] sm:$0xff]
    %v497 = vld [vmem:[#allocation10 + $0x4a8] sm:$0xff]
    %v498 = vld [vmem:[#allocation10 + $0x4b0] sm:$0xff]
    %v499 = vld [vmem:[#allocation10 + $0x4b8] sm:$0xff]
    %v500 = vld [vmem:[#allocation10 + $0x4c0] sm:$0xff]
    %v501 = vld [vmem:[#allocation10 + $0x4c8] sm:$0xff]
    %v502 = vld [vmem:[#allocation10 + $0x4d0] sm:$0xff]
    %v503 = vld [vmem:[#allocation10 + $0x4d8] sm:$0xff]
    %v504 = vld [vmem:[#allocation10 + $0x4e0] sm:$0xff]
    %v505 = vld [vmem:[#allocation10 + $0x4e8] sm:$0xff]
    %v506 = vld [vmem:[#allocation10 + $0x4f0] sm:$0xff]
    %v507 = vld [vmem:[#allocation10 + $0x4f8] sm:$0xff]
    %v508 = vld [vmem:[#allocation10 + $0x500] sm:$0xff]
    %v509 = vld [vmem:[#allocation10 + $0x508] sm:$0xff]
    %v510 = vld [vmem:[#allocation10 + $0x510] sm:$0xff]
    %v511 = vld [vmem:[#allocation10 + $0x518] sm:$0xff]
    %v512 = vld [vmem:[#allocation10 + $0x520] sm:$0xff]
    %v513 = vld [vmem:[#allocation10 + $0x528] sm:$0xff]
    %v514 = vld [vmem:[#allocation10 + $0x530] sm:$0xff]
    %v515 = vld [vmem:[#allocation10 + $0x538] sm:$0xff]
    %v516 = vld [vmem:[#allocation10 + $0x540] sm:$0xff]
    %v517 = vld [vmem:[#allocation10 + $0x548] sm:$0xff]
    %v518 = vld [vmem:[#allocation10 + $0x550] sm:$0xff]
    %v519 = vld [vmem:[#allocation10 + $0x558] sm:$0xff]
    %v520 = vld [vmem:[#allocation10 + $0x560] sm:$0xff]
    %v521 = vld [vmem:[#allocation10 + $0x568] sm:$0xff]
    %v522 = vld [vmem:[#allocation10 + $0x570] sm:$0xff]
    %v523 = vld [vmem:[#allocation10 + $0x578] sm:$0xff]
    %v524 = vld [vmem:[#allocation10 + $0x580] sm:$0xff]
    %v525 = vld [vmem:[#allocation10 + $0x588] sm:$0xff]
    %v526 = vld [vmem:[#allocation10 + $0x590] sm:$0xff]
    %v527 = vld [vmem:[#allocation10 + $0x598] sm:$0xff]
    %v528 = vld [vmem:[#allocation10 + $0x5a0] sm:$0xff]
    %v529 = vld [vmem:[#allocation10 + $0x5a8] sm:$0xff]
    %v530 = vld [vmem:[#allocation10 + $0x5b0] sm:$0xff]
    %v531 = vld [vmem:[#allocation10 + $0x5b8] sm:$0xff]
    %v532 = vld [vmem:[#allocation10 + $0x5c0] sm:$0xff]
    %v533 = vld [vmem:[#allocation10 + $0x5c8] sm:$0xff]
    %v534 = vld [vmem:[#allocation10 + $0x5d0] sm:$0xff]
    %v535 = vld [vmem:[#allocation10 + $0x5d8] sm:$0xff]
    %v536 = vld [vmem:[#allocation10 + $0x5e0] sm:$0xff]
    %v537 = vld [vmem:[#allocation10 + $0x5e8] sm:$0xff]
    %v538 = vld [vmem:[#allocation10 + $0x5f0] sm:$0xff]
    %v539 = vld [vmem:[#allocation10 + $0x5f8] sm:$0xff]
    %v540 = vld [vmem:[#allocation10 + $0x600] sm:$0xff]
    %v541 = vld [vmem:[#allocation10 + $0x608] sm:$0xff]
    %v542 = vld [vmem:[#allocation10 + $0x610] sm:$0xff]
    %v543 = vld [vmem:[#allocation10 + $0x618] sm:$0xff]
    %v544 = vld [vmem:[#allocation10 + $0x620] sm:$0xff]
    %v545 = vld [vmem:[#allocation10 + $0x628] sm:$0xff]
    %v546 = vld [vmem:[#allocation10 + $0x630] sm:$0xff]
    %v547 = vld [vmem:[#allocation10 + $0x638] sm:$0xff]
    %v548 = vld [vmem:[#allocation10 + $0x640] sm:$0xff]
    %v549 = vld [vmem:[#allocation10 + $0x648] sm:$0xff]
    %v550 = vld [vmem:[#allocation10 + $0x650] sm:$0xff]
    %v551 = vld [vmem:[#allocation10 + $0x658] sm:$0xff]
    %v552 = vld [vmem:[#allocation10 + $0x660] sm:$0xff]
    %v553 = vld [vmem:[#allocation10 + $0x668] sm:$0xff]
    %v554 = vld [vmem:[#allocation10 + $0x670] sm:$0xff]
    %v555 = vld [vmem:[#allocation10 + $0x678] sm:$0xff]
    %v556 = vld [vmem:[#allocation10 + $0x680] sm:$0xff]
    %v557 = vld [vmem:[#allocation10 + $0x688] sm:$0xff]
    %v558 = vld [vmem:[#allocation10 + $0x690] sm:$0xff]
    %v559 = vld [vmem:[#allocation10 + $0x698] sm:$0xff]
    %v560 = vld [vmem:[#allocation10 + $0x6a0] sm:$0xff]
    %v561 = vld [vmem:[#allocation10 + $0x6a8] sm:$0xff]
    %v562 = vld [vmem:[#allocation10 + $0x6b0] sm:$0xff]
    %v563 = vld [vmem:[#allocation10 + $0x6b8] sm:$0xff]
    %v564 = vld [vmem:[#allocation10 + $0x6c0] sm:$0xff]
    %v565 = vld [vmem:[#allocation10 + $0x6c8] sm:$0xff]
    %v566 = vld [vmem:[#allocation10 + $0x6d0] sm:$0xff]
    %v567 = vld [vmem:[#allocation10 + $0x6d8] sm:$0xff]
    %v568 = vld [vmem:[#allocation10 + $0x6e0] sm:$0xff]
    %v569 = vld [vmem:[#allocation10 + $0x6e8] sm:$0xff]
    %v570 = vld [vmem:[#allocation10 + $0x6f0] sm:$0xff]
    %v571 = vld [vmem:[#allocation10 + $0x6f8] sm:$0xff]
    %v572 = vld [vmem:[#allocation10 + $0x700] sm:$0xff]
    %v573 = vld [vmem:[#allocation10 + $0x708] sm:$0xff]
    %v574 = vld [vmem:[#allocation10 + $0x710] sm:$0xff]
    %v575 = vld [vmem:[#allocation10 + $0x718] sm:$0xff]
    %v576 = vld [vmem:[#allocation10 + $0x720] sm:$0xff]
    %v577 = vld [vmem:[#allocation10 + $0x728] sm:$0xff]
    %v578 = vld [vmem:[#allocation10 + $0x730] sm:$0xff]
    %v579 = vld [vmem:[#allocation10 + $0x738] sm:$0xff]
    %v580 = vld [vmem:[#allocation10 + $0x740] sm:$0xff]
    %v581 = vld [vmem:[#allocation10 + $0x748] sm:$0xff]
    %v582 = vld [vmem:[#allocation10 + $0x750] sm:$0xff]
    %v583 = vld [vmem:[#allocation10 + $0x758] sm:$0xff]
    %v584 = vld [vmem:[#allocation10 + $0x760] sm:$0xff]
    %v585 = vld [vmem:[#allocation10 + $0x768] sm:$0xff]
    %v586 = vld [vmem:[#allocation10 + $0x770] sm:$0xff]
    %v587 = vld [vmem:[#allocation10 + $0x778] sm:$0xff]
    %v588 = vld [vmem:[#allocation10 + $0x780] sm:$0xff]
    %v589 = vld [vmem:[#allocation10 + $0x788] sm:$0xff]
    %v590 = vld [vmem:[#allocation10 + $0x790] sm:$0xff]
    %v591 = vld [vmem:[#allocation10 + $0x798] sm:$0xff]
    %v592 = vld [vmem:[#allocation10 + $0x7a0] sm:$0xff]
    %v593 = vld [vmem:[#allocation10 + $0x7a8] sm:$0xff]
    %v594 = vld [vmem:[#allocation10 + $0x7b0] sm:$0xff]
    %v595 = vld [vmem:[#allocation10 + $0x7b8] sm:$0xff]
    %v596 = vld [vmem:[#allocation10 + $0x7c0] sm:$0xff]
    %v597 = vld [vmem:[#allocation10 + $0x7c8] sm:$0xff]
    %v598 = vld [vmem:[#allocation10 + $0x7d0] sm:$0xff]
    %v599 = vld [vmem:[#allocation10 + $0x7d8] sm:$0xff]
    %v600 = vld [vmem:[#allocation10 + $0x7e0] sm:$0xff]
    %v601 = vld [vmem:[#allocation10 + $0x7e8] sm:$0xff]
    %v602 = vld [vmem:[#allocation10 + $0x7f0] sm:$0xff]
    %v603 = vld [vmem:[#allocation10 + $0x7f8] sm:$0xff]
    %v604 = vld [vmem:[#allocation10 + $0x800] sm:$0xff]
    %v605 = vld [vmem:[#allocation10 + $0x808] sm:$0xff]
    %v606 = vld [vmem:[#allocation10 + $0x810] sm:$0xff]
    %v607 = vld [vmem:[#allocation10 + $0x818] sm:$0xff]
    %v608 = vld [vmem:[#allocation10 + $0x820] sm:$0xff]
    %v609 = vld [vmem:[#allocation10 + $0x828] sm:$0xff]
    %v610 = vld [vmem:[#allocation10 + $0x830] sm:$0xff]
    %v611 = vld [vmem:[#allocation10 + $0x838] sm:$0xff]
    %v612 = vld [vmem:[#allocation10 + $0x840] sm:$0xff]
    %v613 = vld [vmem:[#allocation10 + $0x848] sm:$0xff]
    %v614 = vld [vmem:[#allocation10 + $0x850] sm:$0xff]
    %v615 = vld [vmem:[#allocation10 + $0x858] sm:$0xff]
    %v616 = vld [vmem:[#allocation10 + $0x860] sm:$0xff]
    %v617 = vld [vmem:[#allocation10 + $0x868] sm:$0xff]
    %v618 = vld [vmem:[#allocation10 + $0x870] sm:$0xff]
    %v619 = vld [vmem:[#allocation10 + $0x878] sm:$0xff]
    %v620 = vld [vmem:[#allocation10 + $0x880] sm:$0xff]
    %v621 = vld [vmem:[#allocation10 + $0x888] sm:$0xff]
    %v622 = vld [vmem:[#allocation10 + $0x890] sm:$0xff]
    %v623 = vld [vmem:[#allocation10 + $0x898] sm:$0xff]
    %v624 = vld [vmem:[#allocation10 + $0x8a0] sm:$0xff]
    %v625 = vld [vmem:[#allocation10 + $0x8a8] sm:$0xff]
    %v626 = vld [vmem:[#allocation10 + $0x8b0] sm:$0xff]
    %v627 = vld [vmem:[#allocation10 + $0x8b8] sm:$0xff]
    %v628 = vld [vmem:[#allocation10 + $0x8c0] sm:$0xff]
    %v629 = vld [vmem:[#allocation10 + $0x8c8] sm:$0xff]
    %v630 = vld [vmem:[#allocation10 + $0x8d0] sm:$0xff]
    %v631 = vld [vmem:[#allocation10 + $0x8d8] sm:$0xff]
    %v632 = vld [vmem:[#allocation10 + $0x8e0] sm:$0xff]
    %v633 = vld [vmem:[#allocation10 + $0x8e8] sm:$0xff]
    %v634 = vld [vmem:[#allocation10 + $0x8f0] sm:$0xff]
    %v635 = vld [vmem:[#allocation10 + $0x8f8] sm:$0xff]
    %v636 = vld [vmem:[#allocation10 + $0x900] sm:$0xff]
    %v637 = vld [vmem:[#allocation10 + $0x908] sm:$0xff]
    %v638 = vld [vmem:[#allocation10 + $0x910] sm:$0xff]
    %v639 = vld [vmem:[#allocation10 + $0x918] sm:$0xff]
    %v640 = vld [vmem:[#allocation10 + $0x920] sm:$0xff]
    %v641 = vld [vmem:[#allocation10 + $0x928] sm:$0xff]
    %v642 = vld [vmem:[#allocation10 + $0x930] sm:$0xff]
    %v643 = vld [vmem:[#allocation10 + $0x938] sm:$0xff]
    %v644 = vld [vmem:[#allocation10 + $0x940] sm:$0xff]
    %v645 = vld [vmem:[#allocation10 + $0x948] sm:$0xff]
    %v646 = vld [vmem:[#allocation10 + $0x950] sm:$0xff]
    %v647 = vld [vmem:[#allocation10 + $0x958] sm:$0xff]
    %v648 = vld [vmem:[#allocation10 + $0x960] sm:$0xff]
    %v649 = vld [vmem:[#allocation10 + $0x968] sm:$0xff]
    %v650 = vld [vmem:[#allocation10 + $0x970] sm:$0xff]
    %v651 = vld [vmem:[#allocation10 + $0x978] sm:$0xff]
    %v652 = vld [vmem:[#allocation10 + $0x980] sm:$0xff]
    %v653 = vld [vmem:[#allocation10 + $0x988] sm:$0xff]
    %v654 = vld [vmem:[#allocation10 + $0x990] sm:$0xff]
    %v655 = vld [vmem:[#allocation10 + $0x998] sm:$0xff]
    %v656 = vld [vmem:[#allocation10 + $0x9a0] sm:$0xff]
    %v657 = vld [vmem:[#allocation10 + $0x9a8] sm:$0xff]
    %v658 = vld [vmem:[#allocation10 + $0x9b0] sm:$0xff]
    %v659 = vld [vmem:[#allocation10 + $0x9b8] sm:$0xff]
    %v660 = vld [vmem:[#allocation10 + $0x9c0] sm:$0xff]
    %v661 = vld [vmem:[#allocation10 + $0x9c8] sm:$0xff]
    %v662 = vld [vmem:[#allocation10 + $0x9d0] sm:$0xff]
    %v663 = vld [vmem:[#allocation10 + $0x9d8] sm:$0xff]
    %v664 = vld [vmem:[#allocation10 + $0x9e0] sm:$0xff]
    %v665 = vld [vmem:[#allocation10 + $0x9e8] sm:$0xff]
    %v666 = vld [vmem:[#allocation10 + $0x9f0] sm:$0xff]
    %v667 = vld [vmem:[#allocation10 + $0x9f8] sm:$0xff]
    %v668 = vld [vmem:[#allocation10 + $0xa00] sm:$0xff]
    %v669 = vld [vmem:[#allocation10 + $0xa08] sm:$0xff]
    %v670 = vld [vmem:[#allocation10 + $0xa10] sm:$0xff]
    %v671 = vld [vmem:[#allocation10 + $0xa18] sm:$0xff]
    %v672 = vld [vmem:[#allocation10 + $0xa20] sm:$0xff]
    %v673 = vld [vmem:[#allocation10 + $0xa28] sm:$0xff]
    %v674 = vld [vmem:[#allocation10 + $0xa30] sm:$0xff]
    %v675 = vld [vmem:[#allocation10 + $0xa38] sm:$0xff]
    %v676 = vld [vmem:[#allocation10 + $0xa40] sm:$0xff]
    %v677 = vld [vmem:[#allocation10 + $0xa48] sm:$0xff]
    %v678 = vld [vmem:[#allocation10 + $0xa50] sm:$0xff]
    %v679 = vld [vmem:[#allocation10 + $0xa58] sm:$0xff]
    %v680 = vld [vmem:[#allocation10 + $0xa60] sm:$0xff]
    %v681 = vld [vmem:[#allocation10 + $0xa68] sm:$0xff]
    %v682 = vld [vmem:[#allocation10 + $0xa70] sm:$0xff]
    %v683 = vld [vmem:[#allocation10 + $0xa78] sm:$0xff]
    %v684 = vld [vmem:[#allocation10 + $0xa80] sm:$0xff]
    %v685 = vld [vmem:[#allocation10 + $0xa88] sm:$0xff]
    %v686 = vld [vmem:[#allocation10 + $0xa90] sm:$0xff]
    %v687 = vld [vmem:[#allocation10 + $0xa98] sm:$0xff]
    %v688 = vld [vmem:[#allocation10 + $0xaa0] sm:$0xff]
    %v689 = vld [vmem:[#allocation10 + $0xaa8] sm:$0xff]
    %v690 = vld [vmem:[#allocation10 + $0xab0] sm:$0xff]
    %v691 = vld [vmem:[#allocation10 + $0xab8] sm:$0xff]
    %v692 = vld [vmem:[#allocation10 + $0xac0] sm:$0xff]
    %v693 = vld [vmem:[#allocation10 + $0xac8] sm:$0xff]
    %v694 = vld [vmem:[#allocation10 + $0xad0] sm:$0xff]
    %v695 = vld [vmem:[#allocation10 + $0xad8] sm:$0xff]
    %v696 = vld [vmem:[#allocation10 + $0xae0] sm:$0xff]
    %v697 = vld [vmem:[#allocation10 + $0xae8] sm:$0xff]
    %v698 = vld [vmem:[#allocation10 + $0xaf0] sm:$0xff]
    %v699 = vld [vmem:[#allocation10 + $0xaf8] sm:$0xff]
    %v700 = vld [vmem:[#allocation10 + $0xb00] sm:$0xff]
    %v701 = vld [vmem:[#allocation10 + $0xb08] sm:$0xff]
    %v702 = vld [vmem:[#allocation10 + $0xb10] sm:$0xff]
    %v703 = vld [vmem:[#allocation10 + $0xb18] sm:$0xff]
    %v704 = vld [vmem:[#allocation10 + $0xb20] sm:$0xff]
    %v705 = vld [vmem:[#allocation10 + $0xb28] sm:$0xff]
    %v706 = vld [vmem:[#allocation10 + $0xb30] sm:$0xff]
    %v707 = vld [vmem:[#allocation10 + $0xb38] sm:$0xff]
    %v708 = vld [vmem:[#allocation10 + $0xb40] sm:$0xff]
    %v709 = vld [vmem:[#allocation10 + $0xb48] sm:$0xff]
    %v710 = vld [vmem:[#allocation10 + $0xb50] sm:$0xff]
    %v711 = vld [vmem:[#allocation10 + $0xb58] sm:$0xff]
    %v712 = vld [vmem:[#allocation10 + $0xb60] sm:$0xff]
    %v713 = vld [vmem:[#allocation10 + $0xb68] sm:$0xff]
    %v714 = vld [vmem:[#allocation10 + $0xb70] sm:$0xff]
    %v715 = vld [vmem:[#allocation10 + $0xb78] sm:$0xff]
    %v716 = vld [vmem:[#allocation10 + $0xb80] sm:$0xff]
    %v717 = vld [vmem:[#allocation10 + $0xb88] sm:$0xff]
    %v718 = vld [vmem:[#allocation10 + $0xb90] sm:$0xff]
    %v719 = vld [vmem:[#allocation10 + $0xb98] sm:$0xff]
    %v720 = vld [vmem:[#allocation10 + $0xba0] sm:$0xff]
    %v721 = vld [vmem:[#allocation10 + $0xba8] sm:$0xff]
    %v722 = vld [vmem:[#allocation10 + $0xbb0] sm:$0xff]
    %v723 = vld [vmem:[#allocation10 + $0xbb8] sm:$0xff]
    %v724 = vld [vmem:[#allocation10 + $0xbc0] sm:$0xff]
    %v725 = vld [vmem:[#allocation10 + $0xbc8] sm:$0xff]
    %v726 = vld [vmem:[#allocation10 + $0xbd0] sm:$0xff]
    %v727 = vld [vmem:[#allocation10 + $0xbd8] sm:$0xff]
    %v728 = vld [vmem:[#allocation10 + $0xbe0] sm:$0xff]
    %v729 = vld [vmem:[#allocation10 + $0xbe8] sm:$0xff]
    %v730 = vld [vmem:[#allocation10 + $0xbf0] sm:$0xff]
    %v731 = vld [vmem:[#allocation10 + $0xbf8] sm:$0xff]
    %v732 = vld [vmem:[#allocation10 + $0xc00] sm:$0xff]
    %v733 = vld [vmem:[#allocation10 + $0xc08] sm:$0xff]
    %v734 = vld [vmem:[#allocation10 + $0xc10] sm:$0xff]
    %v735 = vld [vmem:[#allocation10 + $0xc18] sm:$0xff]
    %v736 = vld [vmem:[#allocation10 + $0xc20] sm:$0xff]
    %v737 = vld [vmem:[#allocation10 + $0xc28] sm:$0xff]
    %v738 = vld [vmem:[#allocation10 + $0xc30] sm:$0xff]
    %v739 = vld [vmem:[#allocation10 + $0xc38] sm:$0xff]
    %v740 = vld [vmem:[#allocation10 + $0xc40] sm:$0xff]
    %v741 = vld [vmem:[#allocation10 + $0xc48] sm:$0xff]
    %v742 = vld [vmem:[#allocation10 + $0xc50] sm:$0xff]
    %v743 = vld [vmem:[#allocation10 + $0xc58] sm:$0xff]
    %v744 = vld [vmem:[#allocation10 + $0xc60] sm:$0xff]
    %v745 = vld [vmem:[#allocation10 + $0xc68] sm:$0xff]
    %v746 = vld [vmem:[#allocation10 + $0xc70] sm:$0xff]
    %v747 = vld [vmem:[#allocation10 + $0xc78] sm:$0xff]
    %v748 = vld [vmem:[#allocation10 + $0xc80] sm:$0xff]
    %v749 = vld [vmem:[#allocation10 + $0xc88] sm:$0xff]
    %v750 = vld [vmem:[#allocation10 + $0xc90] sm:$0xff]
    %v751 = vld [vmem:[#allocation10 + $0xc98] sm:$0xff]
    %v752 = vld [vmem:[#allocation10 + $0xca0] sm:$0xff]
    %v753 = vld [vmem:[#allocation10 + $0xca8] sm:$0xff]
    %v754 = vld [vmem:[#allocation10 + $0xcb0] sm:$0xff]
    %v755 = vld [vmem:[#allocation10 + $0xcb8] sm:$0xff]
    %v756 = vld [vmem:[#allocation10 + $0xcc0] sm:$0xff]
    %v757 = vld [vmem:[#allocation10 + $0xcc8] sm:$0xff]
    %v758 = vld [vmem:[#allocation10 + $0xcd0] sm:$0xff]
    %v759 = vld [vmem:[#allocation10 + $0xcd8] sm:$0xff]
    %v760 = vld [vmem:[#allocation10 + $0xce0] sm:$0xff]
    %v761 = vld [vmem:[#allocation10 + $0xce8] sm:$0xff]
    %v762 = vld [vmem:[#allocation10 + $0xcf0] sm:$0xff]
    %v763 = vld [vmem:[#allocation10 + $0xcf8] sm:$0xff]
    %v764 = vld [vmem:[#allocation10 + $0xd00] sm:$0xff]
    %v765 = vld [vmem:[#allocation10 + $0xd08] sm:$0xff]
    %v766 = vld [vmem:[#allocation10 + $0xd10] sm:$0xff]
    %v767 = vld [vmem:[#allocation10 + $0xd18] sm:$0xff]
    %v768 = vld [vmem:[#allocation10 + $0xd20] sm:$0xff]
    %v769 = vld [vmem:[#allocation10 + $0xd28] sm:$0xff]
    %v770 = vld [vmem:[#allocation10 + $0xd30] sm:$0xff]
    %v771 = vld [vmem:[#allocation10 + $0xd38] sm:$0xff]
    %v772 = vld [vmem:[#allocation10 + $0xd40] sm:$0xff]
    %v773 = vld [vmem:[#allocation10 + $0xd48] sm:$0xff]
    %v774 = vld [vmem:[#allocation10 + $0xd50] sm:$0xff]
    %v775 = vld [vmem:[#allocation10 + $0xd58] sm:$0xff]
    %v776 = vld [vmem:[#allocation10 + $0xd60] sm:$0xff]
    %v777 = vld [vmem:[#allocation10 + $0xd68] sm:$0xff]
    %v778 = vld [vmem:[#allocation10 + $0xd70] sm:$0xff]
    %v779 = vld [vmem:[#allocation10 + $0xd78] sm:$0xff]
    %v780 = vld [vmem:[#allocation10 + $0xd80] sm:$0xff]
    %v781 = vld [vmem:[#allocation10 + $0xd88] sm:$0xff]
    %v782 = vld [vmem:[#allocation10 + $0xd90] sm:$0xff]
    %v783 = vld [vmem:[#allocation10 + $0xd98] sm:$0xff]
    %v784 = vld [vmem:[#allocation10 + $0xda0] sm:$0xff]
    %v785 = vld [vmem:[#allocation10 + $0xda8] sm:$0xff]
    %v786 = vld [vmem:[#allocation10 + $0xdb0] sm:$0xff]
    %v787 = vld [vmem:[#allocation10 + $0xdb8] sm:$0xff]
    %v788 = vld [vmem:[#allocation10 + $0xdc0] sm:$0xff]
    %v789 = vld [vmem:[#allocation10 + $0xdc8] sm:$0xff]
    %v790 = vld [vmem:[#allocation10 + $0xdd0] sm:$0xff]
    %v791 = vld [vmem:[#allocation10 + $0xdd8] sm:$0xff]
    %v792 = vld [vmem:[#allocation10 + $0xde0] sm:$0xff]
    %v793 = vld [vmem:[#allocation10 + $0xde8] sm:$0xff]
    %v794 = vld [vmem:[#allocation10 + $0xdf0] sm:$0xff]
    %v795 = vld [vmem:[#allocation10 + $0xdf8] sm:$0xff]
    %v796 = vld [vmem:[#allocation10 + $0xe00] sm:$0xff]
    %v797 = vld [vmem:[#allocation10 + $0xe08] sm:$0xff]
    %v798 = vld [vmem:[#allocation10 + $0xe10] sm:$0xff]
    %v799 = vld [vmem:[#allocation10 + $0xe18] sm:$0xff]
    %v800 = vld [vmem:[#allocation10 + $0xe20] sm:$0xff]
    %v801 = vld [vmem:[#allocation10 + $0xe28] sm:$0xff]
    %v802 = vld [vmem:[#allocation10 + $0xe30] sm:$0xff]
    %v803 = vld [vmem:[#allocation10 + $0xe38] sm:$0xff]
    %v804 = vld [vmem:[#allocation10 + $0xe40] sm:$0xff]
    %v805 = vld [vmem:[#allocation10 + $0xe48] sm:$0xff]
    %v806 = vld [vmem:[#allocation10 + $0xe50] sm:$0xff]
    %v807 = vld [vmem:[#allocation10 + $0xe58] sm:$0xff]
    %v808 = vld [vmem:[#allocation10 + $0xe60] sm:$0xff]
    %v809 = vld [vmem:[#allocation10 + $0xe68] sm:$0xff]
    %v810 = vld [vmem:[#allocation10 + $0xe70] sm:$0xff]
    %v811 = vld [vmem:[#allocation10 + $0xe78] sm:$0xff]
    %v812 = vld [vmem:[#allocation10 + $0xe80] sm:$0xff]
    %v813 = vld [vmem:[#allocation10 + $0xe88] sm:$0xff]
    %v814 = vld [vmem:[#allocation10 + $0xe90] sm:$0xff]
    %v815 = vld [vmem:[#allocation10 + $0xe98] sm:$0xff]
    %v816 = vld [vmem:[#allocation10 + $0xea0] sm:$0xff]
    %v817 = vld [vmem:[#allocation10 + $0xea8] sm:$0xff]
    %v818 = vld [vmem:[#allocation10 + $0xeb0] sm:$0xff]
    %v819 = vld [vmem:[#allocation10 + $0xeb8] sm:$0xff]
    %v820 = vld [vmem:[#allocation10 + $0xec0] sm:$0xff]
    %v821 = vld [vmem:[#allocation10 + $0xec8] sm:$0xff]
    %v822 = vld [vmem:[#allocation10 + $0xed0] sm:$0xff]
    %v823 = vld [vmem:[#allocation10 + $0xed8] sm:$0xff]
    %v824 = vld [vmem:[#allocation10 + $0xee0] sm:$0xff]
    %v825 = vld [vmem:[#allocation10 + $0xee8] sm:$0xff]
    %v826 = vld [vmem:[#allocation10 + $0xef0] sm:$0xff]
    %v827 = vld [vmem:[#allocation10 + $0xef8] sm:$0xff]
    %v828 = vld [vmem:[#allocation10 + $0xf00] sm:$0xff]
    %v829 = vld [vmem:[#allocation10 + $0xf08] sm:$0xff]
    %v830 = vld [vmem:[#allocation10 + $0xf10] sm:$0xff]
    %v831 = vld [vmem:[#allocation10 + $0xf18] sm:$0xff]
    %v832 = vld [vmem:[#allocation10 + $0xf20] sm:$0xff]
    %v833 = vld [vmem:[#allocation10 + $0xf28] sm:$0xff]
    %v834 = vld [vmem:[#allocation10 + $0xf30] sm:$0xff]
    %v835 = vld [vmem:[#allocation10 + $0xf38] sm:$0xff]
    %v836 = vld [vmem:[#allocation10 + $0xf40] sm:$0xff]
    %v837 = vld [vmem:[#allocation10 + $0xf48] sm:$0xff]
    %v838 = vld [vmem:[#allocation10 + $0xf50] sm:$0xff]
    %v839 = vld [vmem:[#allocation10 + $0xf58] sm:$0xff]
    %v840 = vld [vmem:[#allocation10 + $0xf60] sm:$0xff]
    %v841 = vld [vmem:[#allocation10 + $0xf68] sm:$0xff]
    %v842 = vld [vmem:[#allocation10 + $0xf70] sm:$0xff]
    %v843 = vld [vmem:[#allocation10 + $0xf78] sm:$0xff]
    %v844 = vld [vmem:[#allocation10 + $0xf80] sm:$0xff]
    %v845 = vld [vmem:[#allocation10 + $0xf88] sm:$0xff]
    %v846 = vld [vmem:[#allocation10 + $0xf90] sm:$0xff]
    %v847 = vld [vmem:[#allocation10 + $0xf98] sm:$0xff]
    %v848 = vld [vmem:[#allocation10 + $0xfa0] sm:$0xff]
    %v849 = vld [vmem:[#allocation10 + $0xfa8] sm:$0xff]
    %v850 = vld [vmem:[#allocation10 + $0xfb0] sm:$0xff]
    %v851 = vld [vmem:[#allocation10 + $0xfb8] sm:$0xff]
    %v852 = vld [vmem:[#allocation10 + $0xfc0] sm:$0xff]
    %v853 = vld [vmem:[#allocation10 + $0xfc8] sm:$0xff]
    %v854 = vld [vmem:[#allocation10 + $0xfd0] sm:$0xff]
    %v855 = vld [vmem:[#allocation10 + $0xfd8] sm:$0xff]
    %v856 = vld [vmem:[#allocation10 + $0xfe0] sm:$0xff]
    %v857 = vld [vmem:[#allocation10 + $0xfe8] sm:$0xff]
    %v858 = vld [vmem:[#allocation10 + $0xff0] sm:$0xff]
    %v859 = vld [vmem:[#allocation10 + $0xff8] sm:$0xff]
    %v860 = vld [vmem:[#allocation12] sm:$0xff]
    %v861 = vld [vmem:[#allocation12 + $0x8] sm:$0xff]
    %v862 = vld [vmem:[#allocation13] sm:$0xf]
    %v863 = vld [vmem:[#allocation13 + $0x4] sm:$0xf]
    %v864 = vld [vmem:[#allocation13 + $0x8] sm:$0xf]
    %v865 = vld [vmem:[#allocation13 + $0xc] sm:$0xf]
    %v866 = vld [vmem:[#allocation13 + $0x10] sm:$0xf]
    %v867 = vld [vmem:[#allocation13 + $0x14] sm:$0xf]
    %v868 = vld [vmem:[#allocation13 + $0x18] sm:$0xf]
    %v869 = vld [vmem:[#allocation13 + $0x1c] sm:$0xf]
    %v870 = vld [vmem:[#allocation13 + $0x20] sm:$0xf]
    %v871 = vld [vmem:[#allocation13 + $0x24] sm:$0xf]
    %v872 = vld [vmem:[#allocation13 + $0x28] sm:$0xf]
    %v873 = vld [vmem:[#allocation13 + $0x2c] sm:$0xf]
    %v874 = vld [vmem:[#allocation13 + $0x30] sm:$0xf]
    %v875 = vld [vmem:[#allocation13 + $0x34] sm:$0xf]
    %v876 = vld [vmem:[#allocation13 + $0x38] sm:$0xf]
    %v877 = vld [vmem:[#allocation13 + $0x3c] sm:$0xf]
    %v878 = vld [vmem:[#allocation13 + $0x40] sm:$0xf]
    %v879 = vld [vmem:[#allocation13 + $0x44] sm:$0xf]
    %v880 = vld [vmem:[#allocation13 + $0x48] sm:$0xf]
    %v881 = vld [vmem:[#allocation13 + $0x4c] sm:$0xf]
    %v882 = vld [vmem:[#allocation13 + $0x50] sm:$0xf]
    %v883 = vld [vmem:[#allocation13 + $0x54] sm:$0xf]
    %v884 = vld [vmem:[#allocation13 + $0x58] sm:$0xf]
    %v885 = vld [vmem:[#allocation13 + $0x5c] sm:$0xf]
    %v886 = vld [vmem:[#allocation13 + $0x60] sm:$0xf]
    %v887 = vld [vmem:[#allocation13 + $0x64] sm:$0xf]
    %v888 = vld [vmem:[#allocation13 + $0x68] sm:$0xf]
    %v889 = vld [vmem:[#allocation13 + $0x6c] sm:$0xf]
    %v890 = vld [vmem:[#allocation13 + $0x70] sm:$0xf]
    %v891 = vld [vmem:[#allocation13 + $0x74] sm:$0xf]
    %v892 = vld [vmem:[#allocation13 + $0x78] sm:$0xf]
    %v893 = vld [vmem:[#allocation13 + $0x7c] sm:$0xf]
    %v894 = vld [vmem:[#allocation13 + $0x80] sm:$0xf]
    %v895 = vld [vmem:[#allocation13 + $0x84] sm:$0xf]
    %v896 = vld [vmem:[#allocation13 + $0x88] sm:$0xf]
    %v897 = vld [vmem:[#allocation13 + $0x8c] sm:$0xf]
    %v898 = vld [vmem:[#allocation13 + $0x90] sm:$0xf]
    %v899 = vld [vmem:[#allocation13 + $0x94] sm:$0xf]
    %v900 = vld [vmem:[#allocation13 + $0x98] sm:$0xf]
    %v901 = vld [vmem:[#allocation13 + $0x9c] sm:$0xf]
    %v902 = vld [vmem:[#allocation13 + $0xa0] sm:$0xf]
    %v903 = vld [vmem:[#allocation13 + $0xa4] sm:$0xf]
    %v904 = vld [vmem:[#allocation13 + $0xa8] sm:$0xf]
    %v905 = vld [vmem:[#allocation13 + $0xac] sm:$0xf]
    %v906 = vld [vmem:[#allocation13 + $0xb0] sm:$0xf]
    %v907 = vld [vmem:[#allocation13 + $0xb4] sm:$0xf]
    %v908 = vld [vmem:[#allocation13 + $0xb8] sm:$0xf]
    %v909 = vld [vmem:[#allocation13 + $0xbc] sm:$0xf]
    %v910 = vld [vmem:[#allocation13 + $0xc0] sm:$0xf]
    %v911 = vld [vmem:[#allocation13 + $0xc4] sm:$0xf]
    %v912 = vld [vmem:[#allocation13 + $0xc8] sm:$0xf]
    %v913 = vld [vmem:[#allocation13 + $0xcc] sm:$0xf]
    %v914 = vld [vmem:[#allocation13 + $0xd0] sm:$0xf]
    %v915 = vld [vmem:[#allocation13 + $0xd4] sm:$0xf]
    %v916 = vld [vmem:[#allocation13 + $0xd8] sm:$0xf]
    %v917 = vld [vmem:[#allocation13 + $0xdc] sm:$0xf]
    %v918 = vld [vmem:[#allocation13 + $0xe0] sm:$0xf]
    %v919 = vld [vmem:[#allocation13 + $0xe4] sm:$0xf]
    %v920 = vld [vmem:[#allocation13 + $0xe8] sm:$0xf]
    %v921 = vld [vmem:[#allocation13 + $0xec] sm:$0xf]
    %v922 = vld [vmem:[#allocation13 + $0xf0] sm:$0xf]
    %v923 = vld [vmem:[#allocation13 + $0xf4] sm:$0xf]
    %v924 = vld [vmem:[#allocation13 + $0xf8] sm:$0xf]
    %v925 = vld [vmem:[#allocation13 + $0xfc] sm:$0xf]
    %v926 = vld [vmem:[#allocation13 + $0x100] sm:$0xf]
    %v927 = vld [vmem:[#allocation13 + $0x104] sm:$0xf]
    %v928 = vld [vmem:[#allocation13 + $0x108] sm:$0xf]
    %v929 = vld [vmem:[#allocation13 + $0x10c] sm:$0xf]
    %v930 = vld [vmem:[#allocation13 + $0x110] sm:$0xf]
    %v931 = vld [vmem:[#allocation13 + $0x114] sm:$0xf]
    %v932 = vld [vmem:[#allocation13 + $0x118] sm:$0xf]
    %v933 = vld [vmem:[#allocation13 + $0x11c] sm:$0xf]
    %v934 = vld [vmem:[#allocation13 + $0x120] sm:$0xf]
    %v935 = vld [vmem:[#allocation13 + $0x124] sm:$0xf]
    %v936 = vld [vmem:[#allocation13 + $0x128] sm:$0xf]
    %v937 = vld [vmem:[#allocation13 + $0x12c] sm:$0xf]
    %v938 = vld [vmem:[#allocation13 + $0x130] sm:$0xf]
    %v939 = vld [vmem:[#allocation13 + $0x134] sm:$0xf]
    %v940 = vld [vmem:[#allocation13 + $0x138] sm:$0xf]
    %v941 = vld [vmem:[#allocation13 + $0x13c] sm:$0xf]
    %v942 = vld [vmem:[#allocation13 + $0x140] sm:$0xf]
    %v943 = vld [vmem:[#allocation13 + $0x144] sm:$0xf]
    %v944 = vld [vmem:[#allocation13 + $0x148] sm:$0xf]
    %v945 = vld [vmem:[#allocation13 + $0x14c] sm:$0xf]
    %v946 = vld [vmem:[#allocation13 + $0x150] sm:$0xf]
    %v947 = vld [vmem:[#allocation13 + $0x154] sm:$0xf]
    %v948 = vld [vmem:[#allocation13 + $0x158] sm:$0xf]
    %v949 = vld [vmem:[#allocation13 + $0x15c] sm:$0xf]
    %v950 = vld [vmem:[#allocation13 + $0x160] sm:$0xf]
    %v951 = vld [vmem:[#allocation13 + $0x164] sm:$0xf]
    %v952 = vld [vmem:[#allocation13 + $0x168] sm:$0xf]
    %v953 = vld [vmem:[#allocation13 + $0x16c] sm:$0xf]
    %v954 = vld [vmem:[#allocation13 + $0x170] sm:$0xf]
    %v955 = vld [vmem:[#allocation13 + $0x174] sm:$0xf]
    %v956 = vld [vmem:[#allocation13 + $0x178] sm:$0xf]
    %v957 = vld [vmem:[#allocation13 + $0x17c] sm:$0xf]
    %v958 = vld [vmem:[#allocation13 + $0x180] sm:$0xf]
    %v959 = vld [vmem:[#allocation13 + $0x184] sm:$0xf]
    %v960 = vld [vmem:[#allocation13 + $0x188] sm:$0xf]
    %v961 = vld [vmem:[#allocation13 + $0x18c] sm:$0xf]
    %v962 = vld [vmem:[#allocation13 + $0x190] sm:$0xf]
    %v963 = vld [vmem:[#allocation13 + $0x194] sm:$0xf]
    %v964 = vld [vmem:[#allocation13 + $0x198] sm:$0xf]
    %v965 = vld [vmem:[#allocation13 + $0x19c] sm:$0xf]
    %v966 = vld [vmem:[#allocation13 + $0x1a0] sm:$0xf]
    %v967 = vld [vmem:[#allocation13 + $0x1a4] sm:$0xf]
    %v968 = vld [vmem:[#allocation13 + $0x1a8] sm:$0xf]
    %v969 = vld [vmem:[#allocation13 + $0x1ac] sm:$0xf]
    %v970 = vld [vmem:[#allocation13 + $0x1b0] sm:$0xf]
    %v971 = vld [vmem:[#allocation13 + $0x1b4] sm:$0xf]
    %v972 = vld [vmem:[#allocation13 + $0x1b8] sm:$0xf]
    %v973 = vld [vmem:[#allocation13 + $0x1bc] sm:$0xf]
    %v974 = vld [vmem:[#allocation13 + $0x1c0] sm:$0xf]
    %v975 = vld [vmem:[#allocation13 + $0x1c4] sm:$0xf]
    %v976 = vld [vmem:[#allocation13 + $0x1c8] sm:$0xf]
    %v977 = vld [vmem:[#allocation13 + $0x1cc] sm:$0xf]
    %v978 = vld [vmem:[#allocation13 + $0x1d0] sm:$0xf]
    %v979 = vld [vmem:[#allocation13 + $0x1d4] sm:$0xf]
    %v980 = vld [vmem:[#allocation13 + $0x1d8] sm:$0xf]
    %v981 = vld [vmem:[#allocation13 + $0x1dc] sm:$0xf]
    %v982 = vld [vmem:[#allocation13 + $0x1e0] sm:$0xf]
    %v983 = vld [vmem:[#allocation13 + $0x1e4] sm:$0xf]
    %v984 = vld [vmem:[#allocation13 + $0x1e8] sm:$0xf]
    %v985 = vld [vmem:[#allocation13 + $0x1ec] sm:$0xf]
    %v986 = vld [vmem:[#allocation13 + $0x1f0] sm:$0xf]
    %v987 = vld [vmem:[#allocation13 + $0x1f4] sm:$0xf]
    %v988 = vld [vmem:[#allocation13 + $0x1f8] sm:$0xf]
    %v989 = vld [vmem:[#allocation13 + $0x1fc] sm:$0xf]
    %v990 = vld [vmem:[#allocation13 + $0x200] sm:$0xf]
    %v991 = vld [vmem:[#allocation13 + $0x204] sm:$0xf]
    %v992 = vld [vmem:[#allocation13 + $0x208] sm:$0xf]
    %v993 = vld [vmem:[#allocation13 + $0x20c] sm:$0xf]
    %v994 = vld [vmem:[#allocation13 + $0x210] sm:$0xf]
    %v995 = vld [vmem:[#allocation13 + $0x214] sm:$0xf]
    %v996 = vld [vmem:[#allocation13 + $0x218] sm:$0xf]
    %v997 = vld [vmem:[#allocation13 + $0x21c] sm:$0xf]
    %v998 = vld [vmem:[#allocation13 + $0x220] sm:$0xf]
    %v999 = vld [vmem:[#allocation13 + $0x224] sm:$0xf]
    %v1000 = vld [vmem:[#allocation13 + $0x228] sm:$0xf]
    %v1001 = vld [vmem:[#allocation13 + $0x22c] sm:$0xf]
    %v1002 = vld [vmem:[#allocation13 + $0x230] sm:$0xf]
    %v1003 = vld [vmem:[#allocation13 + $0x234] sm:$0xf]
    %v1004 = vld [vmem:[#allocation13 + $0x238] sm:$0xf]
    %v1005 = vld [vmem:[#allocation13 + $0x23c] sm:$0xf]
    %v1006 = vld [vmem:[#allocation13 + $0x240] sm:$0xf]
    %v1007 = vld [vmem:[#allocation13 + $0x244] sm:$0xf]
    %v1008 = vld [vmem:[#allocation13 + $0x248] sm:$0xf]
    %v1009 = vld [vmem:[#allocation13 + $0x24c] sm:$0xf]
    %v1010 = vld [vmem:[#allocation13 + $0x250] sm:$0xf]
    %v1011 = vld [vmem:[#allocation13 + $0x254] sm:$0xf]
    %v1012 = vld [vmem:[#allocation13 + $0x258] sm:$0xf]
    %v1013 = vld [vmem:[#allocation13 + $0x25c] sm:$0xf]
    %v1014 = vld [vmem:[#allocation13 + $0x260] sm:$0xf]
    %v1015 = vld [vmem:[#allocation13 + $0x264] sm:$0xf]
    %v1016 = vld [vmem:[#allocation13 + $0x268] sm:$0xf]
    %v1017 = vld [vmem:[#allocation13 + $0x26c] sm:$0xf]
    %v1018 = vld [vmem:[#allocation13 + $0x270] sm:$0xf]
    %v1019 = vld [vmem:[#allocation13 + $0x274] sm:$0xf]
    %v1020 = vld [vmem:[#allocation13 + $0x278] sm:$0xf]
    %v1021 = vld [vmem:[#allocation13 + $0x27c] sm:$0xf]
    %v1022 = vld [vmem:[#allocation13 + $0x280] sm:$0xf]
    %v1023 = vld [vmem:[#allocation13 + $0x284] sm:$0xf]
    %v1024 = vld [vmem:[#allocation13 + $0x288] sm:$0xf]
    %v1025 = vld [vmem:[#allocation13 + $0x28c] sm:$0xf]
    %v1026 = vld [vmem:[#allocation13 + $0x290] sm:$0xf]
    %v1027 = vld [vmem:[#allocation13 + $0x294] sm:$0xf]
    %v1028 = vld [vmem:[#allocation13 + $0x298] sm:$0xf]
    %v1029 = vld [vmem:[#allocation13 + $0x29c] sm:$0xf]
    %v1030 = vld [vmem:[#allocation13 + $0x2a0] sm:$0xf]
    %v1031 = vld [vmem:[#allocation13 + $0x2a4] sm:$0xf]
    %v1032 = vld [vmem:[#allocation13 + $0x2a8] sm:$0xf]
    %v1033 = vld [vmem:[#allocation13 + $0x2ac] sm:$0xf]
    %v1034 = vld [vmem:[#allocation13 + $0x2b0] sm:$0xf]
    %v1035 = vld [vmem:[#allocation13 + $0x2b4] sm:$0xf]
    %v1036 = vld [vmem:[#allocation13 + $0x2b8] sm:$0xf]
    %v1037 = vld [vmem:[#allocation13 + $0x2bc] sm:$0xf]
    %v1038 = vld [vmem:[#allocation13 + $0x2c0] sm:$0xf]
    %v1039 = vld [vmem:[#allocation13 + $0x2c4] sm:$0xf]
    %v1040 = vld [vmem:[#allocation13 + $0x2c8] sm:$0xf]
    %v1041 = vld [vmem:[#allocation13 + $0x2cc] sm:$0xf]
    %v1042 = vld [vmem:[#allocation13 + $0x2d0] sm:$0xf]
    %v1043 = vld [vmem:[#allocation13 + $0x2d4] sm:$0xf]
    %v1044 = vld [vmem:[#allocation13 + $0x2d8] sm:$0xf]
    %v1045 = vld [vmem:[#allocation13 + $0x2dc] sm:$0xf]
    %v1046 = vld [vmem:[#allocation13 + $0x2e0] sm:$0xf]
    %v1047 = vld [vmem:[#allocation13 + $0x2e4] sm:$0xf]
    %v1048 = vld [vmem:[#allocation13 + $0x2e8] sm:$0xf]
    %v1049 = vld [vmem:[#allocation13 + $0x2ec] sm:$0xf]
    %v1050 = vld [vmem:[#allocation13 + $0x2f0] sm:$0xf]
    %v1051 = vld [vmem:[#allocation13 + $0x2f4] sm:$0xf]
    %v1052 = vld [vmem:[#allocation13 + $0x2f8] sm:$0xf]
    %v1053 = vld [vmem:[#allocation13 + $0x2fc] sm:$0xf]
    %v1054 = vld [vmem:[#allocation13 + $0x300] sm:$0xf]
    %v1055 = vld [vmem:[#allocation13 + $0x304] sm:$0xf]
    %v1056 = vld [vmem:[#allocation13 + $0x308] sm:$0xf]
    %v1057 = vld [vmem:[#allocation13 + $0x30c] sm:$0xf]
    %v1058 = vld [vmem:[#allocation13 + $0x310] sm:$0xf]
    %v1059 = vld [vmem:[#allocation13 + $0x314] sm:$0xf]
    %v1060 = vld [vmem:[#allocation13 + $0x318] sm:$0xf]
    %v1061 = vld [vmem:[#allocation13 + $0x31c] sm:$0xf]
    %v1062 = vld [vmem:[#allocation13 + $0x320] sm:$0xf]
    %v1063 = vld [vmem:[#allocation13 + $0x324] sm:$0xf]
    %v1064 = vld [vmem:[#allocation13 + $0x328] sm:$0xf]
    %v1065 = vld [vmem:[#allocation13 + $0x32c] sm:$0xf]
    %v1066 = vld [vmem:[#allocation13 + $0x330] sm:$0xf]
    %v1067 = vld [vmem:[#allocation13 + $0x334] sm:$0xf]
    %v1068 = vld [vmem:[#allocation13 + $0x338] sm:$0xf]
    %v1069 = vld [vmem:[#allocation13 + $0x33c] sm:$0xf]
    %v1070 = vld [vmem:[#allocation13 + $0x340] sm:$0xf]
    %v1071 = vld [vmem:[#allocation13 + $0x344] sm:$0xf]
    %v1072 = vld [vmem:[#allocation13 + $0x348] sm:$0xf]
    %v1073 = vld [vmem:[#allocation13 + $0x34c] sm:$0xf]
    %v1074 = vld [vmem:[#allocation13 + $0x350] sm:$0xf]
    %v1075 = vld [vmem:[#allocation13 + $0x354] sm:$0xf]
    %v1076 = vld [vmem:[#allocation13 + $0x358] sm:$0xf]
    %v1077 = vld [vmem:[#allocation13 + $0x35c] sm:$0xf]
    %v1078 = vld [vmem:[#allocation13 + $0x360] sm:$0xf]
    %v1079 = vld [vmem:[#allocation13 + $0x364] sm:$0xf]
    %v1080 = vld [vmem:[#allocation13 + $0x368] sm:$0xf]
    %v1081 = vld [vmem:[#allocation13 + $0x36c] sm:$0xf]
    %v1082 = vld [vmem:[#allocation13 + $0x370] sm:$0xf]
    %v1083 = vld [vmem:[#allocation13 + $0x374] sm:$0xf]
    %v1084 = vld [vmem:[#allocation13 + $0x378] sm:$0xf]
    %v1085 = vld [vmem:[#allocation13 + $0x37c] sm:$0xf]
    %v1086 = vld [vmem:[#allocation13 + $0x380] sm:$0xf]
    %v1087 = vld [vmem:[#allocation13 + $0x384] sm:$0xf]
    %v1088 = vld [vmem:[#allocation13 + $0x388] sm:$0xf]
    %v1089 = vld [vmem:[#allocation13 + $0x38c] sm:$0xf]
    %v1090 = vld [vmem:[#allocation13 + $0x390] sm:$0xf]
    %v1091 = vld [vmem:[#allocation13 + $0x394] sm:$0xf]
    %v1092 = vld [vmem:[#allocation13 + $0x398] sm:$0xf]
    %v1093 = vld [vmem:[#allocation13 + $0x39c] sm:$0xf]
    %v1094 = vld [vmem:[#allocation13 + $0x3a0] sm:$0xf]
    %v1095 = vld [vmem:[#allocation13 + $0x3a4] sm:$0xf]
    %v1096 = vld [vmem:[#allocation13 + $0x3a8] sm:$0xf]
    %v1097 = vld [vmem:[#allocation13 + $0x3ac] sm:$0xf]
    %v1098 = vld [vmem:[#allocation13 + $0x3b0] sm:$0xf]
    %v1099 = vld [vmem:[#allocation13 + $0x3b4] sm:$0xf]
    %v1100 = vld [vmem:[#allocation13 + $0x3b8] sm:$0xf]
    %v1101 = vld [vmem:[#allocation13 + $0x3bc] sm:$0xf]
    %v1102 = vld [vmem:[#allocation13 + $0x3c0] sm:$0xf]
    %v1103 = vld [vmem:[#allocation13 + $0x3c4] sm:$0xf]
    %v1104 = vld [vmem:[#allocation13 + $0x3c8] sm:$0xf]
    %v1105 = vld [vmem:[#allocation13 + $0x3cc] sm:$0xf]
    %v1106 = vld [vmem:[#allocation13 + $0x3d0] sm:$0xf]
    %v1107 = vld [vmem:[#allocation13 + $0x3d4] sm:$0xf]
    %v1108 = vld [vmem:[#allocation13 + $0x3d8] sm:$0xf]
    %v1109 = vld [vmem:[#allocation13 + $0x3dc] sm:$0xf]
    %v1110 = vld [vmem:[#allocation13 + $0x3e0] sm:$0xf]
    %v1111 = vld [vmem:[#allocation13 + $0x3e4] sm:$0xf]
    %v1112 = vld [vmem:[#allocation13 + $0x3e8] sm:$0xf]
    %v1113 = vld [vmem:[#allocation13 + $0x3ec] sm:$0xf]
    %v1114 = vld [vmem:[#allocation13 + $0x3f0] sm:$0xf]
    %v1115 = vld [vmem:[#allocation13 + $0x3f4] sm:$0xf]
    %v1116 = vld [vmem:[#allocation13 + $0x3f8] sm:$0xf]
    %v1117 = vld [vmem:[#allocation13 + $0x3fc] sm:$0xf]
    %v1119 = vperm.slane %v218, 0
    %v1120 = vperm.slane %v218, 1
    %v1121 = vperm.slane %v218, 2
    %v1122 = vperm.slane %v218, 3
    %vm1127 = vcmask 261120
    %v1129 = vsel %vm1127, %v201, 0
    %1131 = vmatpush.msra.mxu0 0.0
    %1132 = vmatpush.msra.mxu0 0.0
    %1133 = vmatpush.msra.mxu0 0.0
    %1134 = vmatpush.msra.mxu0 0.0
    %1135 = vmatpush.msra.mxu0 0.0
    %1136 = vmatpush.msra.mxu0 0.0
    %1137 = vmatpush.msra.mxu0 0.0
    %1138 = vmatpush.msra.mxu0 0.0
    %1139 = vmatpush.msra.mxu0 0.0
    %1140 = vmatpush.msra.mxu0 0.0
    %1141 = vmatpush.msra.mxu0 0.0
    %1142 = vmatpush.msra.mxu0 0.0
    %1143 = vmatpush.msra.mxu0 %v214
    %1144 = vmatpush.msra.mxu0 %v210
    %1145 = vmatpush.msra.mxu0 %v206
    %1146 = vmatpush.msra.mxu0 %v202
    %1147 = vmatmul.f32.gmra.mxu0 %v1129
    %v1148 = vpop.f32.mrf.mxu0
    %v1149 = vadd.f32 %v1119, %v1148
    %1150 = vdwg.mxu0
    %1151 = vmatpush.msra.mxu0 0.0
    %1152 = vmatpush.msra.mxu0 0.0
    %1153 = vmatpush.msra.mxu0 0.0
    %1154 = vmatpush.msra.mxu0 0.0
    %1155 = vmatpush.msra.mxu0 0.0
    %1156 = vmatpush.msra.mxu0 0.0
    %1157 = vmatpush.msra.mxu0 0.0
    %1158 = vmatpush.msra.mxu0 0.0
    %1159 = vmatpush.msra.mxu0 0.0
    %1160 = vmatpush.msra.mxu0 0.0
    %1161 = vmatpush.msra.mxu0 0.0
    %1162 = vmatpush.msra.mxu0 0.0
    %1163 = vmatpush.msra.mxu0 %v215
    %1164 = vmatpush.msra.mxu0 %v211
    %1165 = vmatpush.msra.mxu0 %v207
    %1166 = vmatpush.msra.mxu0 %v203
    %1167 = vmatmul.f32.gmra.mxu0 %v1129
    %v1168 = vpop.f32.mrf.mxu0
    %v1169 = vadd.f32 %v1120, %v1168
    %1170 = vdwg.mxu0
    %1171 = vmatpush.msra.mxu0 0.0
    %1172 = vmatpush.msra.mxu0 0.0
    %1173 = vmatpush.msra.mxu0 0.0
    %1174 = vmatpush.msra.mxu0 0.0
    %1175 = vmatpush.msra.mxu0 0.0
    %1176 = vmatpush.msra.mxu0 0.0
    %1177 = vmatpush.msra.mxu0 0.0
    %1178 = vmatpush.msra.mxu0 0.0
    %1179 = vmatpush.msra.mxu0 0.0
    %1180 = vmatpush.msra.mxu0 0.0
    %1181 = vmatpush.msra.mxu0 0.0
    %1182 = vmatpush.msra.mxu0 0.0
    %1183 = vmatpush.msra.mxu0 %v216
    %1184 = vmatpush.msra.mxu0 %v212
    %1185 = vmatpush.msra.mxu0 %v208
    %1186 = vmatpush.msra.mxu0 %v204
    %1187 = vmatmul.f32.gmra.mxu0 %v1129
    %v1188 = vpop.f32.mrf.mxu0
    %v1189 = vadd.f32 %v1121, %v1188
    %1190 = vdwg.mxu0
    %1191 = vmatpush.msra.mxu0 0.0
    %1192 = vmatpush.msra.mxu0 0.0
    %1193 = vmatpush.msra.mxu0 0.0
    %1194 = vmatpush.msra.mxu0 0.0
    %1195 = vmatpush.msra.mxu0 0.0
    %1196 = vmatpush.msra.mxu0 0.0
    %1197 = vmatpush.msra.mxu0 0.0
    %1198 = vmatpush.msra.mxu0 0.0
    %1199 = vmatpush.msra.mxu0 0.0
    %1200 = vmatpush.msra.mxu0 0.0
    %1201 = vmatpush.msra.mxu0 0.0
    %1202 = vmatpush.msra.mxu0 0.0
    %1203 = vmatpush.msra.mxu0 %v217
    %1204 = vmatpush.msra.mxu0 %v213
    %1205 = vmatpush.msra.mxu0 %v209
    %1206 = vmatpush.msra.mxu0 %v205
    %1207 = vmatmul.f32.gmra.mxu0 %v1129
    %v1208 = vpop.f32.mrf.mxu0
    %v1209 = vadd.f32 %v1122, %v1208
    %1210 = vdwg.mxu0
    %v1211 = vmax.f32 %v1149, 0.0
    %v1212 = vmax.f32 %v1169, 0.0
    %v1213 = vmax.f32 %v1189, 0.0
    %v1214 = vmax.f32 %v1209, 0.0
    %v1215 = vpack.c.bf16 %v1211, %v1211
    %v1216 = vpack.c.bf16 %v1212, %v1212
    %v1217 = vpack.c.bf16 %v1213, %v1213
    %v1218 = vpack.c.bf16 %v1214, %v1214
    %v1220 = vperm.slane %v347, 0
    %v1221 = vperm.slane %v347, 1
    %v1222 = vperm.slane %v347, 2
    %v1223 = vperm.slane %v347, 3
    %v1356 = vunpack.c.l.b16 %v219
    %v1357 = vunpack.c.h.b16 %v219
    %v1358 = vunpack.c.l.b16 %v220
    %v1359 = vunpack.c.h.b16 %v220
    %v1360 = vunpack.c.l.b16 %v221
    %v1361 = vunpack.c.h.b16 %v221
    %v1362 = vunpack.c.l.b16 %v222
    %v1363 = vunpack.c.h.b16 %v222
    %v1364 = vunpack.c.l.b16 %v223
    %v1365 = vunpack.c.h.b16 %v223
    %v1366 = vunpack.c.l.b16 %v224
    %v1367 = vunpack.c.h.b16 %v224
    %v1368 = vunpack.c.l.b16 %v225
    %v1369 = vunpack.c.h.b16 %v225
    %v1370 = vunpack.c.l.b16 %v226
    %v1371 = vunpack.c.h.b16 %v226
    %v1372 = vunpack.c.l.b16 %v227
    %v1373 = vunpack.c.h.b16 %v227
    %v1374 = vunpack.c.l.b16 %v228
    %v1375 = vunpack.c.h.b16 %v228
    %v1376 = vunpack.c.l.b16 %v229
    %v1377 = vunpack.c.h.b16 %v229
    %v1378 = vunpack.c.l.b16 %v230
    %v1379 = vunpack.c.h.b16 %v230
    %v1380 = vunpack.c.l.b16 %v231
    %v1381 = vunpack.c.h.b16 %v231
    %v1382 = vunpack.c.l.b16 %v232
    %v1383 = vunpack.c.h.b16 %v232
    %v1384 = vunpack.c.l.b16 %v233
    %v1385 = vunpack.c.h.b16 %v233
    %v1386 = vunpack.c.l.b16 %v234
    %v1387 = vunpack.c.h.b16 %v234
    %v1388 = vunpack.c.l.b16 %v235
    %v1389 = vunpack.c.h.b16 %v235
    %v1390 = vunpack.c.l.b16 %v236
    %v1391 = vunpack.c.h.b16 %v236
    %v1392 = vunpack.c.l.b16 %v237
    %v1393 = vunpack.c.h.b16 %v237
    %v1394 = vunpack.c.l.b16 %v238
    %v1395 = vunpack.c.h.b16 %v238
    %v1396 = vunpack.c.l.b16 %v239
    %v1397 = vunpack.c.h.b16 %v239
    %v1398 = vunpack.c.l.b16 %v240
    %v1399 = vunpack.c.h.b16 %v240
    %v1400 = vunpack.c.l.b16 %v241
    %v1401 = vunpack.c.h.b16 %v241
    %v1402 = vunpack.c.l.b16 %v242
    %v1403 = vunpack.c.h.b16 %v242
    %v1404 = vunpack.c.l.b16 %v243
    %v1405 = vunpack.c.h.b16 %v243
    %v1406 = vunpack.c.l.b16 %v244
    %v1407 = vunpack.c.h.b16 %v244
    %v1408 = vunpack.c.l.b16 %v245
    %v1409 = vunpack.c.h.b16 %v245
    %v1410 = vunpack.c.l.b16 %v246
    %v1411 = vunpack.c.h.b16 %v246
    %v1412 = vunpack.c.l.b16 %v247
    %v1413 = vunpack.c.h.b16 %v247
    %v1414 = vunpack.c.l.b16 %v248
    %v1415 = vunpack.c.h.b16 %v248
    %v1416 = vunpack.c.l.b16 %v249
    %v1417 = vunpack.c.h.b16 %v249
    %v1418 = vunpack.c.l.b16 %v250
    %v1419 = vunpack.c.h.b16 %v250
    %v1420 = vunpack.c.l.b16 %v251
    %v1421 = vunpack.c.h.b16 %v251
    %v1422 = vunpack.c.l.b16 %v252
    %v1423 = vunpack.c.h.b16 %v252
    %v1424 = vunpack.c.l.b16 %v253
    %v1425 = vunpack.c.h.b16 %v253
    %v1426 = vunpack.c.l.b16 %v254
    %v1427 = vunpack.c.h.b16 %v254
    %v1428 = vunpack.c.l.b16 %v255
    %v1429 = vunpack.c.h.b16 %v255
    %v1430 = vunpack.c.l.b16 %v256
    %v1431 = vunpack.c.h.b16 %v256
    %v1432 = vunpack.c.l.b16 %v257
    %v1433 = vunpack.c.h.b16 %v257
    %v1434 = vunpack.c.l.b16 %v258
    %v1435 = vunpack.c.h.b16 %v258
    %v1436 = vunpack.c.l.b16 %v259
    %v1437 = vunpack.c.h.b16 %v259
    %v1438 = vunpack.c.l.b16 %v260
    %v1439 = vunpack.c.h.b16 %v260
    %v1440 = vunpack.c.l.b16 %v261
    %v1441 = vunpack.c.h.b16 %v261
    %v1442 = vunpack.c.l.b16 %v262
    %v1443 = vunpack.c.h.b16 %v262
    %v1444 = vunpack.c.l.b16 %v263
    %v1445 = vunpack.c.h.b16 %v263
    %v1446 = vunpack.c.l.b16 %v264
    %v1447 = vunpack.c.h.b16 %v264
    %v1448 = vunpack.c.l.b16 %v265
    %v1449 = vunpack.c.h.b16 %v265
    %v1450 = vunpack.c.l.b16 %v266
    %v1451 = vunpack.c.h.b16 %v266
    %v1452 = vunpack.c.l.b16 %v267
    %v1453 = vunpack.c.h.b16 %v267
    %v1454 = vunpack.c.l.b16 %v268
    %v1455 = vunpack.c.h.b16 %v268
    %v1456 = vunpack.c.l.b16 %v269
    %v1457 = vunpack.c.h.b16 %v269
    %v1458 = vunpack.c.l.b16 %v270
    %v1459 = vunpack.c.h.b16 %v270
    %v1460 = vunpack.c.l.b16 %v271
    %v1461 = vunpack.c.h.b16 %v271
    %v1462 = vunpack.c.l.b16 %v272
    %v1463 = vunpack.c.h.b16 %v272
    %v1464 = vunpack.c.l.b16 %v273
    %v1465 = vunpack.c.h.b16 %v273
    %v1466 = vunpack.c.l.b16 %v274
    %v1467 = vunpack.c.h.b16 %v274
    %v1468 = vunpack.c.l.b16 %v275
    %v1469 = vunpack.c.h.b16 %v275
    %v1470 = vunpack.c.l.b16 %v276
    %v1471 = vunpack.c.h.b16 %v276
    %v1472 = vunpack.c.l.b16 %v277
    %v1473 = vunpack.c.h.b16 %v277
    %v1474 = vunpack.c.l.b16 %v278
    %v1475 = vunpack.c.h.b16 %v278
    %v1476 = vunpack.c.l.b16 %v279
    %v1477 = vunpack.c.h.b16 %v279
    %v1478 = vunpack.c.l.b16 %v280
    %v1479 = vunpack.c.h.b16 %v280
    %v1480 = vunpack.c.l.b16 %v281
    %v1481 = vunpack.c.h.b16 %v281
    %v1482 = vunpack.c.l.b16 %v282
    %v1483 = vunpack.c.h.b16 %v282
    %v1484 = vunpack.c.l.b16 %v283
    %v1485 = vunpack.c.h.b16 %v283
    %v1486 = vunpack.c.l.b16 %v284
    %v1487 = vunpack.c.h.b16 %v284
    %v1488 = vunpack.c.l.b16 %v285
    %v1489 = vunpack.c.h.b16 %v285
    %v1490 = vunpack.c.l.b16 %v286
    %v1491 = vunpack.c.h.b16 %v286
    %v1492 = vunpack.c.l.b16 %v287
    %v1493 = vunpack.c.h.b16 %v287
    %v1494 = vunpack.c.l.b16 %v288
    %v1495 = vunpack.c.h.b16 %v288
    %v1496 = vunpack.c.l.b16 %v289
    %v1497 = vunpack.c.h.b16 %v289
    %v1498 = vunpack.c.l.b16 %v290
    %v1499 = vunpack.c.h.b16 %v290
    %v1500 = vunpack.c.l.b16 %v291
    %v1501 = vunpack.c.h.b16 %v291
    %v1502 = vunpack.c.l.b16 %v292
    %v1503 = vunpack.c.h.b16 %v292
    %v1504 = vunpack.c.l.b16 %v293
    %v1505 = vunpack.c.h.b16 %v293
    %v1506 = vunpack.c.l.b16 %v294
    %v1507 = vunpack.c.h.b16 %v294
    %v1508 = vunpack.c.l.b16 %v295
    %v1509 = vunpack.c.h.b16 %v295
    %v1510 = vunpack.c.l.b16 %v296
    %v1511 = vunpack.c.h.b16 %v296
    %v1512 = vunpack.c.l.b16 %v297
    %v1513 = vunpack.c.h.b16 %v297
    %v1514 = vunpack.c.l.b16 %v298
    %v1515 = vunpack.c.h.b16 %v298
    %v1516 = vunpack.c.l.b16 %v299
    %v1517 = vunpack.c.h.b16 %v299
    %v1518 = vunpack.c.l.b16 %v300
    %v1519 = vunpack.c.h.b16 %v300
    %v1520 = vunpack.c.l.b16 %v301
    %v1521 = vunpack.c.h.b16 %v301
    %v1522 = vunpack.c.l.b16 %v302
    %v1523 = vunpack.c.h.b16 %v302
    %v1524 = vunpack.c.l.b16 %v303
    %v1525 = vunpack.c.h.b16 %v303
    %v1526 = vunpack.c.l.b16 %v304
    %v1527 = vunpack.c.h.b16 %v304
    %v1528 = vunpack.c.l.b16 %v305
    %v1529 = vunpack.c.h.b16 %v305
    %v1530 = vunpack.c.l.b16 %v306
    %v1531 = vunpack.c.h.b16 %v306
    %v1532 = vunpack.c.l.b16 %v307
    %v1533 = vunpack.c.h.b16 %v307
    %v1534 = vunpack.c.l.b16 %v308
    %v1535 = vunpack.c.h.b16 %v308
    %v1536 = vunpack.c.l.b16 %v309
    %v1537 = vunpack.c.h.b16 %v309
    %v1538 = vunpack.c.l.b16 %v310
    %v1539 = vunpack.c.h.b16 %v310
    %v1540 = vunpack.c.l.b16 %v311
    %v1541 = vunpack.c.h.b16 %v311
    %v1542 = vunpack.c.l.b16 %v312
    %v1543 = vunpack.c.h.b16 %v312
    %v1544 = vunpack.c.l.b16 %v313
    %v1545 = vunpack.c.h.b16 %v313
    %v1546 = vunpack.c.l.b16 %v314
    %v1547 = vunpack.c.h.b16 %v314
    %v1548 = vunpack.c.l.b16 %v315
    %v1549 = vunpack.c.h.b16 %v315
    %v1550 = vunpack.c.l.b16 %v316
    %v1551 = vunpack.c.h.b16 %v316
    %v1552 = vunpack.c.l.b16 %v317
    %v1553 = vunpack.c.h.b16 %v317
    %v1554 = vunpack.c.l.b16 %v318
    %v1555 = vunpack.c.h.b16 %v318
    %v1556 = vunpack.c.l.b16 %v319
    %v1557 = vunpack.c.h.b16 %v319
    %v1558 = vunpack.c.l.b16 %v320
    %v1559 = vunpack.c.h.b16 %v320
    %v1560 = vunpack.c.l.b16 %v321
    %v1561 = vunpack.c.h.b16 %v321
    %v1562 = vunpack.c.l.b16 %v322
    %v1563 = vunpack.c.h.b16 %v322
    %v1564 = vunpack.c.l.b16 %v323
    %v1565 = vunpack.c.h.b16 %v323
    %v1566 = vunpack.c.l.b16 %v324
    %v1567 = vunpack.c.h.b16 %v324
    %v1568 = vunpack.c.l.b16 %v325
    %v1569 = vunpack.c.h.b16 %v325
    %v1570 = vunpack.c.l.b16 %v326
    %v1571 = vunpack.c.h.b16 %v326
    %v1572 = vunpack.c.l.b16 %v327
    %v1573 = vunpack.c.h.b16 %v327
    %v1574 = vunpack.c.l.b16 %v328
    %v1575 = vunpack.c.h.b16 %v328
    %v1576 = vunpack.c.l.b16 %v329
    %v1577 = vunpack.c.h.b16 %v329
    %v1578 = vunpack.c.l.b16 %v330
    %v1579 = vunpack.c.h.b16 %v330
    %v1580 = vunpack.c.l.b16 %v331
    %v1581 = vunpack.c.h.b16 %v331
    %v1582 = vunpack.c.l.b16 %v332
    %v1583 = vunpack.c.h.b16 %v332
    %v1584 = vunpack.c.l.b16 %v333
    %v1585 = vunpack.c.h.b16 %v333
    %v1586 = vunpack.c.l.b16 %v334
    %v1587 = vunpack.c.h.b16 %v334
    %v1588 = vunpack.c.l.b16 %v335
    %v1589 = vunpack.c.h.b16 %v335
    %v1590 = vunpack.c.l.b16 %v336
    %v1591 = vunpack.c.h.b16 %v336
    %v1592 = vunpack.c.l.b16 %v337
    %v1593 = vunpack.c.h.b16 %v337
    %v1594 = vunpack.c.l.b16 %v338
    %v1595 = vunpack.c.h.b16 %v338
    %v1596 = vunpack.c.l.b16 %v339
    %v1597 = vunpack.c.h.b16 %v339
    %v1598 = vunpack.c.l.b16 %v340
    %v1599 = vunpack.c.h.b16 %v340
    %v1600 = vunpack.c.l.b16 %v341
    %v1601 = vunpack.c.h.b16 %v341
    %v1602 = vunpack.c.l.b16 %v342
    %v1603 = vunpack.c.h.b16 %v342
    %v1604 = vunpack.c.l.b16 %v343
    %v1605 = vunpack.c.h.b16 %v343
    %v1606 = vunpack.c.l.b16 %v344
    %v1607 = vunpack.c.h.b16 %v344
    %v1608 = vunpack.c.l.b16 %v345
    %v1609 = vunpack.c.h.b16 %v345
    %v1610 = vunpack.c.l.b16 %v346
    %v1611 = vunpack.c.h.b16 %v346
    %v1612 = vpack.c.b16 %v1360, %v1356
    %v1613 = vpack.c.b16 %v1361, %v1357
    %v1614 = vpack.c.b16 %v1362, %v1358
    %v1615 = vpack.c.b16 %v1363, %v1359
    %v1616 = vpack.c.b16 %v1368, %v1364
    %v1617 = vpack.c.b16 %v1369, %v1365
    %v1618 = vpack.c.b16 %v1370, %v1366
    %v1619 = vpack.c.b16 %v1371, %v1367
    %v1620 = vpack.c.b16 %v1376, %v1372
    %v1621 = vpack.c.b16 %v1377, %v1373
    %v1622 = vpack.c.b16 %v1378, %v1374
    %v1623 = vpack.c.b16 %v1379, %v1375
    %v1624 = vpack.c.b16 %v1384, %v1380
    %v1625 = vpack.c.b16 %v1385, %v1381
    %v1626 = vpack.c.b16 %v1386, %v1382
    %v1627 = vpack.c.b16 %v1387, %v1383
    %v1628 = vpack.c.b16 %v1392, %v1388
    %v1629 = vpack.c.b16 %v1393, %v1389
    %v1630 = vpack.c.b16 %v1394, %v1390
    %v1631 = vpack.c.b16 %v1395, %v1391
    %v1632 = vpack.c.b16 %v1400, %v1396
    %v1633 = vpack.c.b16 %v1401, %v1397
    %v1634 = vpack.c.b16 %v1402, %v1398
    %v1635 = vpack.c.b16 %v1403, %v1399
    %v1636 = vpack.c.b16 %v1408, %v1404
    %v1637 = vpack.c.b16 %v1409, %v1405
    %v1638 = vpack.c.b16 %v1410, %v1406
    %v1639 = vpack.c.b16 %v1411, %v1407
    %v1640 = vpack.c.b16 %v1416, %v1412
    %v1641 = vpack.c.b16 %v1417, %v1413
    %v1642 = vpack.c.b16 %v1418, %v1414
    %v1643 = vpack.c.b16 %v1419, %v1415
    %v1644 = vpack.c.b16 %v1424, %v1420
    %v1645 = vpack.c.b16 %v1425, %v1421
    %v1646 = vpack.c.b16 %v1426, %v1422
    %v1647 = vpack.c.b16 %v1427, %v1423
    %v1648 = vpack.c.b16 %v1432, %v1428
    %v1649 = vpack.c.b16 %v1433, %v1429
    %v1650 = vpack.c.b16 %v1434, %v1430
    %v1651 = vpack.c.b16 %v1435, %v1431
    %v1652 = vpack.c.b16 %v1440, %v1436
    %v1653 = vpack.c.b16 %v1441, %v1437
    %v1654 = vpack.c.b16 %v1442, %v1438
    %v1655 = vpack.c.b16 %v1443, %v1439
    %v1656 = vpack.c.b16 %v1448, %v1444
    %v1657 = vpack.c.b16 %v1449, %v1445
    %v1658 = vpack.c.b16 %v1450, %v1446
    %v1659 = vpack.c.b16 %v1451, %v1447
    %v1660 = vpack.c.b16 %v1456, %v1452
    %v1661 = vpack.c.b16 %v1457, %v1453
    %v1662 = vpack.c.b16 %v1458, %v1454
    %v1663 = vpack.c.b16 %v1459, %v1455
    %v1664 = vpack.c.b16 %v1464, %v1460
    %v1665 = vpack.c.b16 %v1465, %v1461
    %v1666 = vpack.c.b16 %v1466, %v1462
    %v1667 = vpack.c.b16 %v1467, %v1463
    %v1668 = vpack.c.b16 %v1472, %v1468
    %v1669 = vpack.c.b16 %v1473, %v1469
    %v1670 = vpack.c.b16 %v1474, %v1470
    %v1671 = vpack.c.b16 %v1475, %v1471
    %v1672 = vpack.c.b16 %v1480, %v1476
    %v1673 = vpack.c.b16 %v1481, %v1477
    %v1674 = vpack.c.b16 %v1482, %v1478
    %v1675 = vpack.c.b16 %v1483, %v1479
    %v1676 = vpack.c.b16 %v1488, %v1484
    %v1677 = vpack.c.b16 %v1489, %v1485
    %v1678 = vpack.c.b16 %v1490, %v1486
    %v1679 = vpack.c.b16 %v1491, %v1487
    %v1680 = vpack.c.b16 %v1496, %v1492
    %v1681 = vpack.c.b16 %v1497, %v1493
    %v1682 = vpack.c.b16 %v1498, %v1494
    %v1683 = vpack.c.b16 %v1499, %v1495
    %v1684 = vpack.c.b16 %v1504, %v1500
    %v1685 = vpack.c.b16 %v1505, %v1501
    %v1686 = vpack.c.b16 %v1506, %v1502
    %v1687 = vpack.c.b16 %v1507, %v1503
    %v1688 = vpack.c.b16 %v1512, %v1508
    %v1689 = vpack.c.b16 %v1513, %v1509
    %v1690 = vpack.c.b16 %v1514, %v1510
    %v1691 = vpack.c.b16 %v1515, %v1511
    %v1692 = vpack.c.b16 %v1520, %v1516
    %v1693 = vpack.c.b16 %v1521, %v1517
    %v1694 = vpack.c.b16 %v1522, %v1518
    %v1695 = vpack.c.b16 %v1523, %v1519
    %v1696 = vpack.c.b16 %v1528, %v1524
    %v1697 = vpack.c.b16 %v1529, %v1525
    %v1698 = vpack.c.b16 %v1530, %v1526
    %v1699 = vpack.c.b16 %v1531, %v1527
    %v1700 = vpack.c.b16 %v1536, %v1532
    %v1701 = vpack.c.b16 %v1537, %v1533
    %v1702 = vpack.c.b16 %v1538, %v1534
    %v1703 = vpack.c.b16 %v1539, %v1535
    %v1704 = vpack.c.b16 %v1544, %v1540
    %v1705 = vpack.c.b16 %v1545, %v1541
    %v1706 = vpack.c.b16 %v1546, %v1542
    %v1707 = vpack.c.b16 %v1547, %v1543
    %v1708 = vpack.c.b16 %v1552, %v1548
    %v1709 = vpack.c.b16 %v1553, %v1549
    %v1710 = vpack.c.b16 %v1554, %v1550
    %v1711 = vpack.c.b16 %v1555, %v1551
    %v1712 = vpack.c.b16 %v1560, %v1556
    %v1713 = vpack.c.b16 %v1561, %v1557
    %v1714 = vpack.c.b16 %v1562, %v1558
    %v1715 = vpack.c.b16 %v1563, %v1559
    %v1716 = vpack.c.b16 %v1568, %v1564
    %v1717 = vpack.c.b16 %v1569, %v1565
    %v1718 = vpack.c.b16 %v1570, %v1566
    %v1719 = vpack.c.b16 %v1571, %v1567
    %v1720 = vpack.c.b16 %v1576, %v1572
    %v1721 = vpack.c.b16 %v1577, %v1573
    %v1722 = vpack.c.b16 %v1578, %v1574
    %v1723 = vpack.c.b16 %v1579, %v1575
    %v1724 = vpack.c.b16 %v1584, %v1580
    %v1725 = vpack.c.b16 %v1585, %v1581
    %v1726 = vpack.c.b16 %v1586, %v1582
    %v1727 = vpack.c.b16 %v1587, %v1583
    %v1728 = vpack.c.b16 %v1592, %v1588
    %v1729 = vpack.c.b16 %v1593, %v1589
    %v1730 = vpack.c.b16 %v1594, %v1590
    %v1731 = vpack.c.b16 %v1595, %v1591
    %v1732 = vpack.c.b16 %v1600, %v1596
    %v1733 = vpack.c.b16 %v1601, %v1597
    %v1734 = vpack.c.b16 %v1602, %v1598
    %v1735 = vpack.c.b16 %v1603, %v1599
    %v1736 = vpack.c.b16 %v1608, %v1604
    %v1737 = vpack.c.b16 %v1609, %v1605
    %v1738 = vpack.c.b16 %v1610, %v1606
    %v1739 = vpack.c.b16 %v1611, %v1607
    %1868 = vmatpush.bf16.msra.mxu0 %v1640
    %1869 = vmatpush.bf16.msra.mxu0 %v1636
    %1870 = vmatpush.bf16.msra.mxu0 %v1632
    %1871 = vmatpush.bf16.msra.mxu0 %v1628
    %1872 = vmatpush.bf16.msra.mxu0 %v1624
    %1873 = vmatpush.bf16.msra.mxu0 %v1620
    %1874 = vmatpush.bf16.msra.mxu0 %v1616
    %1875 = vmatpush.bf16.msra.mxu0 %v1612
    %1876 = vmatmul.bf16.gmra.mxu0 %v1215
    %v1877 = vpop.f32.mrf.mxu0
    %v1878 = vadd.f32 %v1220, %v1877
    %v1879 = vpop.f32.mrf.mxu0
    %1880 = vdwg.mxu0
    %1881 = vmatpush.bf16.msra.mxu0 %v1672
    %1882 = vmatpush.bf16.msra.mxu0 %v1668
    %1883 = vmatpush.bf16.msra.mxu0 %v1664
    %1884 = vmatpush.bf16.msra.mxu0 %v1660
    %1885 = vmatpush.bf16.msra.mxu0 %v1656
    %1886 = vmatpush.bf16.msra.mxu0 %v1652
    %1887 = vmatpush.bf16.msra.mxu0 %v1648
    %1888 = vmatpush.bf16.msra.mxu0 %v1644
    %1889 = vmatmul.bf16.gmra.mxu0 %v1216
    %v1890 = vpop.f32.mrf.mxu0
    %v1891 = vadd.f32 %v1878, %v1890
    %v1892 = vpop.f32.mrf.mxu0
    %1893 = vdwg.mxu0
    %1894 = vmatpush.bf16.msra.mxu0 %v1704
    %1895 = vmatpush.bf16.msra.mxu0 %v1700
    %1896 = vmatpush.bf16.msra.mxu0 %v1696
    %1897 = vmatpush.bf16.msra.mxu0 %v1692
    %1898 = vmatpush.bf16.msra.mxu0 %v1688
    %1899 = vmatpush.bf16.msra.mxu0 %v1684
    %1900 = vmatpush.bf16.msra.mxu0 %v1680
    %1901 = vmatpush.bf16.msra.mxu0 %v1676
    %1902 = vmatmul.bf16.gmra.mxu0 %v1217
    %v1903 = vpop.f32.mrf.mxu0
    %v1904 = vadd.f32 %v1891, %v1903
    %v1905 = vpop.f32.mrf.mxu0
    %1906 = vdwg.mxu0
    %1907 = vmatpush.bf16.msra.mxu0 %v1736
    %1908 = vmatpush.bf16.msra.mxu0 %v1732
    %1909 = vmatpush.bf16.msra.mxu0 %v1728
    %1910 = vmatpush.bf16.msra.mxu0 %v1724
    %1911 = vmatpush.bf16.msra.mxu0 %v1720
    %1912 = vmatpush.bf16.msra.mxu0 %v1716
    %1913 = vmatpush.bf16.msra.mxu0 %v1712
    %1914 = vmatpush.bf16.msra.mxu0 %v1708
    %1915 = vmatmul.bf16.gmra.mxu0 %v1218
    %v1916 = vpop.f32.mrf.mxu0
    %v1917 = vadd.f32 %v1904, %v1916
    %v1918 = vpop.f32.mrf.mxu0
    %1919 = vdwg.mxu0
    %1920 = vmatpush.bf16.msra.mxu0 %v1641
    %1921 = vmatpush.bf16.msra.mxu0 %v1637
    %1922 = vmatpush.bf16.msra.mxu0 %v1633
    %1923 = vmatpush.bf16.msra.mxu0 %v1629
    %1924 = vmatpush.bf16.msra.mxu0 %v1625
    %1925 = vmatpush.bf16.msra.mxu0 %v1621
    %1926 = vmatpush.bf16.msra.mxu0 %v1617
    %1927 = vmatpush.bf16.msra.mxu0 %v1613
    %1928 = vmatmul.bf16.gmra.mxu0 %v1215
    %v1929 = vpop.f32.mrf.mxu0
    %v1930 = vadd.f32 %v1221, %v1929
    %v1931 = vpop.f32.mrf.mxu0
    %1932 = vdwg.mxu0
    %1933 = vmatpush.bf16.msra.mxu0 %v1673
    %1934 = vmatpush.bf16.msra.mxu0 %v1669
    %1935 = vmatpush.bf16.msra.mxu0 %v1665
    %1936 = vmatpush.bf16.msra.mxu0 %v1661
    %1937 = vmatpush.bf16.msra.mxu0 %v1657
    %1938 = vmatpush.bf16.msra.mxu0 %v1653
    %1939 = vmatpush.bf16.msra.mxu0 %v1649
    %1940 = vmatpush.bf16.msra.mxu0 %v1645
    %1941 = vmatmul.bf16.gmra.mxu0 %v1216
    %v1942 = vpop.f32.mrf.mxu0
    %v1943 = vadd.f32 %v1930, %v1942
    %v1944 = vpop.f32.mrf.mxu0
    %1945 = vdwg.mxu0
    %1946 = vmatpush.bf16.msra.mxu0 %v1705
    %1947 = vmatpush.bf16.msra.mxu0 %v1701
    %1948 = vmatpush.bf16.msra.mxu0 %v1697
    %1949 = vmatpush.bf16.msra.mxu0 %v1693
    %1950 = vmatpush.bf16.msra.mxu0 %v1689
    %1951 = vmatpush.bf16.msra.mxu0 %v1685
    %1952 = vmatpush.bf16.msra.mxu0 %v1681
    %1953 = vmatpush.bf16.msra.mxu0 %v1677
    %1954 = vmatmul.bf16.gmra.mxu0 %v1217
    %v1955 = vpop.f32.mrf.mxu0
    %v1956 = vadd.f32 %v1943, %v1955
    %v1957 = vpop.f32.mrf.mxu0
    %1958 = vdwg.mxu0
    %1959 = vmatpush.bf16.msra.mxu0 %v1737
    %1960 = vmatpush.bf16.msra.mxu0 %v1733
    %1961 = vmatpush.bf16.msra.mxu0 %v1729
    %1962 = vmatpush.bf16.msra.mxu0 %v1725
    %1963 = vmatpush.bf16.msra.mxu0 %v1721
    %1964 = vmatpush.bf16.msra.mxu0 %v1717
    %1965 = vmatpush.bf16.msra.mxu0 %v1713
    %1966 = vmatpush.bf16.msra.mxu0 %v1709
    %1967 = vmatmul.bf16.gmra.mxu0 %v1218
    %v1968 = vpop.f32.mrf.mxu0
    %v1969 = vadd.f32 %v1956, %v1968
    %v1970 = vpop.f32.mrf.mxu0
    %1971 = vdwg.mxu0
    %1972 = vmatpush.bf16.msra.mxu0 %v1642
    %1973 = vmatpush.bf16.msra.mxu0 %v1638
    %1974 = vmatpush.bf16.msra.mxu0 %v1634
    %1975 = vmatpush.bf16.msra.mxu0 %v1630
    %1976 = vmatpush.bf16.msra.mxu0 %v1626
    %1977 = vmatpush.bf16.msra.mxu0 %v1622
    %1978 = vmatpush.bf16.msra.mxu0 %v1618
    %1979 = vmatpush.bf16.msra.mxu0 %v1614
    %1980 = vmatmul.bf16.gmra.mxu0 %v1215
    %v1981 = vpop.f32.mrf.mxu0
    %v1982 = vadd.f32 %v1222, %v1981
    %v1983 = vpop.f32.mrf.mxu0
    %1984 = vdwg.mxu0
    %1985 = vmatpush.bf16.msra.mxu0 %v1674
    %1986 = vmatpush.bf16.msra.mxu0 %v1670
    %1987 = vmatpush.bf16.msra.mxu0 %v1666
    %1988 = vmatpush.bf16.msra.mxu0 %v1662
    %1989 = vmatpush.bf16.msra.mxu0 %v1658
    %1990 = vmatpush.bf16.msra.mxu0 %v1654
    %1991 = vmatpush.bf16.msra.mxu0 %v1650
    %1992 = vmatpush.bf16.msra.mxu0 %v1646
    %1993 = vmatmul.bf16.gmra.mxu0 %v1216
    %v1994 = vpop.f32.mrf.mxu0
    %v1995 = vadd.f32 %v1982, %v1994
    %v1996 = vpop.f32.mrf.mxu0
    %1997 = vdwg.mxu0
    %1998 = vmatpush.bf16.msra.mxu0 %v1706
    %1999 = vmatpush.bf16.msra.mxu0 %v1702
    %2000 = vmatpush.bf16.msra.mxu0 %v1698
    %2001 = vmatpush.bf16.msra.mxu0 %v1694
    %2002 = vmatpush.bf16.msra.mxu0 %v1690
    %2003 = vmatpush.bf16.msra.mxu0 %v1686
    %2004 = vmatpush.bf16.msra.mxu0 %v1682
    %2005 = vmatpush.bf16.msra.mxu0 %v1678
    %2006 = vmatmul.bf16.gmra.mxu0 %v1217
    %v2007 = vpop.f32.mrf.mxu0
    %v2008 = vadd.f32 %v1995, %v2007
    %v2009 = vpop.f32.mrf.mxu0
    %2010 = vdwg.mxu0
    %2011 = vmatpush.bf16.msra.mxu0 %v1738
    %2012 = vmatpush.bf16.msra.mxu0 %v1734
    %2013 = vmatpush.bf16.msra.mxu0 %v1730
    %2014 = vmatpush.bf16.msra.mxu0 %v1726
    %2015 = vmatpush.bf16.msra.mxu0 %v1722
    %2016 = vmatpush.bf16.msra.mxu0 %v1718
    %2017 = vmatpush.bf16.msra.mxu0 %v1714
    %2018 = vmatpush.bf16.msra.mxu0 %v1710
    %2019 = vmatmul.bf16.gmra.mxu0 %v1218
    %v2020 = vpop.f32.mrf.mxu0
    %v2021 = vadd.f32 %v2008, %v2020
    %v2022 = vpop.f32.mrf.mxu0
    %2023 = vdwg.mxu0
    %2024 = vmatpush.bf16.msra.mxu0 %v1643
    %2025 = vmatpush.bf16.msra.mxu0 %v1639
    %2026 = vmatpush.bf16.msra.mxu0 %v1635
    %2027 = vmatpush.bf16.msra.mxu0 %v1631
    %2028 = vmatpush.bf16.msra.mxu0 %v1627
    %2029 = vmatpush.bf16.msra.mxu0 %v1623
    %2030 = vmatpush.bf16.msra.mxu0 %v1619
    %2031 = vmatpush.bf16.msra.mxu0 %v1615
    %2032 = vmatmul.bf16.gmra.mxu0 %v1215
    %v2033 = vpop.f32.mrf.mxu0
    %v2034 = vadd.f32 %v1223, %v2033
    %v2035 = vpop.f32.mrf.mxu0
    %2036 = vdwg.mxu0
    %2037 = vmatpush.bf16.msra.mxu0 %v1675
    %2038 = vmatpush.bf16.msra.mxu0 %v1671
    %2039 = vmatpush.bf16.msra.mxu0 %v1667
    %2040 = vmatpush.bf16.msra.mxu0 %v1663
    %2041 = vmatpush.bf16.msra.mxu0 %v1659
    %2042 = vmatpush.bf16.msra.mxu0 %v1655
    %2043 = vmatpush.bf16.msra.mxu0 %v1651
    %2044 = vmatpush.bf16.msra.mxu0 %v1647
    %2045 = vmatmul.bf16.gmra.mxu0 %v1216
    %v2046 = vpop.f32.mrf.mxu0
    %v2047 = vadd.f32 %v2034, %v2046
    %v2048 = vpop.f32.mrf.mxu0
    %2049 = vdwg.mxu0
    %2050 = vmatpush.bf16.msra.mxu0 %v1707
    %2051 = vmatpush.bf16.msra.mxu0 %v1703
    %2052 = vmatpush.bf16.msra.mxu0 %v1699
    %2053 = vmatpush.bf16.msra.mxu0 %v1695
    %2054 = vmatpush.bf16.msra.mxu0 %v1691
    %2055 = vmatpush.bf16.msra.mxu0 %v1687
    %2056 = vmatpush.bf16.msra.mxu0 %v1683
    %2057 = vmatpush.bf16.msra.mxu0 %v1679
    %2058 = vmatmul.bf16.gmra.mxu0 %v1217
    %v2059 = vpop.f32.mrf.mxu0
    %v2060 = vadd.f32 %v2047, %v2059
    %v2061 = vpop.f32.mrf.mxu0
    %2062 = vdwg.mxu0
    %2063 = vmatpush.bf16.msra.mxu0 %v1739
    %2064 = vmatpush.bf16.msra.mxu0 %v1735
    %2065 = vmatpush.bf16.msra.mxu0 %v1731
    %2066 = vmatpush.bf16.msra.mxu0 %v1727
    %2067 = vmatpush.bf16.msra.mxu0 %v1723
    %2068 = vmatpush.bf16.msra.mxu0 %v1719
    %2069 = vmatpush.bf16.msra.mxu0 %v1715
    %2070 = vmatpush.bf16.msra.mxu0 %v1711
    %2071 = vmatmul.bf16.gmra.mxu0 %v1218
    %v2072 = vpop.f32.mrf.mxu0
    %v2073 = vadd.f32 %v2060, %v2072
    %v2074 = vpop.f32.mrf.mxu0
    %2075 = vdwg.mxu0
    %v2076 = vmax.f32 %v1917, 0.0
    %v2077 = vmax.f32 %v1969, 0.0
    %v2078 = vmax.f32 %v2021, 0.0
    %v2079 = vmax.f32 %v2073, 0.0
    %v2080 = vpack.c.bf16 %v2076, %v2076
    %v2081 = vpack.c.bf16 %v2077, %v2077
    %v2082 = vpack.c.bf16 %v2078, %v2078
    %v2083 = vpack.c.bf16 %v2079, %v2079
    %v2086 = vperm.slane %v860, 0
    %v2087 = vperm.slane %v860, 1
    %v2088 = vperm.slane %v860, 2
    %v2089 = vperm.slane %v860, 3
    %v2090 = vperm.slane %v860, 4
    %v2091 = vperm.slane %v860, 5
    %v2092 = vperm.slane %v860, 6
    %v2093 = vperm.slane %v860, 7
    %v2094 = vperm.slane %v861, 0
    %v2095 = vperm.slane %v861, 1
    %v2096 = vperm.slane %v861, 2
    %v2097 = vperm.slane %v861, 3
    %v2098 = vperm.slane %v861, 4
    %v2099 = vperm.slane %v861, 5
    %v2100 = vperm.slane %v861, 6
    %v2101 = vperm.slane %v861, 7
    %v2630 = vunpack.c.l.b16 %v348
    %v2631 = vunpack.c.h.b16 %v348
    %v2632 = vunpack.c.l.b16 %v349
    %v2633 = vunpack.c.h.b16 %v349
    %v2634 = vunpack.c.l.b16 %v350
    %v2635 = vunpack.c.h.b16 %v350
    %v2636 = vunpack.c.l.b16 %v351
    %v2637 = vunpack.c.h.b16 %v351
    %v2638 = vunpack.c.l.b16 %v352
    %v2639 = vunpack.c.h.b16 %v352
    %v2640 = vunpack.c.l.b16 %v353
    %v2641 = vunpack.c.h.b16 %v353
    %v2642 = vunpack.c.l.b16 %v354
    %v2643 = vunpack.c.h.b16 %v354
    %v2644 = vunpack.c.l.b16 %v355
    %v2645 = vunpack.c.h.b16 %v355
    %v2646 = vunpack.c.l.b16 %v356
    %v2647 = vunpack.c.h.b16 %v356
    %v2648 = vunpack.c.l.b16 %v357
    %v2649 = vunpack.c.h.b16 %v357
    %v2650 = vunpack.c.l.b16 %v358
    %v2651 = vunpack.c.h.b16 %v358
    %v2652 = vunpack.c.l.b16 %v359
    %v2653 = vunpack.c.h.b16 %v359
    %v2654 = vunpack.c.l.b16 %v360
    %v2655 = vunpack.c.h.b16 %v360
    %v2656 = vunpack.c.l.b16 %v361
    %v2657 = vunpack.c.h.b16 %v361
    %v2658 = vunpack.c.l.b16 %v362
    %v2659 = vunpack.c.h.b16 %v362
    %v2660 = vunpack.c.l.b16 %v363
    %v2661 = vunpack.c.h.b16 %v363
    %v2662 = vunpack.c.l.b16 %v364
    %v2663 = vunpack.c.h.b16 %v364
    %v2664 = vunpack.c.l.b16 %v365
    %v2665 = vunpack.c.h.b16 %v365
    %v2666 = vunpack.c.l.b16 %v366
    %v2667 = vunpack.c.h.b16 %v366
    %v2668 = vunpack.c.l.b16 %v367
    %v2669 = vunpack.c.h.b16 %v367
    %v2670 = vunpack.c.l.b16 %v368
    %v2671 = vunpack.c.h.b16 %v368
    %v2672 = vunpack.c.l.b16 %v369
    %v2673 = vunpack.c.h.b16 %v369
    %v2674 = vunpack.c.l.b16 %v370
    %v2675 = vunpack.c.h.b16 %v370
    %v2676 = vunpack.c.l.b16 %v371
    %v2677 = vunpack.c.h.b16 %v371
    %v2678 = vunpack.c.l.b16 %v372
    %v2679 = vunpack.c.h.b16 %v372
    %v2680 = vunpack.c.l.b16 %v373
    %v2681 = vunpack.c.h.b16 %v373
    %v2682 = vunpack.c.l.b16 %v374
    %v2683 = vunpack.c.h.b16 %v374
    %v2684 = vunpack.c.l.b16 %v375
    %v2685 = vunpack.c.h.b16 %v375
    %v2686 = vunpack.c.l.b16 %v376
    %v2687 = vunpack.c.h.b16 %v376
    %v2688 = vunpack.c.l.b16 %v377
    %v2689 = vunpack.c.h.b16 %v377
    %v2690 = vunpack.c.l.b16 %v378
    %v2691 = vunpack.c.h.b16 %v378
    %v2692 = vunpack.c.l.b16 %v379
    %v2693 = vunpack.c.h.b16 %v379
    %v2694 = vunpack.c.l.b16 %v380
    %v2695 = vunpack.c.h.b16 %v380
    %v2696 = vunpack.c.l.b16 %v381
    %v2697 = vunpack.c.h.b16 %v381
    %v2698 = vunpack.c.l.b16 %v382
    %v2699 = vunpack.c.h.b16 %v382
    %v2700 = vunpack.c.l.b16 %v383
    %v2701 = vunpack.c.h.b16 %v383
    %v2702 = vunpack.c.l.b16 %v384
    %v2703 = vunpack.c.h.b16 %v384
    %v2704 = vunpack.c.l.b16 %v385
    %v2705 = vunpack.c.h.b16 %v385
    %v2706 = vunpack.c.l.b16 %v386
    %v2707 = vunpack.c.h.b16 %v386
    %v2708 = vunpack.c.l.b16 %v387
    %v2709 = vunpack.c.h.b16 %v387
    %v2710 = vunpack.c.l.b16 %v388
    %v2711 = vunpack.c.h.b16 %v388
    %v2712 = vunpack.c.l.b16 %v389
    %v2713 = vunpack.c.h.b16 %v389
    %v2714 = vunpack.c.l.b16 %v390
    %v2715 = vunpack.c.h.b16 %v390
    %v2716 = vunpack.c.l.b16 %v391
    %v2717 = vunpack.c.h.b16 %v391
    %v2718 = vunpack.c.l.b16 %v392
    %v2719 = vunpack.c.h.b16 %v392
    %v2720 = vunpack.c.l.b16 %v393
    %v2721 = vunpack.c.h.b16 %v393
    %v2722 = vunpack.c.l.b16 %v394
    %v2723 = vunpack.c.h.b16 %v394
    %v2724 = vunpack.c.l.b16 %v395
    %v2725 = vunpack.c.h.b16 %v395
    %v2726 = vunpack.c.l.b16 %v396
    %v2727 = vunpack.c.h.b16 %v396
    %v2728 = vunpack.c.l.b16 %v397
    %v2729 = vunpack.c.h.b16 %v397
    %v2730 = vunpack.c.l.b16 %v398
    %v2731 = vunpack.c.h.b16 %v398
    %v2732 = vunpack.c.l.b16 %v399
    %v2733 = vunpack.c.h.b16 %v399
    %v2734 = vunpack.c.l.b16 %v400
    %v2735 = vunpack.c.h.b16 %v400
    %v2736 = vunpack.c.l.b16 %v401
    %v2737 = vunpack.c.h.b16 %v401
    %v2738 = vunpack.c.l.b16 %v402
    %v2739 = vunpack.c.h.b16 %v402
    %v2740 = vunpack.c.l.b16 %v403
    %v2741 = vunpack.c.h.b16 %v403
    %v2742 = vunpack.c.l.b16 %v404
    %v2743 = vunpack.c.h.b16 %v404
    %v2744 = vunpack.c.l.b16 %v405
    %v2745 = vunpack.c.h.b16 %v405
    %v2746 = vunpack.c.l.b16 %v406
    %v2747 = vunpack.c.h.b16 %v406
    %v2748 = vunpack.c.l.b16 %v407
    %v2749 = vunpack.c.h.b16 %v407
    %v2750 = vunpack.c.l.b16 %v408
    %v2751 = vunpack.c.h.b16 %v408
    %v2752 = vunpack.c.l.b16 %v409
    %v2753 = vunpack.c.h.b16 %v409
    %v2754 = vunpack.c.l.b16 %v410
    %v2755 = vunpack.c.h.b16 %v410
    %v2756 = vunpack.c.l.b16 %v411
    %v2757 = vunpack.c.h.b16 %v411
    %v2758 = vunpack.c.l.b16 %v412
    %v2759 = vunpack.c.h.b16 %v412
    %v2760 = vunpack.c.l.b16 %v413
    %v2761 = vunpack.c.h.b16 %v413
    %v2762 = vunpack.c.l.b16 %v414
    %v2763 = vunpack.c.h.b16 %v414
    %v2764 = vunpack.c.l.b16 %v415
    %v2765 = vunpack.c.h.b16 %v415
    %v2766 = vunpack.c.l.b16 %v416
    %v2767 = vunpack.c.h.b16 %v416
    %v2768 = vunpack.c.l.b16 %v417
    %v2769 = vunpack.c.h.b16 %v417
    %v2770 = vunpack.c.l.b16 %v418
    %v2771 = vunpack.c.h.b16 %v418
    %v2772 = vunpack.c.l.b16 %v419
    %v2773 = vunpack.c.h.b16 %v419
    %v2774 = vunpack.c.l.b16 %v420
    %v2775 = vunpack.c.h.b16 %v420
    %v2776 = vunpack.c.l.b16 %v421
    %v2777 = vunpack.c.h.b16 %v421
    %v2778 = vunpack.c.l.b16 %v422
    %v2779 = vunpack.c.h.b16 %v422
    %v2780 = vunpack.c.l.b16 %v423
    %v2781 = vunpack.c.h.b16 %v423
    %v2782 = vunpack.c.l.b16 %v424
    %v2783 = vunpack.c.h.b16 %v424
    %v2784 = vunpack.c.l.b16 %v425
    %v2785 = vunpack.c.h.b16 %v425
    %v2786 = vunpack.c.l.b16 %v426
    %v2787 = vunpack.c.h.b16 %v426
    %v2788 = vunpack.c.l.b16 %v427
    %v2789 = vunpack.c.h.b16 %v427
    %v2790 = vunpack.c.l.b16 %v428
    %v2791 = vunpack.c.h.b16 %v428
    %v2792 = vunpack.c.l.b16 %v429
    %v2793 = vunpack.c.h.b16 %v429
    %v2794 = vunpack.c.l.b16 %v430
    %v2795 = vunpack.c.h.b16 %v430
    %v2796 = vunpack.c.l.b16 %v431
    %v2797 = vunpack.c.h.b16 %v431
    %v2798 = vunpack.c.l.b16 %v432
    %v2799 = vunpack.c.h.b16 %v432
    %v2800 = vunpack.c.l.b16 %v433
    %v2801 = vunpack.c.h.b16 %v433
    %v2802 = vunpack.c.l.b16 %v434
    %v2803 = vunpack.c.h.b16 %v434
    %v2804 = vunpack.c.l.b16 %v435
    %v2805 = vunpack.c.h.b16 %v435
    %v2806 = vunpack.c.l.b16 %v436
    %v2807 = vunpack.c.h.b16 %v436
    %v2808 = vunpack.c.l.b16 %v437
    %v2809 = vunpack.c.h.b16 %v437
    %v2810 = vunpack.c.l.b16 %v438
    %v2811 = vunpack.c.h.b16 %v438
    %v2812 = vunpack.c.l.b16 %v439
    %v2813 = vunpack.c.h.b16 %v439
    %v2814 = vunpack.c.l.b16 %v440
    %v2815 = vunpack.c.h.b16 %v440
    %v2816 = vunpack.c.l.b16 %v441
    %v2817 = vunpack.c.h.b16 %v441
    %v2818 = vunpack.c.l.b16 %v442
    %v2819 = vunpack.c.h.b16 %v442
    %v2820 = vunpack.c.l.b16 %v443
    %v2821 = vunpack.c.h.b16 %v443
    %v2822 = vunpack.c.l.b16 %v444
    %v2823 = vunpack.c.h.b16 %v444
    %v2824 = vunpack.c.l.b16 %v445
    %v2825 = vunpack.c.h.b16 %v445
    %v2826 = vunpack.c.l.b16 %v446
    %v2827 = vunpack.c.h.b16 %v446
    %v2828 = vunpack.c.l.b16 %v447
    %v2829 = vunpack.c.h.b16 %v447
    %v2830 = vunpack.c.l.b16 %v448
    %v2831 = vunpack.c.h.b16 %v448
    %v2832 = vunpack.c.l.b16 %v449
    %v2833 = vunpack.c.h.b16 %v449
    %v2834 = vunpack.c.l.b16 %v450
    %v2835 = vunpack.c.h.b16 %v450
    %v2836 = vunpack.c.l.b16 %v451
    %v2837 = vunpack.c.h.b16 %v451
    %v2838 = vunpack.c.l.b16 %v452
    %v2839 = vunpack.c.h.b16 %v452
    %v2840 = vunpack.c.l.b16 %v453
    %v2841 = vunpack.c.h.b16 %v453
    %v2842 = vunpack.c.l.b16 %v454
    %v2843 = vunpack.c.h.b16 %v454
    %v2844 = vunpack.c.l.b16 %v455
    %v2845 = vunpack.c.h.b16 %v455
    %v2846 = vunpack.c.l.b16 %v456
    %v2847 = vunpack.c.h.b16 %v456
    %v2848 = vunpack.c.l.b16 %v457
    %v2849 = vunpack.c.h.b16 %v457
    %v2850 = vunpack.c.l.b16 %v458
    %v2851 = vunpack.c.h.b16 %v458
    %v2852 = vunpack.c.l.b16 %v459
    %v2853 = vunpack.c.h.b16 %v459
    %v2854 = vunpack.c.l.b16 %v460
    %v2855 = vunpack.c.h.b16 %v460
    %v2856 = vunpack.c.l.b16 %v461
    %v2857 = vunpack.c.h.b16 %v461
    %v2858 = vunpack.c.l.b16 %v462
    %v2859 = vunpack.c.h.b16 %v462
    %v2860 = vunpack.c.l.b16 %v463
    %v2861 = vunpack.c.h.b16 %v463
    %v2862 = vunpack.c.l.b16 %v464
    %v2863 = vunpack.c.h.b16 %v464
    %v2864 = vunpack.c.l.b16 %v465
    %v2865 = vunpack.c.h.b16 %v465
    %v2866 = vunpack.c.l.b16 %v466
    %v2867 = vunpack.c.h.b16 %v466
    %v2868 = vunpack.c.l.b16 %v467
    %v2869 = vunpack.c.h.b16 %v467
    %v2870 = vunpack.c.l.b16 %v468
    %v2871 = vunpack.c.h.b16 %v468
    %v2872 = vunpack.c.l.b16 %v469
    %v2873 = vunpack.c.h.b16 %v469
    %v2874 = vunpack.c.l.b16 %v470
    %v2875 = vunpack.c.h.b16 %v470
    %v2876 = vunpack.c.l.b16 %v471
    %v2877 = vunpack.c.h.b16 %v471
    %v2878 = vunpack.c.l.b16 %v472
    %v2879 = vunpack.c.h.b16 %v472
    %v2880 = vunpack.c.l.b16 %v473
    %v2881 = vunpack.c.h.b16 %v473
    %v2882 = vunpack.c.l.b16 %v474
    %v2883 = vunpack.c.h.b16 %v474
    %v2884 = vunpack.c.l.b16 %v475
    %v2885 = vunpack.c.h.b16 %v475
    %v2886 = vunpack.c.l.b16 %v476
    %v2887 = vunpack.c.h.b16 %v476
    %v2888 = vunpack.c.l.b16 %v477
    %v2889 = vunpack.c.h.b16 %v477
    %v2890 = vunpack.c.l.b16 %v478
    %v2891 = vunpack.c.h.b16 %v478
    %v2892 = vunpack.c.l.b16 %v479
    %v2893 = vunpack.c.h.b16 %v479
    %v2894 = vunpack.c.l.b16 %v480
    %v2895 = vunpack.c.h.b16 %v480
    %v2896 = vunpack.c.l.b16 %v481
    %v2897 = vunpack.c.h.b16 %v481
    %v2898 = vunpack.c.l.b16 %v482
    %v2899 = vunpack.c.h.b16 %v482
    %v2900 = vunpack.c.l.b16 %v483
    %v2901 = vunpack.c.h.b16 %v483
    %v2902 = vunpack.c.l.b16 %v484
    %v2903 = vunpack.c.h.b16 %v484
    %v2904 = vunpack.c.l.b16 %v485
    %v2905 = vunpack.c.h.b16 %v485
    %v2906 = vunpack.c.l.b16 %v486
    %v2907 = vunpack.c.h.b16 %v486
    %v2908 = vunpack.c.l.b16 %v487
    %v2909 = vunpack.c.h.b16 %v487
    %v2910 = vunpack.c.l.b16 %v488
    %v2911 = vunpack.c.h.b16 %v488
    %v2912 = vunpack.c.l.b16 %v489
    %v2913 = vunpack.c.h.b16 %v489
    %v2914 = vunpack.c.l.b16 %v490
    %v2915 = vunpack.c.h.b16 %v490
    %v2916 = vunpack.c.l.b16 %v491
    %v2917 = vunpack.c.h.b16 %v491
    %v2918 = vunpack.c.l.b16 %v492
    %v2919 = vunpack.c.h.b16 %v492
    %v2920 = vunpack.c.l.b16 %v493
    %v2921 = vunpack.c.h.b16 %v493
    %v2922 = vunpack.c.l.b16 %v494
    %v2923 = vunpack.c.h.b16 %v494
    %v2924 = vunpack.c.l.b16 %v495
    %v2925 = vunpack.c.h.b16 %v495
    %v2926 = vunpack.c.l.b16 %v496
    %v2927 = vunpack.c.h.b16 %v496
    %v2928 = vunpack.c.l.b16 %v497
    %v2929 = vunpack.c.h.b16 %v497
    %v2930 = vunpack.c.l.b16 %v498
    %v2931 = vunpack.c.h.b16 %v498
    %v2932 = vunpack.c.l.b16 %v499
    %v2933 = vunpack.c.h.b16 %v499
    %v2934 = vunpack.c.l.b16 %v500
    %v2935 = vunpack.c.h.b16 %v500
    %v2936 = vunpack.c.l.b16 %v501
    %v2937 = vunpack.c.h.b16 %v501
    %v2938 = vunpack.c.l.b16 %v502
    %v2939 = vunpack.c.h.b16 %v502
    %v2940 = vunpack.c.l.b16 %v503
    %v2941 = vunpack.c.h.b16 %v503
    %v2942 = vunpack.c.l.b16 %v504
    %v2943 = vunpack.c.h.b16 %v504
    %v2944 = vunpack.c.l.b16 %v505
    %v2945 = vunpack.c.h.b16 %v505
    %v2946 = vunpack.c.l.b16 %v506
    %v2947 = vunpack.c.h.b16 %v506
    %v2948 = vunpack.c.l.b16 %v507
    %v2949 = vunpack.c.h.b16 %v507
    %v2950 = vunpack.c.l.b16 %v508
    %v2951 = vunpack.c.h.b16 %v508
    %v2952 = vunpack.c.l.b16 %v509
    %v2953 = vunpack.c.h.b16 %v509
    %v2954 = vunpack.c.l.b16 %v510
    %v2955 = vunpack.c.h.b16 %v510
    %v2956 = vunpack.c.l.b16 %v511
    %v2957 = vunpack.c.h.b16 %v511
    %v2958 = vunpack.c.l.b16 %v512
    %v2959 = vunpack.c.h.b16 %v512
    %v2960 = vunpack.c.l.b16 %v513
    %v2961 = vunpack.c.h.b16 %v513
    %v2962 = vunpack.c.l.b16 %v514
    %v2963 = vunpack.c.h.b16 %v514
    %v2964 = vunpack.c.l.b16 %v515
    %v2965 = vunpack.c.h.b16 %v515
    %v2966 = vunpack.c.l.b16 %v516
    %v2967 = vunpack.c.h.b16 %v516
    %v2968 = vunpack.c.l.b16 %v517
    %v2969 = vunpack.c.h.b16 %v517
    %v2970 = vunpack.c.l.b16 %v518
    %v2971 = vunpack.c.h.b16 %v518
    %v2972 = vunpack.c.l.b16 %v519
    %v2973 = vunpack.c.h.b16 %v519
    %v2974 = vunpack.c.l.b16 %v520
    %v2975 = vunpack.c.h.b16 %v520
    %v2976 = vunpack.c.l.b16 %v521
    %v2977 = vunpack.c.h.b16 %v521
    %v2978 = vunpack.c.l.b16 %v522
    %v2979 = vunpack.c.h.b16 %v522
    %v2980 = vunpack.c.l.b16 %v523
    %v2981 = vunpack.c.h.b16 %v523
    %v2982 = vunpack.c.l.b16 %v524
    %v2983 = vunpack.c.h.b16 %v524
    %v2984 = vunpack.c.l.b16 %v525
    %v2985 = vunpack.c.h.b16 %v525
    %v2986 = vunpack.c.l.b16 %v526
    %v2987 = vunpack.c.h.b16 %v526
    %v2988 = vunpack.c.l.b16 %v527
    %v2989 = vunpack.c.h.b16 %v527
    %v2990 = vunpack.c.l.b16 %v528
    %v2991 = vunpack.c.h.b16 %v528
    %v2992 = vunpack.c.l.b16 %v529
    %v2993 = vunpack.c.h.b16 %v529
    %v2994 = vunpack.c.l.b16 %v530
    %v2995 = vunpack.c.h.b16 %v530
    %v2996 = vunpack.c.l.b16 %v531
    %v2997 = vunpack.c.h.b16 %v531
    %v2998 = vunpack.c.l.b16 %v532
    %v2999 = vunpack.c.h.b16 %v532
    %v3000 = vunpack.c.l.b16 %v533
    %v3001 = vunpack.c.h.b16 %v533
    %v3002 = vunpack.c.l.b16 %v534
    %v3003 = vunpack.c.h.b16 %v534
    %v3004 = vunpack.c.l.b16 %v535
    %v3005 = vunpack.c.h.b16 %v535
    %v3006 = vunpack.c.l.b16 %v536
    %v3007 = vunpack.c.h.b16 %v536
    %v3008 = vunpack.c.l.b16 %v537
    %v3009 = vunpack.c.h.b16 %v537
    %v3010 = vunpack.c.l.b16 %v538
    %v3011 = vunpack.c.h.b16 %v538
    %v3012 = vunpack.c.l.b16 %v539
    %v3013 = vunpack.c.h.b16 %v539
    %v3014 = vunpack.c.l.b16 %v540
    %v3015 = vunpack.c.h.b16 %v540
    %v3016 = vunpack.c.l.b16 %v541
    %v3017 = vunpack.c.h.b16 %v541
    %v3018 = vunpack.c.l.b16 %v542
    %v3019 = vunpack.c.h.b16 %v542
    %v3020 = vunpack.c.l.b16 %v543
    %v3021 = vunpack.c.h.b16 %v543
    %v3022 = vunpack.c.l.b16 %v544
    %v3023 = vunpack.c.h.b16 %v544
    %v3024 = vunpack.c.l.b16 %v545
    %v3025 = vunpack.c.h.b16 %v545
    %v3026 = vunpack.c.l.b16 %v546
    %v3027 = vunpack.c.h.b16 %v546
    %v3028 = vunpack.c.l.b16 %v547
    %v3029 = vunpack.c.h.b16 %v547
    %v3030 = vunpack.c.l.b16 %v548
    %v3031 = vunpack.c.h.b16 %v548
    %v3032 = vunpack.c.l.b16 %v549
    %v3033 = vunpack.c.h.b16 %v549
    %v3034 = vunpack.c.l.b16 %v550
    %v3035 = vunpack.c.h.b16 %v550
    %v3036 = vunpack.c.l.b16 %v551
    %v3037 = vunpack.c.h.b16 %v551
    %v3038 = vunpack.c.l.b16 %v552
    %v3039 = vunpack.c.h.b16 %v552
    %v3040 = vunpack.c.l.b16 %v553
    %v3041 = vunpack.c.h.b16 %v553
    %v3042 = vunpack.c.l.b16 %v554
    %v3043 = vunpack.c.h.b16 %v554
    %v3044 = vunpack.c.l.b16 %v555
    %v3045 = vunpack.c.h.b16 %v555
    %v3046 = vunpack.c.l.b16 %v556
    %v3047 = vunpack.c.h.b16 %v556
    %v3048 = vunpack.c.l.b16 %v557
    %v3049 = vunpack.c.h.b16 %v557
    %v3050 = vunpack.c.l.b16 %v558
    %v3051 = vunpack.c.h.b16 %v558
    %v3052 = vunpack.c.l.b16 %v559
    %v3053 = vunpack.c.h.b16 %v559
    %v3054 = vunpack.c.l.b16 %v560
    %v3055 = vunpack.c.h.b16 %v560
    %v3056 = vunpack.c.l.b16 %v561
    %v3057 = vunpack.c.h.b16 %v561
    %v3058 = vunpack.c.l.b16 %v562
    %v3059 = vunpack.c.h.b16 %v562
    %v3060 = vunpack.c.l.b16 %v563
    %v3061 = vunpack.c.h.b16 %v563
    %v3062 = vunpack.c.l.b16 %v564
    %v3063 = vunpack.c.h.b16 %v564
    %v3064 = vunpack.c.l.b16 %v565
    %v3065 = vunpack.c.h.b16 %v565
    %v3066 = vunpack.c.l.b16 %v566
    %v3067 = vunpack.c.h.b16 %v566
    %v3068 = vunpack.c.l.b16 %v567
    %v3069 = vunpack.c.h.b16 %v567
    %v3070 = vunpack.c.l.b16 %v568
    %v3071 = vunpack.c.h.b16 %v568
    %v3072 = vunpack.c.l.b16 %v569
    %v3073 = vunpack.c.h.b16 %v569
    %v3074 = vunpack.c.l.b16 %v570
    %v3075 = vunpack.c.h.b16 %v570
    %v3076 = vunpack.c.l.b16 %v571
    %v3077 = vunpack.c.h.b16 %v571
    %v3078 = vunpack.c.l.b16 %v572
    %v3079 = vunpack.c.h.b16 %v572
    %v3080 = vunpack.c.l.b16 %v573
    %v3081 = vunpack.c.h.b16 %v573
    %v3082 = vunpack.c.l.b16 %v574
    %v3083 = vunpack.c.h.b16 %v574
    %v3084 = vunpack.c.l.b16 %v575
    %v3085 = vunpack.c.h.b16 %v575
    %v3086 = vunpack.c.l.b16 %v576
    %v3087 = vunpack.c.h.b16 %v576
    %v3088 = vunpack.c.l.b16 %v577
    %v3089 = vunpack.c.h.b16 %v577
    %v3090 = vunpack.c.l.b16 %v578
    %v3091 = vunpack.c.h.b16 %v578
    %v3092 = vunpack.c.l.b16 %v579
    %v3093 = vunpack.c.h.b16 %v579
    %v3094 = vunpack.c.l.b16 %v580
    %v3095 = vunpack.c.h.b16 %v580
    %v3096 = vunpack.c.l.b16 %v581
    %v3097 = vunpack.c.h.b16 %v581
    %v3098 = vunpack.c.l.b16 %v582
    %v3099 = vunpack.c.h.b16 %v582
    %v3100 = vunpack.c.l.b16 %v583
    %v3101 = vunpack.c.h.b16 %v583
    %v3102 = vunpack.c.l.b16 %v584
    %v3103 = vunpack.c.h.b16 %v584
    %v3104 = vunpack.c.l.b16 %v585
    %v3105 = vunpack.c.h.b16 %v585
    %v3106 = vunpack.c.l.b16 %v586
    %v3107 = vunpack.c.h.b16 %v586
    %v3108 = vunpack.c.l.b16 %v587
    %v3109 = vunpack.c.h.b16 %v587
    %v3110 = vunpack.c.l.b16 %v588
    %v3111 = vunpack.c.h.b16 %v588
    %v3112 = vunpack.c.l.b16 %v589
    %v3113 = vunpack.c.h.b16 %v589
    %v3114 = vunpack.c.l.b16 %v590
    %v3115 = vunpack.c.h.b16 %v590
    %v3116 = vunpack.c.l.b16 %v591
    %v3117 = vunpack.c.h.b16 %v591
    %v3118 = vunpack.c.l.b16 %v592
    %v3119 = vunpack.c.h.b16 %v592
    %v3120 = vunpack.c.l.b16 %v593
    %v3121 = vunpack.c.h.b16 %v593
    %v3122 = vunpack.c.l.b16 %v594
    %v3123 = vunpack.c.h.b16 %v594
    %v3124 = vunpack.c.l.b16 %v595
    %v3125 = vunpack.c.h.b16 %v595
    %v3126 = vunpack.c.l.b16 %v596
    %v3127 = vunpack.c.h.b16 %v596
    %v3128 = vunpack.c.l.b16 %v597
    %v3129 = vunpack.c.h.b16 %v597
    %v3130 = vunpack.c.l.b16 %v598
    %v3131 = vunpack.c.h.b16 %v598
    %v3132 = vunpack.c.l.b16 %v599
    %v3133 = vunpack.c.h.b16 %v599
    %v3134 = vunpack.c.l.b16 %v600
    %v3135 = vunpack.c.h.b16 %v600
    %v3136 = vunpack.c.l.b16 %v601
    %v3137 = vunpack.c.h.b16 %v601
    %v3138 = vunpack.c.l.b16 %v602
    %v3139 = vunpack.c.h.b16 %v602
    %v3140 = vunpack.c.l.b16 %v603
    %v3141 = vunpack.c.h.b16 %v603
    %v3142 = vunpack.c.l.b16 %v604
    %v3143 = vunpack.c.h.b16 %v604
    %v3144 = vunpack.c.l.b16 %v605
    %v3145 = vunpack.c.h.b16 %v605
    %v3146 = vunpack.c.l.b16 %v606
    %v3147 = vunpack.c.h.b16 %v606
    %v3148 = vunpack.c.l.b16 %v607
    %v3149 = vunpack.c.h.b16 %v607
    %v3150 = vunpack.c.l.b16 %v608
    %v3151 = vunpack.c.h.b16 %v608
    %v3152 = vunpack.c.l.b16 %v609
    %v3153 = vunpack.c.h.b16 %v609
    %v3154 = vunpack.c.l.b16 %v610
    %v3155 = vunpack.c.h.b16 %v610
    %v3156 = vunpack.c.l.b16 %v611
    %v3157 = vunpack.c.h.b16 %v611
    %v3158 = vunpack.c.l.b16 %v612
    %v3159 = vunpack.c.h.b16 %v612
    %v3160 = vunpack.c.l.b16 %v613
    %v3161 = vunpack.c.h.b16 %v613
    %v3162 = vunpack.c.l.b16 %v614
    %v3163 = vunpack.c.h.b16 %v614
    %v3164 = vunpack.c.l.b16 %v615
    %v3165 = vunpack.c.h.b16 %v615
    %v3166 = vunpack.c.l.b16 %v616
    %v3167 = vunpack.c.h.b16 %v616
    %v3168 = vunpack.c.l.b16 %v617
    %v3169 = vunpack.c.h.b16 %v617
    %v3170 = vunpack.c.l.b16 %v618
    %v3171 = vunpack.c.h.b16 %v618
    %v3172 = vunpack.c.l.b16 %v619
    %v3173 = vunpack.c.h.b16 %v619
    %v3174 = vunpack.c.l.b16 %v620
    %v3175 = vunpack.c.h.b16 %v620
    %v3176 = vunpack.c.l.b16 %v621
    %v3177 = vunpack.c.h.b16 %v621
    %v3178 = vunpack.c.l.b16 %v622
    %v3179 = vunpack.c.h.b16 %v622
    %v3180 = vunpack.c.l.b16 %v623
    %v3181 = vunpack.c.h.b16 %v623
    %v3182 = vunpack.c.l.b16 %v624
    %v3183 = vunpack.c.h.b16 %v624
    %v3184 = vunpack.c.l.b16 %v625
    %v3185 = vunpack.c.h.b16 %v625
    %v3186 = vunpack.c.l.b16 %v626
    %v3187 = vunpack.c.h.b16 %v626
    %v3188 = vunpack.c.l.b16 %v627
    %v3189 = vunpack.c.h.b16 %v627
    %v3190 = vunpack.c.l.b16 %v628
    %v3191 = vunpack.c.h.b16 %v628
    %v3192 = vunpack.c.l.b16 %v629
    %v3193 = vunpack.c.h.b16 %v629
    %v3194 = vunpack.c.l.b16 %v630
    %v3195 = vunpack.c.h.b16 %v630
    %v3196 = vunpack.c.l.b16 %v631
    %v3197 = vunpack.c.h.b16 %v631
    %v3198 = vunpack.c.l.b16 %v632
    %v3199 = vunpack.c.h.b16 %v632
    %v3200 = vunpack.c.l.b16 %v633
    %v3201 = vunpack.c.h.b16 %v633
    %v3202 = vunpack.c.l.b16 %v634
    %v3203 = vunpack.c.h.b16 %v634
    %v3204 = vunpack.c.l.b16 %v635
    %v3205 = vunpack.c.h.b16 %v635
    %v3206 = vunpack.c.l.b16 %v636
    %v3207 = vunpack.c.h.b16 %v636
    %v3208 = vunpack.c.l.b16 %v637
    %v3209 = vunpack.c.h.b16 %v637
    %v3210 = vunpack.c.l.b16 %v638
    %v3211 = vunpack.c.h.b16 %v638
    %v3212 = vunpack.c.l.b16 %v639
    %v3213 = vunpack.c.h.b16 %v639
    %v3214 = vunpack.c.l.b16 %v640
    %v3215 = vunpack.c.h.b16 %v640
    %v3216 = vunpack.c.l.b16 %v641
    %v3217 = vunpack.c.h.b16 %v641
    %v3218 = vunpack.c.l.b16 %v642
    %v3219 = vunpack.c.h.b16 %v642
    %v3220 = vunpack.c.l.b16 %v643
    %v3221 = vunpack.c.h.b16 %v643
    %v3222 = vunpack.c.l.b16 %v644
    %v3223 = vunpack.c.h.b16 %v644
    %v3224 = vunpack.c.l.b16 %v645
    %v3225 = vunpack.c.h.b16 %v645
    %v3226 = vunpack.c.l.b16 %v646
    %v3227 = vunpack.c.h.b16 %v646
    %v3228 = vunpack.c.l.b16 %v647
    %v3229 = vunpack.c.h.b16 %v647
    %v3230 = vunpack.c.l.b16 %v648
    %v3231 = vunpack.c.h.b16 %v648
    %v3232 = vunpack.c.l.b16 %v649
    %v3233 = vunpack.c.h.b16 %v649
    %v3234 = vunpack.c.l.b16 %v650
    %v3235 = vunpack.c.h.b16 %v650
    %v3236 = vunpack.c.l.b16 %v651
    %v3237 = vunpack.c.h.b16 %v651
    %v3238 = vunpack.c.l.b16 %v652
    %v3239 = vunpack.c.h.b16 %v652
    %v3240 = vunpack.c.l.b16 %v653
    %v3241 = vunpack.c.h.b16 %v653
    %v3242 = vunpack.c.l.b16 %v654
    %v3243 = vunpack.c.h.b16 %v654
    %v3244 = vunpack.c.l.b16 %v655
    %v3245 = vunpack.c.h.b16 %v655
    %v3246 = vunpack.c.l.b16 %v656
    %v3247 = vunpack.c.h.b16 %v656
    %v3248 = vunpack.c.l.b16 %v657
    %v3249 = vunpack.c.h.b16 %v657
    %v3250 = vunpack.c.l.b16 %v658
    %v3251 = vunpack.c.h.b16 %v658
    %v3252 = vunpack.c.l.b16 %v659
    %v3253 = vunpack.c.h.b16 %v659
    %v3254 = vunpack.c.l.b16 %v660
    %v3255 = vunpack.c.h.b16 %v660
    %v3256 = vunpack.c.l.b16 %v661
    %v3257 = vunpack.c.h.b16 %v661
    %v3258 = vunpack.c.l.b16 %v662
    %v3259 = vunpack.c.h.b16 %v662
    %v3260 = vunpack.c.l.b16 %v663
    %v3261 = vunpack.c.h.b16 %v663
    %v3262 = vunpack.c.l.b16 %v664
    %v3263 = vunpack.c.h.b16 %v664
    %v3264 = vunpack.c.l.b16 %v665
    %v3265 = vunpack.c.h.b16 %v665
    %v3266 = vunpack.c.l.b16 %v666
    %v3267 = vunpack.c.h.b16 %v666
    %v3268 = vunpack.c.l.b16 %v667
    %v3269 = vunpack.c.h.b16 %v667
    %v3270 = vunpack.c.l.b16 %v668
    %v3271 = vunpack.c.h.b16 %v668
    %v3272 = vunpack.c.l.b16 %v669
    %v3273 = vunpack.c.h.b16 %v669
    %v3274 = vunpack.c.l.b16 %v670
    %v3275 = vunpack.c.h.b16 %v670
    %v3276 = vunpack.c.l.b16 %v671
    %v3277 = vunpack.c.h.b16 %v671
    %v3278 = vunpack.c.l.b16 %v672
    %v3279 = vunpack.c.h.b16 %v672
    %v3280 = vunpack.c.l.b16 %v673
    %v3281 = vunpack.c.h.b16 %v673
    %v3282 = vunpack.c.l.b16 %v674
    %v3283 = vunpack.c.h.b16 %v674
    %v3284 = vunpack.c.l.b16 %v675
    %v3285 = vunpack.c.h.b16 %v675
    %v3286 = vunpack.c.l.b16 %v676
    %v3287 = vunpack.c.h.b16 %v676
    %v3288 = vunpack.c.l.b16 %v677
    %v3289 = vunpack.c.h.b16 %v677
    %v3290 = vunpack.c.l.b16 %v678
    %v3291 = vunpack.c.h.b16 %v678
    %v3292 = vunpack.c.l.b16 %v679
    %v3293 = vunpack.c.h.b16 %v679
    %v3294 = vunpack.c.l.b16 %v680
    %v3295 = vunpack.c.h.b16 %v680
    %v3296 = vunpack.c.l.b16 %v681
    %v3297 = vunpack.c.h.b16 %v681
    %v3298 = vunpack.c.l.b16 %v682
    %v3299 = vunpack.c.h.b16 %v682
    %v3300 = vunpack.c.l.b16 %v683
    %v3301 = vunpack.c.h.b16 %v683
    %v3302 = vunpack.c.l.b16 %v684
    %v3303 = vunpack.c.h.b16 %v684
    %v3304 = vunpack.c.l.b16 %v685
    %v3305 = vunpack.c.h.b16 %v685
    %v3306 = vunpack.c.l.b16 %v686
    %v3307 = vunpack.c.h.b16 %v686
    %v3308 = vunpack.c.l.b16 %v687
    %v3309 = vunpack.c.h.b16 %v687
    %v3310 = vunpack.c.l.b16 %v688
    %v3311 = vunpack.c.h.b16 %v688
    %v3312 = vunpack.c.l.b16 %v689
    %v3313 = vunpack.c.h.b16 %v689
    %v3314 = vunpack.c.l.b16 %v690
    %v3315 = vunpack.c.h.b16 %v690
    %v3316 = vunpack.c.l.b16 %v691
    %v3317 = vunpack.c.h.b16 %v691
    %v3318 = vunpack.c.l.b16 %v692
    %v3319 = vunpack.c.h.b16 %v692
    %v3320 = vunpack.c.l.b16 %v693
    %v3321 = vunpack.c.h.b16 %v693
    %v3322 = vunpack.c.l.b16 %v694
    %v3323 = vunpack.c.h.b16 %v694
    %v3324 = vunpack.c.l.b16 %v695
    %v3325 = vunpack.c.h.b16 %v695
    %v3326 = vunpack.c.l.b16 %v696
    %v3327 = vunpack.c.h.b16 %v696
    %v3328 = vunpack.c.l.b16 %v697
    %v3329 = vunpack.c.h.b16 %v697
    %v3330 = vunpack.c.l.b16 %v698
    %v3331 = vunpack.c.h.b16 %v698
    %v3332 = vunpack.c.l.b16 %v699
    %v3333 = vunpack.c.h.b16 %v699
    %v3334 = vunpack.c.l.b16 %v700
    %v3335 = vunpack.c.h.b16 %v700
    %v3336 = vunpack.c.l.b16 %v701
    %v3337 = vunpack.c.h.b16 %v701
    %v3338 = vunpack.c.l.b16 %v702
    %v3339 = vunpack.c.h.b16 %v702
    %v3340 = vunpack.c.l.b16 %v703
    %v3341 = vunpack.c.h.b16 %v703
    %v3342 = vunpack.c.l.b16 %v704
    %v3343 = vunpack.c.h.b16 %v704
    %v3344 = vunpack.c.l.b16 %v705
    %v3345 = vunpack.c.h.b16 %v705
    %v3346 = vunpack.c.l.b16 %v706
    %v3347 = vunpack.c.h.b16 %v706
    %v3348 = vunpack.c.l.b16 %v707
    %v3349 = vunpack.c.h.b16 %v707
    %v3350 = vunpack.c.l.b16 %v708
    %v3351 = vunpack.c.h.b16 %v708
    %v3352 = vunpack.c.l.b16 %v709
    %v3353 = vunpack.c.h.b16 %v709
    %v3354 = vunpack.c.l.b16 %v710
    %v3355 = vunpack.c.h.b16 %v710
    %v3356 = vunpack.c.l.b16 %v711
    %v3357 = vunpack.c.h.b16 %v711
    %v3358 = vunpack.c.l.b16 %v712
    %v3359 = vunpack.c.h.b16 %v712
    %v3360 = vunpack.c.l.b16 %v713
    %v3361 = vunpack.c.h.b16 %v713
    %v3362 = vunpack.c.l.b16 %v714
    %v3363 = vunpack.c.h.b16 %v714
    %v3364 = vunpack.c.l.b16 %v715
    %v3365 = vunpack.c.h.b16 %v715
    %v3366 = vunpack.c.l.b16 %v716
    %v3367 = vunpack.c.h.b16 %v716
    %v3368 = vunpack.c.l.b16 %v717
    %v3369 = vunpack.c.h.b16 %v717
    %v3370 = vunpack.c.l.b16 %v718
    %v3371 = vunpack.c.h.b16 %v718
    %v3372 = vunpack.c.l.b16 %v719
    %v3373 = vunpack.c.h.b16 %v719
    %v3374 = vunpack.c.l.b16 %v720
    %v3375 = vunpack.c.h.b16 %v720
    %v3376 = vunpack.c.l.b16 %v721
    %v3377 = vunpack.c.h.b16 %v721
    %v3378 = vunpack.c.l.b16 %v722
    %v3379 = vunpack.c.h.b16 %v722
    %v3380 = vunpack.c.l.b16 %v723
    %v3381 = vunpack.c.h.b16 %v723
    %v3382 = vunpack.c.l.b16 %v724
    %v3383 = vunpack.c.h.b16 %v724
    %v3384 = vunpack.c.l.b16 %v725
    %v3385 = vunpack.c.h.b16 %v725
    %v3386 = vunpack.c.l.b16 %v726
    %v3387 = vunpack.c.h.b16 %v726
    %v3388 = vunpack.c.l.b16 %v727
    %v3389 = vunpack.c.h.b16 %v727
    %v3390 = vunpack.c.l.b16 %v728
    %v3391 = vunpack.c.h.b16 %v728
    %v3392 = vunpack.c.l.b16 %v729
    %v3393 = vunpack.c.h.b16 %v729
    %v3394 = vunpack.c.l.b16 %v730
    %v3395 = vunpack.c.h.b16 %v730
    %v3396 = vunpack.c.l.b16 %v731
    %v3397 = vunpack.c.h.b16 %v731
    %v3398 = vunpack.c.l.b16 %v732
    %v3399 = vunpack.c.h.b16 %v732
    %v3400 = vunpack.c.l.b16 %v733
    %v3401 = vunpack.c.h.b16 %v733
    %v3402 = vunpack.c.l.b16 %v734
    %v3403 = vunpack.c.h.b16 %v734
    %v3404 = vunpack.c.l.b16 %v735
    %v3405 = vunpack.c.h.b16 %v735
    %v3406 = vunpack.c.l.b16 %v736
    %v3407 = vunpack.c.h.b16 %v736
    %v3408 = vunpack.c.l.b16 %v737
    %v3409 = vunpack.c.h.b16 %v737
    %v3410 = vunpack.c.l.b16 %v738
    %v3411 = vunpack.c.h.b16 %v738
    %v3412 = vunpack.c.l.b16 %v739
    %v3413 = vunpack.c.h.b16 %v739
    %v3414 = vunpack.c.l.b16 %v740
    %v3415 = vunpack.c.h.b16 %v740
    %v3416 = vunpack.c.l.b16 %v741
    %v3417 = vunpack.c.h.b16 %v741
    %v3418 = vunpack.c.l.b16 %v742
    %v3419 = vunpack.c.h.b16 %v742
    %v3420 = vunpack.c.l.b16 %v743
    %v3421 = vunpack.c.h.b16 %v743
    %v3422 = vunpack.c.l.b16 %v744
    %v3423 = vunpack.c.h.b16 %v744
    %v3424 = vunpack.c.l.b16 %v745
    %v3425 = vunpack.c.h.b16 %v745
    %v3426 = vunpack.c.l.b16 %v746
    %v3427 = vunpack.c.h.b16 %v746
    %v3428 = vunpack.c.l.b16 %v747
    %v3429 = vunpack.c.h.b16 %v747
    %v3430 = vunpack.c.l.b16 %v748
    %v3431 = vunpack.c.h.b16 %v748
    %v3432 = vunpack.c.l.b16 %v749
    %v3433 = vunpack.c.h.b16 %v749
    %v3434 = vunpack.c.l.b16 %v750
    %v3435 = vunpack.c.h.b16 %v750
    %v3436 = vunpack.c.l.b16 %v751
    %v3437 = vunpack.c.h.b16 %v751
    %v3438 = vunpack.c.l.b16 %v752
    %v3439 = vunpack.c.h.b16 %v752
    %v3440 = vunpack.c.l.b16 %v753
    %v3441 = vunpack.c.h.b16 %v753
    %v3442 = vunpack.c.l.b16 %v754
    %v3443 = vunpack.c.h.b16 %v754
    %v3444 = vunpack.c.l.b16 %v755
    %v3445 = vunpack.c.h.b16 %v755
    %v3446 = vunpack.c.l.b16 %v756
    %v3447 = vunpack.c.h.b16 %v756
    %v3448 = vunpack.c.l.b16 %v757
    %v3449 = vunpack.c.h.b16 %v757
    %v3450 = vunpack.c.l.b16 %v758
    %v3451 = vunpack.c.h.b16 %v758
    %v3452 = vunpack.c.l.b16 %v759
    %v3453 = vunpack.c.h.b16 %v759
    %v3454 = vunpack.c.l.b16 %v760
    %v3455 = vunpack.c.h.b16 %v760
    %v3456 = vunpack.c.l.b16 %v761
    %v3457 = vunpack.c.h.b16 %v761
    %v3458 = vunpack.c.l.b16 %v762
    %v3459 = vunpack.c.h.b16 %v762
    %v3460 = vunpack.c.l.b16 %v763
    %v3461 = vunpack.c.h.b16 %v763
    %v3462 = vunpack.c.l.b16 %v764
    %v3463 = vunpack.c.h.b16 %v764
    %v3464 = vunpack.c.l.b16 %v765
    %v3465 = vunpack.c.h.b16 %v765
    %v3466 = vunpack.c.l.b16 %v766
    %v3467 = vunpack.c.h.b16 %v766
    %v3468 = vunpack.c.l.b16 %v767
    %v3469 = vunpack.c.h.b16 %v767
    %v3470 = vunpack.c.l.b16 %v768
    %v3471 = vunpack.c.h.b16 %v768
    %v3472 = vunpack.c.l.b16 %v769
    %v3473 = vunpack.c.h.b16 %v769
    %v3474 = vunpack.c.l.b16 %v770
    %v3475 = vunpack.c.h.b16 %v770
    %v3476 = vunpack.c.l.b16 %v771
    %v3477 = vunpack.c.h.b16 %v771
    %v3478 = vunpack.c.l.b16 %v772
    %v3479 = vunpack.c.h.b16 %v772
    %v3480 = vunpack.c.l.b16 %v773
    %v3481 = vunpack.c.h.b16 %v773
    %v3482 = vunpack.c.l.b16 %v774
    %v3483 = vunpack.c.h.b16 %v774
    %v3484 = vunpack.c.l.b16 %v775
    %v3485 = vunpack.c.h.b16 %v775
    %v3486 = vunpack.c.l.b16 %v776
    %v3487 = vunpack.c.h.b16 %v776
    %v3488 = vunpack.c.l.b16 %v777
    %v3489 = vunpack.c.h.b16 %v777
    %v3490 = vunpack.c.l.b16 %v778
    %v3491 = vunpack.c.h.b16 %v778
    %v3492 = vunpack.c.l.b16 %v779
    %v3493 = vunpack.c.h.b16 %v779
    %v3494 = vunpack.c.l.b16 %v780
    %v3495 = vunpack.c.h.b16 %v780
    %v3496 = vunpack.c.l.b16 %v781
    %v3497 = vunpack.c.h.b16 %v781
    %v3498 = vunpack.c.l.b16 %v782
    %v3499 = vunpack.c.h.b16 %v782
    %v3500 = vunpack.c.l.b16 %v783
    %v3501 = vunpack.c.h.b16 %v783
    %v3502 = vunpack.c.l.b16 %v784
    %v3503 = vunpack.c.h.b16 %v784
    %v3504 = vunpack.c.l.b16 %v785
    %v3505 = vunpack.c.h.b16 %v785
    %v3506 = vunpack.c.l.b16 %v786
    %v3507 = vunpack.c.h.b16 %v786
    %v3508 = vunpack.c.l.b16 %v787
    %v3509 = vunpack.c.h.b16 %v787
    %v3510 = vunpack.c.l.b16 %v788
    %v3511 = vunpack.c.h.b16 %v788
    %v3512 = vunpack.c.l.b16 %v789
    %v3513 = vunpack.c.h.b16 %v789
    %v3514 = vunpack.c.l.b16 %v790
    %v3515 = vunpack.c.h.b16 %v790
    %v3516 = vunpack.c.l.b16 %v791
    %v3517 = vunpack.c.h.b16 %v791
    %v3518 = vunpack.c.l.b16 %v792
    %v3519 = vunpack.c.h.b16 %v792
    %v3520 = vunpack.c.l.b16 %v793
    %v3521 = vunpack.c.h.b16 %v793
    %v3522 = vunpack.c.l.b16 %v794
    %v3523 = vunpack.c.h.b16 %v794
    %v3524 = vunpack.c.l.b16 %v795
    %v3525 = vunpack.c.h.b16 %v795
    %v3526 = vunpack.c.l.b16 %v796
    %v3527 = vunpack.c.h.b16 %v796
    %v3528 = vunpack.c.l.b16 %v797
    %v3529 = vunpack.c.h.b16 %v797
    %v3530 = vunpack.c.l.b16 %v798
    %v3531 = vunpack.c.h.b16 %v798
    %v3532 = vunpack.c.l.b16 %v799
    %v3533 = vunpack.c.h.b16 %v799
    %v3534 = vunpack.c.l.b16 %v800
    %v3535 = vunpack.c.h.b16 %v800
    %v3536 = vunpack.c.l.b16 %v801
    %v3537 = vunpack.c.h.b16 %v801
    %v3538 = vunpack.c.l.b16 %v802
    %v3539 = vunpack.c.h.b16 %v802
    %v3540 = vunpack.c.l.b16 %v803
    %v3541 = vunpack.c.h.b16 %v803
    %v3542 = vunpack.c.l.b16 %v804
    %v3543 = vunpack.c.h.b16 %v804
    %v3544 = vunpack.c.l.b16 %v805
    %v3545 = vunpack.c.h.b16 %v805
    %v3546 = vunpack.c.l.b16 %v806
    %v3547 = vunpack.c.h.b16 %v806
    %v3548 = vunpack.c.l.b16 %v807
    %v3549 = vunpack.c.h.b16 %v807
    %v3550 = vunpack.c.l.b16 %v808
    %v3551 = vunpack.c.h.b16 %v808
    %v3552 = vunpack.c.l.b16 %v809
    %v3553 = vunpack.c.h.b16 %v809
    %v3554 = vunpack.c.l.b16 %v810
    %v3555 = vunpack.c.h.b16 %v810
    %v3556 = vunpack.c.l.b16 %v811
    %v3557 = vunpack.c.h.b16 %v811
    %v3558 = vunpack.c.l.b16 %v812
    %v3559 = vunpack.c.h.b16 %v812
    %v3560 = vunpack.c.l.b16 %v813
    %v3561 = vunpack.c.h.b16 %v813
    %v3562 = vunpack.c.l.b16 %v814
    %v3563 = vunpack.c.h.b16 %v814
    %v3564 = vunpack.c.l.b16 %v815
    %v3565 = vunpack.c.h.b16 %v815
    %v3566 = vunpack.c.l.b16 %v816
    %v3567 = vunpack.c.h.b16 %v816
    %v3568 = vunpack.c.l.b16 %v817
    %v3569 = vunpack.c.h.b16 %v817
    %v3570 = vunpack.c.l.b16 %v818
    %v3571 = vunpack.c.h.b16 %v818
    %v3572 = vunpack.c.l.b16 %v819
    %v3573 = vunpack.c.h.b16 %v819
    %v3574 = vunpack.c.l.b16 %v820
    %v3575 = vunpack.c.h.b16 %v820
    %v3576 = vunpack.c.l.b16 %v821
    %v3577 = vunpack.c.h.b16 %v821
    %v3578 = vunpack.c.l.b16 %v822
    %v3579 = vunpack.c.h.b16 %v822
    %v3580 = vunpack.c.l.b16 %v823
    %v3581 = vunpack.c.h.b16 %v823
    %v3582 = vunpack.c.l.b16 %v824
    %v3583 = vunpack.c.h.b16 %v824
    %v3584 = vunpack.c.l.b16 %v825
    %v3585 = vunpack.c.h.b16 %v825
    %v3586 = vunpack.c.l.b16 %v826
    %v3587 = vunpack.c.h.b16 %v826
    %v3588 = vunpack.c.l.b16 %v827
    %v3589 = vunpack.c.h.b16 %v827
    %v3590 = vunpack.c.l.b16 %v828
    %v3591 = vunpack.c.h.b16 %v828
    %v3592 = vunpack.c.l.b16 %v829
    %v3593 = vunpack.c.h.b16 %v829
    %v3594 = vunpack.c.l.b16 %v830
    %v3595 = vunpack.c.h.b16 %v830
    %v3596 = vunpack.c.l.b16 %v831
    %v3597 = vunpack.c.h.b16 %v831
    %v3598 = vunpack.c.l.b16 %v832
    %v3599 = vunpack.c.h.b16 %v832
    %v3600 = vunpack.c.l.b16 %v833
    %v3601 = vunpack.c.h.b16 %v833
    %v3602 = vunpack.c.l.b16 %v834
    %v3603 = vunpack.c.h.b16 %v834
    %v3604 = vunpack.c.l.b16 %v835
    %v3605 = vunpack.c.h.b16 %v835
    %v3606 = vunpack.c.l.b16 %v836
    %v3607 = vunpack.c.h.b16 %v836
    %v3608 = vunpack.c.l.b16 %v837
    %v3609 = vunpack.c.h.b16 %v837
    %v3610 = vunpack.c.l.b16 %v838
    %v3611 = vunpack.c.h.b16 %v838
    %v3612 = vunpack.c.l.b16 %v839
    %v3613 = vunpack.c.h.b16 %v839
    %v3614 = vunpack.c.l.b16 %v840
    %v3615 = vunpack.c.h.b16 %v840
    %v3616 = vunpack.c.l.b16 %v841
    %v3617 = vunpack.c.h.b16 %v841
    %v3618 = vunpack.c.l.b16 %v842
    %v3619 = vunpack.c.h.b16 %v842
    %v3620 = vunpack.c.l.b16 %v843
    %v3621 = vunpack.c.h.b16 %v843
    %v3622 = vunpack.c.l.b16 %v844
    %v3623 = vunpack.c.h.b16 %v844
    %v3624 = vunpack.c.l.b16 %v845
    %v3625 = vunpack.c.h.b16 %v845
    %v3626 = vunpack.c.l.b16 %v846
    %v3627 = vunpack.c.h.b16 %v846
    %v3628 = vunpack.c.l.b16 %v847
    %v3629 = vunpack.c.h.b16 %v847
    %v3630 = vunpack.c.l.b16 %v848
    %v3631 = vunpack.c.h.b16 %v848
    %v3632 = vunpack.c.l.b16 %v849
    %v3633 = vunpack.c.h.b16 %v849
    %v3634 = vunpack.c.l.b16 %v850
    %v3635 = vunpack.c.h.b16 %v850
    %v3636 = vunpack.c.l.b16 %v851
    %v3637 = vunpack.c.h.b16 %v851
    %v3638 = vunpack.c.l.b16 %v852
    %v3639 = vunpack.c.h.b16 %v852
    %v3640 = vunpack.c.l.b16 %v853
    %v3641 = vunpack.c.h.b16 %v853
    %v3642 = vunpack.c.l.b16 %v854
    %v3643 = vunpack.c.h.b16 %v854
    %v3644 = vunpack.c.l.b16 %v855
    %v3645 = vunpack.c.h.b16 %v855
    %v3646 = vunpack.c.l.b16 %v856
    %v3647 = vunpack.c.h.b16 %v856
    %v3648 = vunpack.c.l.b16 %v857
    %v3649 = vunpack.c.h.b16 %v857
    %v3650 = vunpack.c.l.b16 %v858
    %v3651 = vunpack.c.h.b16 %v858
    %v3652 = vunpack.c.l.b16 %v859
    %v3653 = vunpack.c.h.b16 %v859
    %v3654 = vpack.c.b16 %v2646, %v2630
    %v3655 = vpack.c.b16 %v2647, %v2631
    %v3656 = vpack.c.b16 %v2648, %v2632
    %v3657 = vpack.c.b16 %v2649, %v2633
    %v3658 = vpack.c.b16 %v2650, %v2634
    %v3659 = vpack.c.b16 %v2651, %v2635
    %v3660 = vpack.c.b16 %v2652, %v2636
    %v3661 = vpack.c.b16 %v2653, %v2637
    %v3662 = vpack.c.b16 %v2654, %v2638
    %v3663 = vpack.c.b16 %v2655, %v2639
    %v3664 = vpack.c.b16 %v2656, %v2640
    %v3665 = vpack.c.b16 %v2657, %v2641
    %v3666 = vpack.c.b16 %v2658, %v2642
    %v3667 = vpack.c.b16 %v2659, %v2643
    %v3668 = vpack.c.b16 %v2660, %v2644
    %v3669 = vpack.c.b16 %v2661, %v2645
    %v3670 = vpack.c.b16 %v2678, %v2662
    %v3671 = vpack.c.b16 %v2679, %v2663
    %v3672 = vpack.c.b16 %v2680, %v2664
    %v3673 = vpack.c.b16 %v2681, %v2665
    %v3674 = vpack.c.b16 %v2682, %v2666
    %v3675 = vpack.c.b16 %v2683, %v2667
    %v3676 = vpack.c.b16 %v2684, %v2668
    %v3677 = vpack.c.b16 %v2685, %v2669
    %v3678 = vpack.c.b16 %v2686, %v2670
    %v3679 = vpack.c.b16 %v2687, %v2671
    %v3680 = vpack.c.b16 %v2688, %v2672
    %v3681 = vpack.c.b16 %v2689, %v2673
    %v3682 = vpack.c.b16 %v2690, %v2674
    %v3683 = vpack.c.b16 %v2691, %v2675
    %v3684 = vpack.c.b16 %v2692, %v2676
    %v3685 = vpack.c.b16 %v2693, %v2677
    %v3686 = vpack.c.b16 %v2710, %v2694
    %v3687 = vpack.c.b16 %v2711, %v2695
    %v3688 = vpack.c.b16 %v2712, %v2696
    %v3689 = vpack.c.b16 %v2713, %v2697
    %v3690 = vpack.c.b16 %v2714, %v2698
    %v3691 = vpack.c.b16 %v2715, %v2699
    %v3692 = vpack.c.b16 %v2716, %v2700
    %v3693 = vpack.c.b16 %v2717, %v2701
    %v3694 = vpack.c.b16 %v2718, %v2702
    %v3695 = vpack.c.b16 %v2719, %v2703
    %v3696 = vpack.c.b16 %v2720, %v2704
    %v3697 = vpack.c.b16 %v2721, %v2705
    %v3698 = vpack.c.b16 %v2722, %v2706
    %v3699 = vpack.c.b16 %v2723, %v2707
    %v3700 = vpack.c.b16 %v2724, %v2708
    %v3701 = vpack.c.b16 %v2725, %v2709
    %v3702 = vpack.c.b16 %v2742, %v2726
    %v3703 = vpack.c.b16 %v2743, %v2727
    %v3704 = vpack.c.b16 %v2744, %v2728
    %v3705 = vpack.c.b16 %v2745, %v2729
    %v3706 = vpack.c.b16 %v2746, %v2730
    %v3707 = vpack.c.b16 %v2747, %v2731
    %v3708 = vpack.c.b16 %v2748, %v2732
    %v3709 = vpack.c.b16 %v2749, %v2733
    %v3710 = vpack.c.b16 %v2750, %v2734
    %v3711 = vpack.c.b16 %v2751, %v2735
    %v3712 = vpack.c.b16 %v2752, %v2736
    %v3713 = vpack.c.b16 %v2753, %v2737
    %v3714 = vpack.c.b16 %v2754, %v2738
    %v3715 = vpack.c.b16 %v2755, %v2739
    %v3716 = vpack.c.b16 %v2756, %v2740
    %v3717 = vpack.c.b16 %v2757, %v2741
    %v3718 = vpack.c.b16 %v2774, %v2758
    %v3719 = vpack.c.b16 %v2775, %v2759
    %v3720 = vpack.c.b16 %v2776, %v2760
    %v3721 = vpack.c.b16 %v2777, %v2761
    %v3722 = vpack.c.b16 %v2778, %v2762
    %v3723 = vpack.c.b16 %v2779, %v2763
    %v3724 = vpack.c.b16 %v2780, %v2764
    %v3725 = vpack.c.b16 %v2781, %v2765
    %v3726 = vpack.c.b16 %v2782, %v2766
    %v3727 = vpack.c.b16 %v2783, %v2767
    %v3728 = vpack.c.b16 %v2784, %v2768
    %v3729 = vpack.c.b16 %v2785, %v2769
    %v3730 = vpack.c.b16 %v2786, %v2770
    %v3731 = vpack.c.b16 %v2787, %v2771
    %v3732 = vpack.c.b16 %v2788, %v2772
    %v3733 = vpack.c.b16 %v2789, %v2773
    %v3734 = vpack.c.b16 %v2806, %v2790
    %v3735 = vpack.c.b16 %v2807, %v2791
    %v3736 = vpack.c.b16 %v2808, %v2792
    %v3737 = vpack.c.b16 %v2809, %v2793
    %v3738 = vpack.c.b16 %v2810, %v2794
    %v3739 = vpack.c.b16 %v2811, %v2795
    %v3740 = vpack.c.b16 %v2812, %v2796
    %v3741 = vpack.c.b16 %v2813, %v2797
    %v3742 = vpack.c.b16 %v2814, %v2798
    %v3743 = vpack.c.b16 %v2815, %v2799
    %v3744 = vpack.c.b16 %v2816, %v2800
    %v3745 = vpack.c.b16 %v2817, %v2801
    %v3746 = vpack.c.b16 %v2818, %v2802
    %v3747 = vpack.c.b16 %v2819, %v2803
    %v3748 = vpack.c.b16 %v2820, %v2804
    %v3749 = vpack.c.b16 %v2821, %v2805
    %v3750 = vpack.c.b16 %v2838, %v2822
    %v3751 = vpack.c.b16 %v2839, %v2823
    %v3752 = vpack.c.b16 %v2840, %v2824
    %v3753 = vpack.c.b16 %v2841, %v2825
    %v3754 = vpack.c.b16 %v2842, %v2826
    %v3755 = vpack.c.b16 %v2843, %v2827
    %v3756 = vpack.c.b16 %v2844, %v2828
    %v3757 = vpack.c.b16 %v2845, %v2829
    %v3758 = vpack.c.b16 %v2846, %v2830
    %v3759 = vpack.c.b16 %v2847, %v2831
    %v3760 = vpack.c.b16 %v2848, %v2832
    %v3761 = vpack.c.b16 %v2849, %v2833
    %v3762 = vpack.c.b16 %v2850, %v2834
    %v3763 = vpack.c.b16 %v2851, %v2835
    %v3764 = vpack.c.b16 %v2852, %v2836
    %v3765 = vpack.c.b16 %v2853, %v2837
    %v3766 = vpack.c.b16 %v2870, %v2854
    %v3767 = vpack.c.b16 %v2871, %v2855
    %v3768 = vpack.c.b16 %v2872, %v2856
    %v3769 = vpack.c.b16 %v2873, %v2857
    %v3770 = vpack.c.b16 %v2874, %v2858
    %v3771 = vpack.c.b16 %v2875, %v2859
    %v3772 = vpack.c.b16 %v2876, %v2860
    %v3773 = vpack.c.b16 %v2877, %v2861
    %v3774 = vpack.c.b16 %v2878, %v2862
    %v3775 = vpack.c.b16 %v2879, %v2863
    %v3776 = vpack.c.b16 %v2880, %v2864
    %v3777 = vpack.c.b16 %v2881, %v2865
    %v3778 = vpack.c.b16 %v2882, %v2866
    %v3779 = vpack.c.b16 %v2883, %v2867
    %v3780 = vpack.c.b16 %v2884, %v2868
    %v3781 = vpack.c.b16 %v2885, %v2869
    %v3782 = vpack.c.b16 %v2902, %v2886
    %v3783 = vpack.c.b16 %v2903, %v2887
    %v3784 = vpack.c.b16 %v2904, %v2888
    %v3785 = vpack.c.b16 %v2905, %v2889
    %v3786 = vpack.c.b16 %v2906, %v2890
    %v3787 = vpack.c.b16 %v2907, %v2891
    %v3788 = vpack.c.b16 %v2908, %v2892
    %v3789 = vpack.c.b16 %v2909, %v2893
    %v3790 = vpack.c.b16 %v2910, %v2894
    %v3791 = vpack.c.b16 %v2911, %v2895
    %v3792 = vpack.c.b16 %v2912, %v2896
    %v3793 = vpack.c.b16 %v2913, %v2897
    %v3794 = vpack.c.b16 %v2914, %v2898
    %v3795 = vpack.c.b16 %v2915, %v2899
    %v3796 = vpack.c.b16 %v2916, %v2900
    %v3797 = vpack.c.b16 %v2917, %v2901
    %v3798 = vpack.c.b16 %v2934, %v2918
    %v3799 = vpack.c.b16 %v2935, %v2919
    %v3800 = vpack.c.b16 %v2936, %v2920
    %v3801 = vpack.c.b16 %v2937, %v2921
    %v3802 = vpack.c.b16 %v2938, %v2922
    %v3803 = vpack.c.b16 %v2939, %v2923
    %v3804 = vpack.c.b16 %v2940, %v2924
    %v3805 = vpack.c.b16 %v2941, %v2925
    %v3806 = vpack.c.b16 %v2942, %v2926
    %v3807 = vpack.c.b16 %v2943, %v2927
    %v3808 = vpack.c.b16 %v2944, %v2928
    %v3809 = vpack.c.b16 %v2945, %v2929
    %v3810 = vpack.c.b16 %v2946, %v2930
    %v3811 = vpack.c.b16 %v2947, %v2931
    %v3812 = vpack.c.b16 %v2948, %v2932
    %v3813 = vpack.c.b16 %v2949, %v2933
    %v3814 = vpack.c.b16 %v2966, %v2950
    %v3815 = vpack.c.b16 %v2967, %v2951
    %v3816 = vpack.c.b16 %v2968, %v2952
    %v3817 = vpack.c.b16 %v2969, %v2953
    %v3818 = vpack.c.b16 %v2970, %v2954
    %v3819 = vpack.c.b16 %v2971, %v2955
    %v3820 = vpack.c.b16 %v2972, %v2956
    %v3821 = vpack.c.b16 %v2973, %v2957
    %v3822 = vpack.c.b16 %v2974, %v2958
    %v3823 = vpack.c.b16 %v2975, %v2959
    %v3824 = vpack.c.b16 %v2976, %v2960
    %v3825 = vpack.c.b16 %v2977, %v2961
    %v3826 = vpack.c.b16 %v2978, %v2962
    %v3827 = vpack.c.b16 %v2979, %v2963
    %v3828 = vpack.c.b16 %v2980, %v2964
    %v3829 = vpack.c.b16 %v2981, %v2965
    %v3830 = vpack.c.b16 %v2998, %v2982
    %v3831 = vpack.c.b16 %v2999, %v2983
    %v3832 = vpack.c.b16 %v3000, %v2984
    %v3833 = vpack.c.b16 %v3001, %v2985
    %v3834 = vpack.c.b16 %v3002, %v2986
    %v3835 = vpack.c.b16 %v3003, %v2987
    %v3836 = vpack.c.b16 %v3004, %v2988
    %v3837 = vpack.c.b16 %v3005, %v2989
    %v3838 = vpack.c.b16 %v3006, %v2990
    %v3839 = vpack.c.b16 %v3007, %v2991
    %v3840 = vpack.c.b16 %v3008, %v2992
    %v3841 = vpack.c.b16 %v3009, %v2993
    %v3842 = vpack.c.b16 %v3010, %v2994
    %v3843 = vpack.c.b16 %v3011, %v2995
    %v3844 = vpack.c.b16 %v3012, %v2996
    %v3845 = vpack.c.b16 %v3013, %v2997
    %v3846 = vpack.c.b16 %v3030, %v3014
    %v3847 = vpack.c.b16 %v3031, %v3015
    %v3848 = vpack.c.b16 %v3032, %v3016
    %v3849 = vpack.c.b16 %v3033, %v3017
    %v3850 = vpack.c.b16 %v3034, %v3018
    %v3851 = vpack.c.b16 %v3035, %v3019
    %v3852 = vpack.c.b16 %v3036, %v3020
    %v3853 = vpack.c.b16 %v3037, %v3021
    %v3854 = vpack.c.b16 %v3038, %v3022
    %v3855 = vpack.c.b16 %v3039, %v3023
    %v3856 = vpack.c.b16 %v3040, %v3024
    %v3857 = vpack.c.b16 %v3041, %v3025
    %v3858 = vpack.c.b16 %v3042, %v3026
    %v3859 = vpack.c.b16 %v3043, %v3027
    %v3860 = vpack.c.b16 %v3044, %v3028
    %v3861 = vpack.c.b16 %v3045, %v3029
    %v3862 = vpack.c.b16 %v3062, %v3046
    %v3863 = vpack.c.b16 %v3063, %v3047
    %v3864 = vpack.c.b16 %v3064, %v3048
    %v3865 = vpack.c.b16 %v3065, %v3049
    %v3866 = vpack.c.b16 %v3066, %v3050
    %v3867 = vpack.c.b16 %v3067, %v3051
    %v3868 = vpack.c.b16 %v3068, %v3052
    %v3869 = vpack.c.b16 %v3069, %v3053
    %v3870 = vpack.c.b16 %v3070, %v3054
    %v3871 = vpack.c.b16 %v3071, %v3055
    %v3872 = vpack.c.b16 %v3072, %v3056
    %v3873 = vpack.c.b16 %v3073, %v3057
    %v3874 = vpack.c.b16 %v3074, %v3058
    %v3875 = vpack.c.b16 %v3075, %v3059
    %v3876 = vpack.c.b16 %v3076, %v3060
    %v3877 = vpack.c.b16 %v3077, %v3061
    %v3878 = vpack.c.b16 %v3094, %v3078
    %v3879 = vpack.c.b16 %v3095, %v3079
    %v3880 = vpack.c.b16 %v3096, %v3080
    %v3881 = vpack.c.b16 %v3097, %v3081
    %v3882 = vpack.c.b16 %v3098, %v3082
    %v3883 = vpack.c.b16 %v3099, %v3083
    %v3884 = vpack.c.b16 %v3100, %v3084
    %v3885 = vpack.c.b16 %v3101, %v3085
    %v3886 = vpack.c.b16 %v3102, %v3086
    %v3887 = vpack.c.b16 %v3103, %v3087
    %v3888 = vpack.c.b16 %v3104, %v3088
    %v3889 = vpack.c.b16 %v3105, %v3089
    %v3890 = vpack.c.b16 %v3106, %v3090
    %v3891 = vpack.c.b16 %v3107, %v3091
    %v3892 = vpack.c.b16 %v3108, %v3092
    %v3893 = vpack.c.b16 %v3109, %v3093
    %v3894 = vpack.c.b16 %v3126, %v3110
    %v3895 = vpack.c.b16 %v3127, %v3111
    %v3896 = vpack.c.b16 %v3128, %v3112
    %v3897 = vpack.c.b16 %v3129, %v3113
    %v3898 = vpack.c.b16 %v3130, %v3114
    %v3899 = vpack.c.b16 %v3131, %v3115
    %v3900 = vpack.c.b16 %v3132, %v3116
    %v3901 = vpack.c.b16 %v3133, %v3117
    %v3902 = vpack.c.b16 %v3134, %v3118
    %v3903 = vpack.c.b16 %v3135, %v3119
    %v3904 = vpack.c.b16 %v3136, %v3120
    %v3905 = vpack.c.b16 %v3137, %v3121
    %v3906 = vpack.c.b16 %v3138, %v3122
    %v3907 = vpack.c.b16 %v3139, %v3123
    %v3908 = vpack.c.b16 %v3140, %v3124
    %v3909 = vpack.c.b16 %v3141, %v3125
    %v3910 = vpack.c.b16 %v3158, %v3142
    %v3911 = vpack.c.b16 %v3159, %v3143
    %v3912 = vpack.c.b16 %v3160, %v3144
    %v3913 = vpack.c.b16 %v3161, %v3145
    %v3914 = vpack.c.b16 %v3162, %v3146
    %v3915 = vpack.c.b16 %v3163, %v3147
    %v3916 = vpack.c.b16 %v3164, %v3148
    %v3917 = vpack.c.b16 %v3165, %v3149
    %v3918 = vpack.c.b16 %v3166, %v3150
    %v3919 = vpack.c.b16 %v3167, %v3151
    %v3920 = vpack.c.b16 %v3168, %v3152
    %v3921 = vpack.c.b16 %v3169, %v3153
    %v3922 = vpack.c.b16 %v3170, %v3154
    %v3923 = vpack.c.b16 %v3171, %v3155
    %v3924 = vpack.c.b16 %v3172, %v3156
    %v3925 = vpack.c.b16 %v3173, %v3157
    %v3926 = vpack.c.b16 %v3190, %v3174
    %v3927 = vpack.c.b16 %v3191, %v3175
    %v3928 = vpack.c.b16 %v3192, %v3176
    %v3929 = vpack.c.b16 %v3193, %v3177
    %v3930 = vpack.c.b16 %v3194, %v3178
    %v3931 = vpack.c.b16 %v3195, %v3179
    %v3932 = vpack.c.b16 %v3196, %v3180
    %v3933 = vpack.c.b16 %v3197, %v3181
    %v3934 = vpack.c.b16 %v3198, %v3182
    %v3935 = vpack.c.b16 %v3199, %v3183
    %v3936 = vpack.c.b16 %v3200, %v3184
    %v3937 = vpack.c.b16 %v3201, %v3185
    %v3938 = vpack.c.b16 %v3202, %v3186
    %v3939 = vpack.c.b16 %v3203, %v3187
    %v3940 = vpack.c.b16 %v3204, %v3188
    %v3941 = vpack.c.b16 %v3205, %v3189
    %v3942 = vpack.c.b16 %v3222, %v3206
    %v3943 = vpack.c.b16 %v3223, %v3207
    %v3944 = vpack.c.b16 %v3224, %v3208
    %v3945 = vpack.c.b16 %v3225, %v3209
    %v3946 = vpack.c.b16 %v3226, %v3210
    %v3947 = vpack.c.b16 %v3227, %v3211
    %v3948 = vpack.c.b16 %v3228, %v3212
    %v3949 = vpack.c.b16 %v3229, %v3213
    %v3950 = vpack.c.b16 %v3230, %v3214
    %v3951 = vpack.c.b16 %v3231, %v3215
    %v3952 = vpack.c.b16 %v3232, %v3216
    %v3953 = vpack.c.b16 %v3233, %v3217
    %v3954 = vpack.c.b16 %v3234, %v3218
    %v3955 = vpack.c.b16 %v3235, %v3219
    %v3956 = vpack.c.b16 %v3236, %v3220
    %v3957 = vpack.c.b16 %v3237, %v3221
    %v3958 = vpack.c.b16 %v3254, %v3238
    %v3959 = vpack.c.b16 %v3255, %v3239
    %v3960 = vpack.c.b16 %v3256, %v3240
    %v3961 = vpack.c.b16 %v3257, %v3241
    %v3962 = vpack.c.b16 %v3258, %v3242
    %v3963 = vpack.c.b16 %v3259, %v3243
    %v3964 = vpack.c.b16 %v3260, %v3244
    %v3965 = vpack.c.b16 %v3261, %v3245
    %v3966 = vpack.c.b16 %v3262, %v3246
    %v3967 = vpack.c.b16 %v3263, %v3247
    %v3968 = vpack.c.b16 %v3264, %v3248
    %v3969 = vpack.c.b16 %v3265, %v3249
    %v3970 = vpack.c.b16 %v3266, %v3250
    %v3971 = vpack.c.b16 %v3267, %v3251
    %v3972 = vpack.c.b16 %v3268, %v3252
    %v3973 = vpack.c.b16 %v3269, %v3253
    %v3974 = vpack.c.b16 %v3286, %v3270
    %v3975 = vpack.c.b16 %v3287, %v3271
    %v3976 = vpack.c.b16 %v3288, %v3272
    %v3977 = vpack.c.b16 %v3289, %v3273
    %v3978 = vpack.c.b16 %v3290, %v3274
    %v3979 = vpack.c.b16 %v3291, %v3275
    %v3980 = vpack.c.b16 %v3292, %v3276
    %v3981 = vpack.c.b16 %v3293, %v3277
    %v3982 = vpack.c.b16 %v3294, %v3278
    %v3983 = vpack.c.b16 %v3295, %v3279
    %v3984 = vpack.c.b16 %v3296, %v3280
    %v3985 = vpack.c.b16 %v3297, %v3281
    %v3986 = vpack.c.b16 %v3298, %v3282
    %v3987 = vpack.c.b16 %v3299, %v3283
    %v3988 = vpack.c.b16 %v3300, %v3284
    %v3989 = vpack.c.b16 %v3301, %v3285
    %v3990 = vpack.c.b16 %v3318, %v3302
    %v3991 = vpack.c.b16 %v3319, %v3303
    %v3992 = vpack.c.b16 %v3320, %v3304
    %v3993 = vpack.c.b16 %v3321, %v3305
    %v3994 = vpack.c.b16 %v3322, %v3306
    %v3995 = vpack.c.b16 %v3323, %v3307
    %v3996 = vpack.c.b16 %v3324, %v3308
    %v3997 = vpack.c.b16 %v3325, %v3309
    %v3998 = vpack.c.b16 %v3326, %v3310
    %v3999 = vpack.c.b16 %v3327, %v3311
    %v4000 = vpack.c.b16 %v3328, %v3312
    %v4001 = vpack.c.b16 %v3329, %v3313
    %v4002 = vpack.c.b16 %v3330, %v3314
    %v4003 = vpack.c.b16 %v3331, %v3315
    %v4004 = vpack.c.b16 %v3332, %v3316
    %v4005 = vpack.c.b16 %v3333, %v3317
    %v4006 = vpack.c.b16 %v3350, %v3334
    %v4007 = vpack.c.b16 %v3351, %v3335
    %v4008 = vpack.c.b16 %v3352, %v3336
    %v4009 = vpack.c.b16 %v3353, %v3337
    %v4010 = vpack.c.b16 %v3354, %v3338
    %v4011 = vpack.c.b16 %v3355, %v3339
    %v4012 = vpack.c.b16 %v3356, %v3340
    %v4013 = vpack.c.b16 %v3357, %v3341
    %v4014 = vpack.c.b16 %v3358, %v3342
    %v4015 = vpack.c.b16 %v3359, %v3343
    %v4016 = vpack.c.b16 %v3360, %v3344
    %v4017 = vpack.c.b16 %v3361, %v3345
    %v4018 = vpack.c.b16 %v3362, %v3346
    %v4019 = vpack.c.b16 %v3363, %v3347
    %v4020 = vpack.c.b16 %v3364, %v3348
    %v4021 = vpack.c.b16 %v3365, %v3349
    %v4022 = vpack.c.b16 %v3382, %v3366
    %v4023 = vpack.c.b16 %v3383, %v3367
    %v4024 = vpack.c.b16 %v3384, %v3368
    %v4025 = vpack.c.b16 %v3385, %v3369
    %v4026 = vpack.c.b16 %v3386, %v3370
    %v4027 = vpack.c.b16 %v3387, %v3371
    %v4028 = vpack.c.b16 %v3388, %v3372
    %v4029 = vpack.c.b16 %v3389, %v3373
    %v4030 = vpack.c.b16 %v3390, %v3374
    %v4031 = vpack.c.b16 %v3391, %v3375
    %v4032 = vpack.c.b16 %v3392, %v3376
    %v4033 = vpack.c.b16 %v3393, %v3377
    %v4034 = vpack.c.b16 %v3394, %v3378
    %v4035 = vpack.c.b16 %v3395, %v3379
    %v4036 = vpack.c.b16 %v3396, %v3380
    %v4037 = vpack.c.b16 %v3397, %v3381
    %v4038 = vpack.c.b16 %v3414, %v3398
    %v4039 = vpack.c.b16 %v3415, %v3399
    %v4040 = vpack.c.b16 %v3416, %v3400
    %v4041 = vpack.c.b16 %v3417, %v3401
    %v4042 = vpack.c.b16 %v3418, %v3402
    %v4043 = vpack.c.b16 %v3419, %v3403
    %v4044 = vpack.c.b16 %v3420, %v3404
    %v4045 = vpack.c.b16 %v3421, %v3405
    %v4046 = vpack.c.b16 %v3422, %v3406
    %v4047 = vpack.c.b16 %v3423, %v3407
    %v4048 = vpack.c.b16 %v3424, %v3408
    %v4049 = vpack.c.b16 %v3425, %v3409
    %v4050 = vpack.c.b16 %v3426, %v3410
    %v4051 = vpack.c.b16 %v3427, %v3411
    %v4052 = vpack.c.b16 %v3428, %v3412
    %v4053 = vpack.c.b16 %v3429, %v3413
    %v4054 = vpack.c.b16 %v3446, %v3430
    %v4055 = vpack.c.b16 %v3447, %v3431
    %v4056 = vpack.c.b16 %v3448, %v3432
    %v4057 = vpack.c.b16 %v3449, %v3433
    %v4058 = vpack.c.b16 %v3450, %v3434
    %v4059 = vpack.c.b16 %v3451, %v3435
    %v4060 = vpack.c.b16 %v3452, %v3436
    %v4061 = vpack.c.b16 %v3453, %v3437
    %v4062 = vpack.c.b16 %v3454, %v3438
    %v4063 = vpack.c.b16 %v3455, %v3439
    %v4064 = vpack.c.b16 %v3456, %v3440
    %v4065 = vpack.c.b16 %v3457, %v3441
    %v4066 = vpack.c.b16 %v3458, %v3442
    %v4067 = vpack.c.b16 %v3459, %v3443
    %v4068 = vpack.c.b16 %v3460, %v3444
    %v4069 = vpack.c.b16 %v3461, %v3445
    %v4070 = vpack.c.b16 %v3478, %v3462
    %v4071 = vpack.c.b16 %v3479, %v3463
    %v4072 = vpack.c.b16 %v3480, %v3464
    %v4073 = vpack.c.b16 %v3481, %v3465
    %v4074 = vpack.c.b16 %v3482, %v3466
    %v4075 = vpack.c.b16 %v3483, %v3467
    %v4076 = vpack.c.b16 %v3484, %v3468
    %v4077 = vpack.c.b16 %v3485, %v3469
    %v4078 = vpack.c.b16 %v3486, %v3470
    %v4079 = vpack.c.b16 %v3487, %v3471
    %v4080 = vpack.c.b16 %v3488, %v3472
    %v4081 = vpack.c.b16 %v3489, %v3473
    %v4082 = vpack.c.b16 %v3490, %v3474
    %v4083 = vpack.c.b16 %v3491, %v3475
    %v4084 = vpack.c.b16 %v3492, %v3476
    %v4085 = vpack.c.b16 %v3493, %v3477
    %v4086 = vpack.c.b16 %v3510, %v3494
    %v4087 = vpack.c.b16 %v3511, %v3495
    %v4088 = vpack.c.b16 %v3512, %v3496
    %v4089 = vpack.c.b16 %v3513, %v3497
    %v4090 = vpack.c.b16 %v3514, %v3498
    %v4091 = vpack.c.b16 %v3515, %v3499
    %v4092 = vpack.c.b16 %v3516, %v3500
    %v4093 = vpack.c.b16 %v3517, %v3501
    %v4094 = vpack.c.b16 %v3518, %v3502
    %v4095 = vpack.c.b16 %v3519, %v3503
    %v4096 = vpack.c.b16 %v3520, %v3504
    %v4097 = vpack.c.b16 %v3521, %v3505
    %v4098 = vpack.c.b16 %v3522, %v3506
    %v4099 = vpack.c.b16 %v3523, %v3507
    %v4100 = vpack.c.b16 %v3524, %v3508
    %v4101 = vpack.c.b16 %v3525, %v3509
    %v4102 = vpack.c.b16 %v3542, %v3526
    %v4103 = vpack.c.b16 %v3543, %v3527
    %v4104 = vpack.c.b16 %v3544, %v3528
    %v4105 = vpack.c.b16 %v3545, %v3529
    %v4106 = vpack.c.b16 %v3546, %v3530
    %v4107 = vpack.c.b16 %v3547, %v3531
    %v4108 = vpack.c.b16 %v3548, %v3532
    %v4109 = vpack.c.b16 %v3549, %v3533
    %v4110 = vpack.c.b16 %v3550, %v3534
    %v4111 = vpack.c.b16 %v3551, %v3535
    %v4112 = vpack.c.b16 %v3552, %v3536
    %v4113 = vpack.c.b16 %v3553, %v3537
    %v4114 = vpack.c.b16 %v3554, %v3538
    %v4115 = vpack.c.b16 %v3555, %v3539
    %v4116 = vpack.c.b16 %v3556, %v3540
    %v4117 = vpack.c.b16 %v3557, %v3541
    %v4118 = vpack.c.b16 %v3574, %v3558
    %v4119 = vpack.c.b16 %v3575, %v3559
    %v4120 = vpack.c.b16 %v3576, %v3560
    %v4121 = vpack.c.b16 %v3577, %v3561
    %v4122 = vpack.c.b16 %v3578, %v3562
    %v4123 = vpack.c.b16 %v3579, %v3563
    %v4124 = vpack.c.b16 %v3580, %v3564
    %v4125 = vpack.c.b16 %v3581, %v3565
    %v4126 = vpack.c.b16 %v3582, %v3566
    %v4127 = vpack.c.b16 %v3583, %v3567
    %v4128 = vpack.c.b16 %v3584, %v3568
    %v4129 = vpack.c.b16 %v3585, %v3569
    %v4130 = vpack.c.b16 %v3586, %v3570
    %v4131 = vpack.c.b16 %v3587, %v3571
    %v4132 = vpack.c.b16 %v3588, %v3572
    %v4133 = vpack.c.b16 %v3589, %v3573
    %v4134 = vpack.c.b16 %v3606, %v3590
    %v4135 = vpack.c.b16 %v3607, %v3591
    %v4136 = vpack.c.b16 %v3608, %v3592
    %v4137 = vpack.c.b16 %v3609, %v3593
    %v4138 = vpack.c.b16 %v3610, %v3594
    %v4139 = vpack.c.b16 %v3611, %v3595
    %v4140 = vpack.c.b16 %v3612, %v3596
    %v4141 = vpack.c.b16 %v3613, %v3597
    %v4142 = vpack.c.b16 %v3614, %v3598
    %v4143 = vpack.c.b16 %v3615, %v3599
    %v4144 = vpack.c.b16 %v3616, %v3600
    %v4145 = vpack.c.b16 %v3617, %v3601
    %v4146 = vpack.c.b16 %v3618, %v3602
    %v4147 = vpack.c.b16 %v3619, %v3603
    %v4148 = vpack.c.b16 %v3620, %v3604
    %v4149 = vpack.c.b16 %v3621, %v3605
    %v4150 = vpack.c.b16 %v3638, %v3622
    %v4151 = vpack.c.b16 %v3639, %v3623
    %v4152 = vpack.c.b16 %v3640, %v3624
    %v4153 = vpack.c.b16 %v3641, %v3625
    %v4154 = vpack.c.b16 %v3642, %v3626
    %v4155 = vpack.c.b16 %v3643, %v3627
    %v4156 = vpack.c.b16 %v3644, %v3628
    %v4157 = vpack.c.b16 %v3645, %v3629
    %v4158 = vpack.c.b16 %v3646, %v3630
    %v4159 = vpack.c.b16 %v3647, %v3631
    %v4160 = vpack.c.b16 %v3648, %v3632
    %v4161 = vpack.c.b16 %v3649, %v3633
    %v4162 = vpack.c.b16 %v3650, %v3634
    %v4163 = vpack.c.b16 %v3651, %v3635
    %v4164 = vpack.c.b16 %v3652, %v3636
    %v4165 = vpack.c.b16 %v3653, %v3637
    %4678 = vmatpush.bf16.msra.mxu0 %v3766
    %4679 = vmatpush.bf16.msra.mxu0 %v3750
    %4680 = vmatpush.bf16.msra.mxu0 %v3734
    %4681 = vmatpush.bf16.msra.mxu0 %v3718
    %4682 = vmatpush.bf16.msra.mxu0 %v3702
    %4683 = vmatpush.bf16.msra.mxu0 %v3686
    %4684 = vmatpush.bf16.msra.mxu0 %v3670
    %4685 = vmatpush.bf16.msra.mxu0 %v3654
    %4686 = vmatmul.bf16.gmra.mxu0 %v2080
    %v4687 = vpop.f32.mrf.mxu0
    %v4688 = vadd.f32 %v2086, %v4687
    %v4689 = vpop.f32.mrf.mxu0
    %4690 = vdwg.mxu0
    %4691 = vmatpush.bf16.msra.mxu0 %v3894
    %4692 = vmatpush.bf16.msra.mxu0 %v3878
    %4693 = vmatpush.bf16.msra.mxu0 %v3862
    %4694 = vmatpush.bf16.msra.mxu0 %v3846
    %4695 = vmatpush.bf16.msra.mxu0 %v3830
    %4696 = vmatpush.bf16.msra.mxu0 %v3814
    %4697 = vmatpush.bf16.msra.mxu0 %v3798
    %4698 = vmatpush.bf16.msra.mxu0 %v3782
    %4699 = vmatmul.bf16.gmra.mxu0 %v2081
    %v4700 = vpop.f32.mrf.mxu0
    %v4701 = vadd.f32 %v4688, %v4700
    %v4702 = vpop.f32.mrf.mxu0
    %4703 = vdwg.mxu0
    %4704 = vmatpush.bf16.msra.mxu0 %v4022
    %4705 = vmatpush.bf16.msra.mxu0 %v4006
    %4706 = vmatpush.bf16.msra.mxu0 %v3990
    %4707 = vmatpush.bf16.msra.mxu0 %v3974
    %4708 = vmatpush.bf16.msra.mxu0 %v3958
    %4709 = vmatpush.bf16.msra.mxu0 %v3942
    %4710 = vmatpush.bf16.msra.mxu0 %v3926
    %4711 = vmatpush.bf16.msra.mxu0 %v3910
    %4712 = vmatmul.bf16.gmra.mxu0 %v2082
    %v4713 = vpop.f32.mrf.mxu0
    %v4714 = vadd.f32 %v4701, %v4713
    %v4715 = vpop.f32.mrf.mxu0
    %4716 = vdwg.mxu0
    %4717 = vmatpush.bf16.msra.mxu0 %v4150
    %4718 = vmatpush.bf16.msra.mxu0 %v4134
    %4719 = vmatpush.bf16.msra.mxu0 %v4118
    %4720 = vmatpush.bf16.msra.mxu0 %v4102
    %4721 = vmatpush.bf16.msra.mxu0 %v4086
    %4722 = vmatpush.bf16.msra.mxu0 %v4070
    %4723 = vmatpush.bf16.msra.mxu0 %v4054
    %4724 = vmatpush.bf16.msra.mxu0 %v4038
    %4725 = vmatmul.bf16.gmra.mxu0 %v2083
    %v4726 = vpop.f32.mrf.mxu0
    %v4727 = vadd.f32 %v4714, %v4726
    %v4728 = vpop.f32.mrf.mxu0
    %4729 = vdwg.mxu0
    %4730 = vmatpush.bf16.msra.mxu0 %v3767
    %4731 = vmatpush.bf16.msra.mxu0 %v3751
    %4732 = vmatpush.bf16.msra.mxu0 %v3735
    %4733 = vmatpush.bf16.msra.mxu0 %v3719
    %4734 = vmatpush.bf16.msra.mxu0 %v3703
    %4735 = vmatpush.bf16.msra.mxu0 %v3687
    %4736 = vmatpush.bf16.msra.mxu0 %v3671
    %4737 = vmatpush.bf16.msra.mxu0 %v3655
    %4738 = vmatmul.bf16.gmra.mxu0 %v2080
    %v4739 = vpop.f32.mrf.mxu0
    %v4740 = vadd.f32 %v2087, %v4739
    %v4741 = vpop.f32.mrf.mxu0
    %4742 = vdwg.mxu0
    %4743 = vmatpush.bf16.msra.mxu0 %v3895
    %4744 = vmatpush.bf16.msra.mxu0 %v3879
    %4745 = vmatpush.bf16.msra.mxu0 %v3863
    %4746 = vmatpush.bf16.msra.mxu0 %v3847
    %4747 = vmatpush.bf16.msra.mxu0 %v3831
    %4748 = vmatpush.bf16.msra.mxu0 %v3815
    %4749 = vmatpush.bf16.msra.mxu0 %v3799
    %4750 = vmatpush.bf16.msra.mxu0 %v3783
    %4751 = vmatmul.bf16.gmra.mxu0 %v2081
    %v4752 = vpop.f32.mrf.mxu0
    %v4753 = vadd.f32 %v4740, %v4752
    %v4754 = vpop.f32.mrf.mxu0
    %4755 = vdwg.mxu0
    %4756 = vmatpush.bf16.msra.mxu0 %v4023
    %4757 = vmatpush.bf16.msra.mxu0 %v4007
    %4758 = vmatpush.bf16.msra.mxu0 %v3991
    %4759 = vmatpush.bf16.msra.mxu0 %v3975
    %4760 = vmatpush.bf16.msra.mxu0 %v3959
    %4761 = vmatpush.bf16.msra.mxu0 %v3943
    %4762 = vmatpush.bf16.msra.mxu0 %v3927
    %4763 = vmatpush.bf16.msra.mxu0 %v3911
    %4764 = vmatmul.bf16.gmra.mxu0 %v2082
    %v4765 = vpop.f32.mrf.mxu0
    %v4766 = vadd.f32 %v4753, %v4765
    %v4767 = vpop.f32.mrf.mxu0
    %4768 = vdwg.mxu0
    %4769 = vmatpush.bf16.msra.mxu0 %v4151
    %4770 = vmatpush.bf16.msra.mxu0 %v4135
    %4771 = vmatpush.bf16.msra.mxu0 %v4119
    %4772 = vmatpush.bf16.msra.mxu0 %v4103
    %4773 = vmatpush.bf16.msra.mxu0 %v4087
    %4774 = vmatpush.bf16.msra.mxu0 %v4071
    %4775 = vmatpush.bf16.msra.mxu0 %v4055
    %4776 = vmatpush.bf16.msra.mxu0 %v4039
    %4777 = vmatmul.bf16.gmra.mxu0 %v2083
    %v4778 = vpop.f32.mrf.mxu0
    %v4779 = vadd.f32 %v4766, %v4778
    %v4780 = vpop.f32.mrf.mxu0
    %4781 = vdwg.mxu0
    %4782 = vmatpush.bf16.msra.mxu0 %v3768
    %4783 = vmatpush.bf16.msra.mxu0 %v3752
    %4784 = vmatpush.bf16.msra.mxu0 %v3736
    %4785 = vmatpush.bf16.msra.mxu0 %v3720
    %4786 = vmatpush.bf16.msra.mxu0 %v3704
    %4787 = vmatpush.bf16.msra.mxu0 %v3688
    %4788 = vmatpush.bf16.msra.mxu0 %v3672
    %4789 = vmatpush.bf16.msra.mxu0 %v3656
    %4790 = vmatmul.bf16.gmra.mxu0 %v2080
    %v4791 = vpop.f32.mrf.mxu0
    %v4792 = vadd.f32 %v2088, %v4791
    %v4793 = vpop.f32.mrf.mxu0
    %4794 = vdwg.mxu0
    %4795 = vmatpush.bf16.msra.mxu0 %v3896
    %4796 = vmatpush.bf16.msra.mxu0 %v3880
    %4797 = vmatpush.bf16.msra.mxu0 %v3864
    %4798 = vmatpush.bf16.msra.mxu0 %v3848
    %4799 = vmatpush.bf16.msra.mxu0 %v3832
    %4800 = vmatpush.bf16.msra.mxu0 %v3816
    %4801 = vmatpush.bf16.msra.mxu0 %v3800
    %4802 = vmatpush.bf16.msra.mxu0 %v3784
    %4803 = vmatmul.bf16.gmra.mxu0 %v2081
    %v4804 = vpop.f32.mrf.mxu0
    %v4805 = vadd.f32 %v4792, %v4804
    %v4806 = vpop.f32.mrf.mxu0
    %4807 = vdwg.mxu0
    %4808 = vmatpush.bf16.msra.mxu0 %v4024
    %4809 = vmatpush.bf16.msra.mxu0 %v4008
    %4810 = vmatpush.bf16.msra.mxu0 %v3992
    %4811 = vmatpush.bf16.msra.mxu0 %v3976
    %4812 = vmatpush.bf16.msra.mxu0 %v3960
    %4813 = vmatpush.bf16.msra.mxu0 %v3944
    %4814 = vmatpush.bf16.msra.mxu0 %v3928
    %4815 = vmatpush.bf16.msra.mxu0 %v3912
    %4816 = vmatmul.bf16.gmra.mxu0 %v2082
    %v4817 = vpop.f32.mrf.mxu0
    %v4818 = vadd.f32 %v4805, %v4817
    %v4819 = vpop.f32.mrf.mxu0
    %4820 = vdwg.mxu0
    %4821 = vmatpush.bf16.msra.mxu0 %v4152
    %4822 = vmatpush.bf16.msra.mxu0 %v4136
    %4823 = vmatpush.bf16.msra.mxu0 %v4120
    %4824 = vmatpush.bf16.msra.mxu0 %v4104
    %4825 = vmatpush.bf16.msra.mxu0 %v4088
    %4826 = vmatpush.bf16.msra.mxu0 %v4072
    %4827 = vmatpush.bf16.msra.mxu0 %v4056
    %4828 = vmatpush.bf16.msra.mxu0 %v4040
    %4829 = vmatmul.bf16.gmra.mxu0 %v2083
    %v4830 = vpop.f32.mrf.mxu0
    %v4831 = vadd.f32 %v4818, %v4830
    %v4832 = vpop.f32.mrf.mxu0
    %4833 = vdwg.mxu0
    %4834 = vmatpush.bf16.msra.mxu0 %v3769
    %4835 = vmatpush.bf16.msra.mxu0 %v3753
    %4836 = vmatpush.bf16.msra.mxu0 %v3737
    %4837 = vmatpush.bf16.msra.mxu0 %v3721
    %4838 = vmatpush.bf16.msra.mxu0 %v3705
    %4839 = vmatpush.bf16.msra.mxu0 %v3689
    %4840 = vmatpush.bf16.msra.mxu0 %v3673
    %4841 = vmatpush.bf16.msra.mxu0 %v3657
    %4842 = vmatmul.bf16.gmra.mxu0 %v2080
    %v4843 = vpop.f32.mrf.mxu0
    %v4844 = vadd.f32 %v2089, %v4843
    %v4845 = vpop.f32.mrf.mxu0
    %4846 = vdwg.mxu0
    %4847 = vmatpush.bf16.msra.mxu0 %v3897
    %4848 = vmatpush.bf16.msra.mxu0 %v3881
    %4849 = vmatpush.bf16.msra.mxu0 %v3865
    %4850 = vmatpush.bf16.msra.mxu0 %v3849
    %4851 = vmatpush.bf16.msra.mxu0 %v3833
    %4852 = vmatpush.bf16.msra.mxu0 %v3817
    %4853 = vmatpush.bf16.msra.mxu0 %v3801
    %4854 = vmatpush.bf16.msra.mxu0 %v3785
    %4855 = vmatmul.bf16.gmra.mxu0 %v2081
    %v4856 = vpop.f32.mrf.mxu0
    %v4857 = vadd.f32 %v4844, %v4856
    %v4858 = vpop.f32.mrf.mxu0
    %4859 = vdwg.mxu0
    %4860 = vmatpush.bf16.msra.mxu0 %v4025
    %4861 = vmatpush.bf16.msra.mxu0 %v4009
    %4862 = vmatpush.bf16.msra.mxu0 %v3993
    %4863 = vmatpush.bf16.msra.mxu0 %v3977
    %4864 = vmatpush.bf16.msra.mxu0 %v3961
    %4865 = vmatpush.bf16.msra.mxu0 %v3945
    %4866 = vmatpush.bf16.msra.mxu0 %v3929
    %4867 = vmatpush.bf16.msra.mxu0 %v3913
    %4868 = vmatmul.bf16.gmra.mxu0 %v2082
    %v4869 = vpop.f32.mrf.mxu0
    %v4870 = vadd.f32 %v4857, %v4869
    %v4871 = vpop.f32.mrf.mxu0
    %4872 = vdwg.mxu0
    %4873 = vmatpush.bf16.msra.mxu0 %v4153
    %4874 = vmatpush.bf16.msra.mxu0 %v4137
    %4875 = vmatpush.bf16.msra.mxu0 %v4121
    %4876 = vmatpush.bf16.msra.mxu0 %v4105
    %4877 = vmatpush.bf16.msra.mxu0 %v4089
    %4878 = vmatpush.bf16.msra.mxu0 %v4073
    %4879 = vmatpush.bf16.msra.mxu0 %v4057
    %4880 = vmatpush.bf16.msra.mxu0 %v4041
    %4881 = vmatmul.bf16.gmra.mxu0 %v2083
    %v4882 = vpop.f32.mrf.mxu0
    %v4883 = vadd.f32 %v4870, %v4882
    %v4884 = vpop.f32.mrf.mxu0
    %4885 = vdwg.mxu0
    %4886 = vmatpush.bf16.msra.mxu0 %v3770
    %4887 = vmatpush.bf16.msra.mxu0 %v3754
    %4888 = vmatpush.bf16.msra.mxu0 %v3738
    %4889 = vmatpush.bf16.msra.mxu0 %v3722
    %4890 = vmatpush.bf16.msra.mxu0 %v3706
    %4891 = vmatpush.bf16.msra.mxu0 %v3690
    %4892 = vmatpush.bf16.msra.mxu0 %v3674
    %4893 = vmatpush.bf16.msra.mxu0 %v3658
    %4894 = vmatmul.bf16.gmra.mxu0 %v2080
    %v4895 = vpop.f32.mrf.mxu0
    %v4896 = vadd.f32 %v2090, %v4895
    %v4897 = vpop.f32.mrf.mxu0
    %4898 = vdwg.mxu0
    %4899 = vmatpush.bf16.msra.mxu0 %v3898
    %4900 = vmatpush.bf16.msra.mxu0 %v3882
    %4901 = vmatpush.bf16.msra.mxu0 %v3866
    %4902 = vmatpush.bf16.msra.mxu0 %v3850
    %4903 = vmatpush.bf16.msra.mxu0 %v3834
    %4904 = vmatpush.bf16.msra.mxu0 %v3818
    %4905 = vmatpush.bf16.msra.mxu0 %v3802
    %4906 = vmatpush.bf16.msra.mxu0 %v3786
    %4907 = vmatmul.bf16.gmra.mxu0 %v2081
    %v4908 = vpop.f32.mrf.mxu0
    %v4909 = vadd.f32 %v4896, %v4908
    %v4910 = vpop.f32.mrf.mxu0
    %4911 = vdwg.mxu0
    %4912 = vmatpush.bf16.msra.mxu0 %v4026
    %4913 = vmatpush.bf16.msra.mxu0 %v4010
    %4914 = vmatpush.bf16.msra.mxu0 %v3994
    %4915 = vmatpush.bf16.msra.mxu0 %v3978
    %4916 = vmatpush.bf16.msra.mxu0 %v3962
    %4917 = vmatpush.bf16.msra.mxu0 %v3946
    %4918 = vmatpush.bf16.msra.mxu0 %v3930
    %4919 = vmatpush.bf16.msra.mxu0 %v3914
    %4920 = vmatmul.bf16.gmra.mxu0 %v2082
    %v4921 = vpop.f32.mrf.mxu0
    %v4922 = vadd.f32 %v4909, %v4921
    %v4923 = vpop.f32.mrf.mxu0
    %4924 = vdwg.mxu0
    %4925 = vmatpush.bf16.msra.mxu0 %v4154
    %4926 = vmatpush.bf16.msra.mxu0 %v4138
    %4927 = vmatpush.bf16.msra.mxu0 %v4122
    %4928 = vmatpush.bf16.msra.mxu0 %v4106
    %4929 = vmatpush.bf16.msra.mxu0 %v4090
    %4930 = vmatpush.bf16.msra.mxu0 %v4074
    %4931 = vmatpush.bf16.msra.mxu0 %v4058
    %4932 = vmatpush.bf16.msra.mxu0 %v4042
    %4933 = vmatmul.bf16.gmra.mxu0 %v2083
    %v4934 = vpop.f32.mrf.mxu0
    %v4935 = vadd.f32 %v4922, %v4934
    %v4936 = vpop.f32.mrf.mxu0
    %4937 = vdwg.mxu0
    %4938 = vmatpush.bf16.msra.mxu0 %v3771
    %4939 = vmatpush.bf16.msra.mxu0 %v3755
    %4940 = vmatpush.bf16.msra.mxu0 %v3739
    %4941 = vmatpush.bf16.msra.mxu0 %v3723
    %4942 = vmatpush.bf16.msra.mxu0 %v3707
    %4943 = vmatpush.bf16.msra.mxu0 %v3691
    %4944 = vmatpush.bf16.msra.mxu0 %v3675
    %4945 = vmatpush.bf16.msra.mxu0 %v3659
    %4946 = vmatmul.bf16.gmra.mxu0 %v2080
    %v4947 = vpop.f32.mrf.mxu0
    %v4948 = vadd.f32 %v2091, %v4947
    %v4949 = vpop.f32.mrf.mxu0
    %4950 = vdwg.mxu0
    %4951 = vmatpush.bf16.msra.mxu0 %v3899
    %4952 = vmatpush.bf16.msra.mxu0 %v3883
    %4953 = vmatpush.bf16.msra.mxu0 %v3867
    %4954 = vmatpush.bf16.msra.mxu0 %v3851
    %4955 = vmatpush.bf16.msra.mxu0 %v3835
    %4956 = vmatpush.bf16.msra.mxu0 %v3819
    %4957 = vmatpush.bf16.msra.mxu0 %v3803
    %4958 = vmatpush.bf16.msra.mxu0 %v3787
    %4959 = vmatmul.bf16.gmra.mxu0 %v2081
    %v4960 = vpop.f32.mrf.mxu0
    %v4961 = vadd.f32 %v4948, %v4960
    %v4962 = vpop.f32.mrf.mxu0
    %4963 = vdwg.mxu0
    %4964 = vmatpush.bf16.msra.mxu0 %v4027
    %4965 = vmatpush.bf16.msra.mxu0 %v4011
    %4966 = vmatpush.bf16.msra.mxu0 %v3995
    %4967 = vmatpush.bf16.msra.mxu0 %v3979
    %4968 = vmatpush.bf16.msra.mxu0 %v3963
    %4969 = vmatpush.bf16.msra.mxu0 %v3947
    %4970 = vmatpush.bf16.msra.mxu0 %v3931
    %4971 = vmatpush.bf16.msra.mxu0 %v3915
    %4972 = vmatmul.bf16.gmra.mxu0 %v2082
    %v4973 = vpop.f32.mrf.mxu0
    %v4974 = vadd.f32 %v4961, %v4973
    %v4975 = vpop.f32.mrf.mxu0
    %4976 = vdwg.mxu0
    %4977 = vmatpush.bf16.msra.mxu0 %v4155
    %4978 = vmatpush.bf16.msra.mxu0 %v4139
    %4979 = vmatpush.bf16.msra.mxu0 %v4123
    %4980 = vmatpush.bf16.msra.mxu0 %v4107
    %4981 = vmatpush.bf16.msra.mxu0 %v4091
    %4982 = vmatpush.bf16.msra.mxu0 %v4075
    %4983 = vmatpush.bf16.msra.mxu0 %v4059
    %4984 = vmatpush.bf16.msra.mxu0 %v4043
    %4985 = vmatmul.bf16.gmra.mxu0 %v2083
    %v4986 = vpop.f32.mrf.mxu0
    %v4987 = vadd.f32 %v4974, %v4986
    %v4988 = vpop.f32.mrf.mxu0
    %4989 = vdwg.mxu0
    %4990 = vmatpush.bf16.msra.mxu0 %v3772
    %4991 = vmatpush.bf16.msra.mxu0 %v3756
    %4992 = vmatpush.bf16.msra.mxu0 %v3740
    %4993 = vmatpush.bf16.msra.mxu0 %v3724
    %4994 = vmatpush.bf16.msra.mxu0 %v3708
    %4995 = vmatpush.bf16.msra.mxu0 %v3692
    %4996 = vmatpush.bf16.msra.mxu0 %v3676
    %4997 = vmatpush.bf16.msra.mxu0 %v3660
    %4998 = vmatmul.bf16.gmra.mxu0 %v2080
    %v4999 = vpop.f32.mrf.mxu0
    %v5000 = vadd.f32 %v2092, %v4999
    %v5001 = vpop.f32.mrf.mxu0
    %5002 = vdwg.mxu0
    %5003 = vmatpush.bf16.msra.mxu0 %v3900
    %5004 = vmatpush.bf16.msra.mxu0 %v3884
    %5005 = vmatpush.bf16.msra.mxu0 %v3868
    %5006 = vmatpush.bf16.msra.mxu0 %v3852
    %5007 = vmatpush.bf16.msra.mxu0 %v3836
    %5008 = vmatpush.bf16.msra.mxu0 %v3820
    %5009 = vmatpush.bf16.msra.mxu0 %v3804
    %5010 = vmatpush.bf16.msra.mxu0 %v3788
    %5011 = vmatmul.bf16.gmra.mxu0 %v2081
    %v5012 = vpop.f32.mrf.mxu0
    %v5013 = vadd.f32 %v5000, %v5012
    %v5014 = vpop.f32.mrf.mxu0
    %5015 = vdwg.mxu0
    %5016 = vmatpush.bf16.msra.mxu0 %v4028
    %5017 = vmatpush.bf16.msra.mxu0 %v4012
    %5018 = vmatpush.bf16.msra.mxu0 %v3996
    %5019 = vmatpush.bf16.msra.mxu0 %v3980
    %5020 = vmatpush.bf16.msra.mxu0 %v3964
    %5021 = vmatpush.bf16.msra.mxu0 %v3948
    %5022 = vmatpush.bf16.msra.mxu0 %v3932
    %5023 = vmatpush.bf16.msra.mxu0 %v3916
    %5024 = vmatmul.bf16.gmra.mxu0 %v2082
    %v5025 = vpop.f32.mrf.mxu0
    %v5026 = vadd.f32 %v5013, %v5025
    %v5027 = vpop.f32.mrf.mxu0
    %5028 = vdwg.mxu0
    %5029 = vmatpush.bf16.msra.mxu0 %v4156
    %5030 = vmatpush.bf16.msra.mxu0 %v4140
    %5031 = vmatpush.bf16.msra.mxu0 %v4124
    %5032 = vmatpush.bf16.msra.mxu0 %v4108
    %5033 = vmatpush.bf16.msra.mxu0 %v4092
    %5034 = vmatpush.bf16.msra.mxu0 %v4076
    %5035 = vmatpush.bf16.msra.mxu0 %v4060
    %5036 = vmatpush.bf16.msra.mxu0 %v4044
    %5037 = vmatmul.bf16.gmra.mxu0 %v2083
    %v5038 = vpop.f32.mrf.mxu0
    %v5039 = vadd.f32 %v5026, %v5038
    %v5040 = vpop.f32.mrf.mxu0
    %5041 = vdwg.mxu0
    %5042 = vmatpush.bf16.msra.mxu0 %v3773
    %5043 = vmatpush.bf16.msra.mxu0 %v3757
    %5044 = vmatpush.bf16.msra.mxu0 %v3741
    %5045 = vmatpush.bf16.msra.mxu0 %v3725
    %5046 = vmatpush.bf16.msra.mxu0 %v3709
    %5047 = vmatpush.bf16.msra.mxu0 %v3693
    %5048 = vmatpush.bf16.msra.mxu0 %v3677
    %5049 = vmatpush.bf16.msra.mxu0 %v3661
    %5050 = vmatmul.bf16.gmra.mxu0 %v2080
    %v5051 = vpop.f32.mrf.mxu0
    %v5052 = vadd.f32 %v2093, %v5051
    %v5053 = vpop.f32.mrf.mxu0
    %5054 = vdwg.mxu0
    %5055 = vmatpush.bf16.msra.mxu0 %v3901
    %5056 = vmatpush.bf16.msra.mxu0 %v3885
    %5057 = vmatpush.bf16.msra.mxu0 %v3869
    %5058 = vmatpush.bf16.msra.mxu0 %v3853
    %5059 = vmatpush.bf16.msra.mxu0 %v3837
    %5060 = vmatpush.bf16.msra.mxu0 %v3821
    %5061 = vmatpush.bf16.msra.mxu0 %v3805
    %5062 = vmatpush.bf16.msra.mxu0 %v3789
    %5063 = vmatmul.bf16.gmra.mxu0 %v2081
    %v5064 = vpop.f32.mrf.mxu0
    %v5065 = vadd.f32 %v5052, %v5064
    %v5066 = vpop.f32.mrf.mxu0
    %5067 = vdwg.mxu0
    %5068 = vmatpush.bf16.msra.mxu0 %v4029
    %5069 = vmatpush.bf16.msra.mxu0 %v4013
    %5070 = vmatpush.bf16.msra.mxu0 %v3997
    %5071 = vmatpush.bf16.msra.mxu0 %v3981
    %5072 = vmatpush.bf16.msra.mxu0 %v3965
    %5073 = vmatpush.bf16.msra.mxu0 %v3949
    %5074 = vmatpush.bf16.msra.mxu0 %v3933
    %5075 = vmatpush.bf16.msra.mxu0 %v3917
    %5076 = vmatmul.bf16.gmra.mxu0 %v2082
    %v5077 = vpop.f32.mrf.mxu0
    %v5078 = vadd.f32 %v5065, %v5077
    %v5079 = vpop.f32.mrf.mxu0
    %5080 = vdwg.mxu0
    %5081 = vmatpush.bf16.msra.mxu0 %v4157
    %5082 = vmatpush.bf16.msra.mxu0 %v4141
    %5083 = vmatpush.bf16.msra.mxu0 %v4125
    %5084 = vmatpush.bf16.msra.mxu0 %v4109
    %5085 = vmatpush.bf16.msra.mxu0 %v4093
    %5086 = vmatpush.bf16.msra.mxu0 %v4077
    %5087 = vmatpush.bf16.msra.mxu0 %v4061
    %5088 = vmatpush.bf16.msra.mxu0 %v4045
    %5089 = vmatmul.bf16.gmra.mxu0 %v2083
    %v5090 = vpop.f32.mrf.mxu0
    %v5091 = vadd.f32 %v5078, %v5090
    %v5092 = vpop.f32.mrf.mxu0
    %5093 = vdwg.mxu0
    %5094 = vmatpush.bf16.msra.mxu0 %v3774
    %5095 = vmatpush.bf16.msra.mxu0 %v3758
    %5096 = vmatpush.bf16.msra.mxu0 %v3742
    %5097 = vmatpush.bf16.msra.mxu0 %v3726
    %5098 = vmatpush.bf16.msra.mxu0 %v3710
    %5099 = vmatpush.bf16.msra.mxu0 %v3694
    %5100 = vmatpush.bf16.msra.mxu0 %v3678
    %5101 = vmatpush.bf16.msra.mxu0 %v3662
    %5102 = vmatmul.bf16.gmra.mxu0 %v2080
    %v5103 = vpop.f32.mrf.mxu0
    %v5104 = vadd.f32 %v2094, %v5103
    %v5105 = vpop.f32.mrf.mxu0
    %5106 = vdwg.mxu0
    %5107 = vmatpush.bf16.msra.mxu0 %v3902
    %5108 = vmatpush.bf16.msra.mxu0 %v3886
    %5109 = vmatpush.bf16.msra.mxu0 %v3870
    %5110 = vmatpush.bf16.msra.mxu0 %v3854
    %5111 = vmatpush.bf16.msra.mxu0 %v3838
    %5112 = vmatpush.bf16.msra.mxu0 %v3822
    %5113 = vmatpush.bf16.msra.mxu0 %v3806
    %5114 = vmatpush.bf16.msra.mxu0 %v3790
    %5115 = vmatmul.bf16.gmra.mxu0 %v2081
    %v5116 = vpop.f32.mrf.mxu0
    %v5117 = vadd.f32 %v5104, %v5116
    %v5118 = vpop.f32.mrf.mxu0
    %5119 = vdwg.mxu0
    %5120 = vmatpush.bf16.msra.mxu0 %v4030
    %5121 = vmatpush.bf16.msra.mxu0 %v4014
    %5122 = vmatpush.bf16.msra.mxu0 %v3998
    %5123 = vmatpush.bf16.msra.mxu0 %v3982
    %5124 = vmatpush.bf16.msra.mxu0 %v3966
    %5125 = vmatpush.bf16.msra.mxu0 %v3950
    %5126 = vmatpush.bf16.msra.mxu0 %v3934
    %5127 = vmatpush.bf16.msra.mxu0 %v3918
    %5128 = vmatmul.bf16.gmra.mxu0 %v2082
    %v5129 = vpop.f32.mrf.mxu0
    %v5130 = vadd.f32 %v5117, %v5129
    %v5131 = vpop.f32.mrf.mxu0
    %5132 = vdwg.mxu0
    %5133 = vmatpush.bf16.msra.mxu0 %v4158
    %5134 = vmatpush.bf16.msra.mxu0 %v4142
    %5135 = vmatpush.bf16.msra.mxu0 %v4126
    %5136 = vmatpush.bf16.msra.mxu0 %v4110
    %5137 = vmatpush.bf16.msra.mxu0 %v4094
    %5138 = vmatpush.bf16.msra.mxu0 %v4078
    %5139 = vmatpush.bf16.msra.mxu0 %v4062
    %5140 = vmatpush.bf16.msra.mxu0 %v4046
    %5141 = vmatmul.bf16.gmra.mxu0 %v2083
    %v5142 = vpop.f32.mrf.mxu0
    %v5143 = vadd.f32 %v5130, %v5142
    %v5144 = vpop.f32.mrf.mxu0
    %5145 = vdwg.mxu0
    %5146 = vmatpush.bf16.msra.mxu0 %v3775
    %5147 = vmatpush.bf16.msra.mxu0 %v3759
    %5148 = vmatpush.bf16.msra.mxu0 %v3743
    %5149 = vmatpush.bf16.msra.mxu0 %v3727
    %5150 = vmatpush.bf16.msra.mxu0 %v3711
    %5151 = vmatpush.bf16.msra.mxu0 %v3695
    %5152 = vmatpush.bf16.msra.mxu0 %v3679
    %5153 = vmatpush.bf16.msra.mxu0 %v3663
    %5154 = vmatmul.bf16.gmra.mxu0 %v2080
    %v5155 = vpop.f32.mrf.mxu0
    %v5156 = vadd.f32 %v2095, %v5155
    %v5157 = vpop.f32.mrf.mxu0
    %5158 = vdwg.mxu0
    %5159 = vmatpush.bf16.msra.mxu0 %v3903
    %5160 = vmatpush.bf16.msra.mxu0 %v3887
    %5161 = vmatpush.bf16.msra.mxu0 %v3871
    %5162 = vmatpush.bf16.msra.mxu0 %v3855
    %5163 = vmatpush.bf16.msra.mxu0 %v3839
    %5164 = vmatpush.bf16.msra.mxu0 %v3823
    %5165 = vmatpush.bf16.msra.mxu0 %v3807
    %5166 = vmatpush.bf16.msra.mxu0 %v3791
    %5167 = vmatmul.bf16.gmra.mxu0 %v2081
    %v5168 = vpop.f32.mrf.mxu0
    %v5169 = vadd.f32 %v5156, %v5168
    %v5170 = vpop.f32.mrf.mxu0
    %5171 = vdwg.mxu0
    %5172 = vmatpush.bf16.msra.mxu0 %v4031
    %5173 = vmatpush.bf16.msra.mxu0 %v4015
    %5174 = vmatpush.bf16.msra.mxu0 %v3999
    %5175 = vmatpush.bf16.msra.mxu0 %v3983
    %5176 = vmatpush.bf16.msra.mxu0 %v3967
    %5177 = vmatpush.bf16.msra.mxu0 %v3951
    %5178 = vmatpush.bf16.msra.mxu0 %v3935
    %5179 = vmatpush.bf16.msra.mxu0 %v3919
    %5180 = vmatmul.bf16.gmra.mxu0 %v2082
    %v5181 = vpop.f32.mrf.mxu0
    %v5182 = vadd.f32 %v5169, %v5181
    %v5183 = vpop.f32.mrf.mxu0
    %5184 = vdwg.mxu0
    %5185 = vmatpush.bf16.msra.mxu0 %v4159
    %5186 = vmatpush.bf16.msra.mxu0 %v4143
    %5187 = vmatpush.bf16.msra.mxu0 %v4127
    %5188 = vmatpush.bf16.msra.mxu0 %v4111
    %5189 = vmatpush.bf16.msra.mxu0 %v4095
    %5190 = vmatpush.bf16.msra.mxu0 %v4079
    %5191 = vmatpush.bf16.msra.mxu0 %v4063
    %5192 = vmatpush.bf16.msra.mxu0 %v4047
    %5193 = vmatmul.bf16.gmra.mxu0 %v2083
    %v5194 = vpop.f32.mrf.mxu0
    %v5195 = vadd.f32 %v5182, %v5194
    %v5196 = vpop.f32.mrf.mxu0
    %5197 = vdwg.mxu0
    %5198 = vmatpush.bf16.msra.mxu0 %v3776
    %5199 = vmatpush.bf16.msra.mxu0 %v3760
    %5200 = vmatpush.bf16.msra.mxu0 %v3744
    %5201 = vmatpush.bf16.msra.mxu0 %v3728
    %5202 = vmatpush.bf16.msra.mxu0 %v3712
    %5203 = vmatpush.bf16.msra.mxu0 %v3696
    %5204 = vmatpush.bf16.msra.mxu0 %v3680
    %5205 = vmatpush.bf16.msra.mxu0 %v3664
    %5206 = vmatmul.bf16.gmra.mxu0 %v2080
    %v5207 = vpop.f32.mrf.mxu0
    %v5208 = vadd.f32 %v2096, %v5207
    %v5209 = vpop.f32.mrf.mxu0
    %5210 = vdwg.mxu0
    %5211 = vmatpush.bf16.msra.mxu0 %v3904
    %5212 = vmatpush.bf16.msra.mxu0 %v3888
    %5213 = vmatpush.bf16.msra.mxu0 %v3872
    %5214 = vmatpush.bf16.msra.mxu0 %v3856
    %5215 = vmatpush.bf16.msra.mxu0 %v3840
    %5216 = vmatpush.bf16.msra.mxu0 %v3824
    %5217 = vmatpush.bf16.msra.mxu0 %v3808
    %5218 = vmatpush.bf16.msra.mxu0 %v3792
    %5219 = vmatmul.bf16.gmra.mxu0 %v2081
    %v5220 = vpop.f32.mrf.mxu0
    %v5221 = vadd.f32 %v5208, %v5220
    %v5222 = vpop.f32.mrf.mxu0
    %5223 = vdwg.mxu0
    %5224 = vmatpush.bf16.msra.mxu0 %v4032
    %5225 = vmatpush.bf16.msra.mxu0 %v4016
    %5226 = vmatpush.bf16.msra.mxu0 %v4000
    %5227 = vmatpush.bf16.msra.mxu0 %v3984
    %5228 = vmatpush.bf16.msra.mxu0 %v3968
    %5229 = vmatpush.bf16.msra.mxu0 %v3952
    %5230 = vmatpush.bf16.msra.mxu0 %v3936
    %5231 = vmatpush.bf16.msra.mxu0 %v3920
    %5232 = vmatmul.bf16.gmra.mxu0 %v2082
    %v5233 = vpop.f32.mrf.mxu0
    %v5234 = vadd.f32 %v5221, %v5233
    %v5235 = vpop.f32.mrf.mxu0
    %5236 = vdwg.mxu0
    %5237 = vmatpush.bf16.msra.mxu0 %v4160
    %5238 = vmatpush.bf16.msra.mxu0 %v4144
    %5239 = vmatpush.bf16.msra.mxu0 %v4128
    %5240 = vmatpush.bf16.msra.mxu0 %v4112
    %5241 = vmatpush.bf16.msra.mxu0 %v4096
    %5242 = vmatpush.bf16.msra.mxu0 %v4080
    %5243 = vmatpush.bf16.msra.mxu0 %v4064
    %5244 = vmatpush.bf16.msra.mxu0 %v4048
    %5245 = vmatmul.bf16.gmra.mxu0 %v2083
    %v5246 = vpop.f32.mrf.mxu0
    %v5247 = vadd.f32 %v5234, %v5246
    %v5248 = vpop.f32.mrf.mxu0
    %5249 = vdwg.mxu0
    %5250 = vmatpush.bf16.msra.mxu0 %v3777
    %5251 = vmatpush.bf16.msra.mxu0 %v3761
    %5252 = vmatpush.bf16.msra.mxu0 %v3745
    %5253 = vmatpush.bf16.msra.mxu0 %v3729
    %5254 = vmatpush.bf16.msra.mxu0 %v3713
    %5255 = vmatpush.bf16.msra.mxu0 %v3697
    %5256 = vmatpush.bf16.msra.mxu0 %v3681
    %5257 = vmatpush.bf16.msra.mxu0 %v3665
    %5258 = vmatmul.bf16.gmra.mxu0 %v2080
    %v5259 = vpop.f32.mrf.mxu0
    %v5260 = vadd.f32 %v2097, %v5259
    %v5261 = vpop.f32.mrf.mxu0
    %5262 = vdwg.mxu0
    %5263 = vmatpush.bf16.msra.mxu0 %v3905
    %5264 = vmatpush.bf16.msra.mxu0 %v3889
    %5265 = vmatpush.bf16.msra.mxu0 %v3873
    %5266 = vmatpush.bf16.msra.mxu0 %v3857
    %5267 = vmatpush.bf16.msra.mxu0 %v3841
    %5268 = vmatpush.bf16.msra.mxu0 %v3825
    %5269 = vmatpush.bf16.msra.mxu0 %v3809
    %5270 = vmatpush.bf16.msra.mxu0 %v3793
    %5271 = vmatmul.bf16.gmra.mxu0 %v2081
    %v5272 = vpop.f32.mrf.mxu0
    %v5273 = vadd.f32 %v5260, %v5272
    %v5274 = vpop.f32.mrf.mxu0
    %5275 = vdwg.mxu0
    %5276 = vmatpush.bf16.msra.mxu0 %v4033
    %5277 = vmatpush.bf16.msra.mxu0 %v4017
    %5278 = vmatpush.bf16.msra.mxu0 %v4001
    %5279 = vmatpush.bf16.msra.mxu0 %v3985
    %5280 = vmatpush.bf16.msra.mxu0 %v3969
    %5281 = vmatpush.bf16.msra.mxu0 %v3953
    %5282 = vmatpush.bf16.msra.mxu0 %v3937
    %5283 = vmatpush.bf16.msra.mxu0 %v3921
    %5284 = vmatmul.bf16.gmra.mxu0 %v2082
    %v5285 = vpop.f32.mrf.mxu0
    %v5286 = vadd.f32 %v5273, %v5285
    %v5287 = vpop.f32.mrf.mxu0
    %5288 = vdwg.mxu0
    %5289 = vmatpush.bf16.msra.mxu0 %v4161
    %5290 = vmatpush.bf16.msra.mxu0 %v4145
    %5291 = vmatpush.bf16.msra.mxu0 %v4129
    %5292 = vmatpush.bf16.msra.mxu0 %v4113
    %5293 = vmatpush.bf16.msra.mxu0 %v4097
    %5294 = vmatpush.bf16.msra.mxu0 %v4081
    %5295 = vmatpush.bf16.msra.mxu0 %v4065
    %5296 = vmatpush.bf16.msra.mxu0 %v4049
    %5297 = vmatmul.bf16.gmra.mxu0 %v2083
    %v5298 = vpop.f32.mrf.mxu0
    %v5299 = vadd.f32 %v5286, %v5298
    %v5300 = vpop.f32.mrf.mxu0
    %5301 = vdwg.mxu0
    %5302 = vmatpush.bf16.msra.mxu0 %v3778
    %5303 = vmatpush.bf16.msra.mxu0 %v3762
    %5304 = vmatpush.bf16.msra.mxu0 %v3746
    %5305 = vmatpush.bf16.msra.mxu0 %v3730
    %5306 = vmatpush.bf16.msra.mxu0 %v3714
    %5307 = vmatpush.bf16.msra.mxu0 %v3698
    %5308 = vmatpush.bf16.msra.mxu0 %v3682
    %5309 = vmatpush.bf16.msra.mxu0 %v3666
    %5310 = vmatmul.bf16.gmra.mxu0 %v2080
    %v5311 = vpop.f32.mrf.mxu0
    %v5312 = vadd.f32 %v2098, %v5311
    %v5313 = vpop.f32.mrf.mxu0
    %5314 = vdwg.mxu0
    %5315 = vmatpush.bf16.msra.mxu0 %v3906
    %5316 = vmatpush.bf16.msra.mxu0 %v3890
    %5317 = vmatpush.bf16.msra.mxu0 %v3874
    %5318 = vmatpush.bf16.msra.mxu0 %v3858
    %5319 = vmatpush.bf16.msra.mxu0 %v3842
    %5320 = vmatpush.bf16.msra.mxu0 %v3826
    %5321 = vmatpush.bf16.msra.mxu0 %v3810
    %5322 = vmatpush.bf16.msra.mxu0 %v3794
    %5323 = vmatmul.bf16.gmra.mxu0 %v2081
    %v5324 = vpop.f32.mrf.mxu0
    %v5325 = vadd.f32 %v5312, %v5324
    %v5326 = vpop.f32.mrf.mxu0
    %5327 = vdwg.mxu0
    %5328 = vmatpush.bf16.msra.mxu0 %v4034
    %5329 = vmatpush.bf16.msra.mxu0 %v4018
    %5330 = vmatpush.bf16.msra.mxu0 %v4002
    %5331 = vmatpush.bf16.msra.mxu0 %v3986
    %5332 = vmatpush.bf16.msra.mxu0 %v3970
    %5333 = vmatpush.bf16.msra.mxu0 %v3954
    %5334 = vmatpush.bf16.msra.mxu0 %v3938
    %5335 = vmatpush.bf16.msra.mxu0 %v3922
    %5336 = vmatmul.bf16.gmra.mxu0 %v2082
    %v5337 = vpop.f32.mrf.mxu0
    %v5338 = vadd.f32 %v5325, %v5337
    %v5339 = vpop.f32.mrf.mxu0
    %5340 = vdwg.mxu0
    %5341 = vmatpush.bf16.msra.mxu0 %v4162
    %5342 = vmatpush.bf16.msra.mxu0 %v4146
    %5343 = vmatpush.bf16.msra.mxu0 %v4130
    %5344 = vmatpush.bf16.msra.mxu0 %v4114
    %5345 = vmatpush.bf16.msra.mxu0 %v4098
    %5346 = vmatpush.bf16.msra.mxu0 %v4082
    %5347 = vmatpush.bf16.msra.mxu0 %v4066
    %5348 = vmatpush.bf16.msra.mxu0 %v4050
    %5349 = vmatmul.bf16.gmra.mxu0 %v2083
    %v5350 = vpop.f32.mrf.mxu0
    %v5351 = vadd.f32 %v5338, %v5350
    %v5352 = vpop.f32.mrf.mxu0
    %5353 = vdwg.mxu0
    %5354 = vmatpush.bf16.msra.mxu0 %v3779
    %5355 = vmatpush.bf16.msra.mxu0 %v3763
    %5356 = vmatpush.bf16.msra.mxu0 %v3747
    %5357 = vmatpush.bf16.msra.mxu0 %v3731
    %5358 = vmatpush.bf16.msra.mxu0 %v3715
    %5359 = vmatpush.bf16.msra.mxu0 %v3699
    %5360 = vmatpush.bf16.msra.mxu0 %v3683
    %5361 = vmatpush.bf16.msra.mxu0 %v3667
    %5362 = vmatmul.bf16.gmra.mxu0 %v2080
    %v5363 = vpop.f32.mrf.mxu0
    %v5364 = vadd.f32 %v2099, %v5363
    %v5365 = vpop.f32.mrf.mxu0
    %5366 = vdwg.mxu0
    %5367 = vmatpush.bf16.msra.mxu0 %v3907
    %5368 = vmatpush.bf16.msra.mxu0 %v3891
    %5369 = vmatpush.bf16.msra.mxu0 %v3875
    %5370 = vmatpush.bf16.msra.mxu0 %v3859
    %5371 = vmatpush.bf16.msra.mxu0 %v3843
    %5372 = vmatpush.bf16.msra.mxu0 %v3827
    %5373 = vmatpush.bf16.msra.mxu0 %v3811
    %5374 = vmatpush.bf16.msra.mxu0 %v3795
    %5375 = vmatmul.bf16.gmra.mxu0 %v2081
    %v5376 = vpop.f32.mrf.mxu0
    %v5377 = vadd.f32 %v5364, %v5376
    %v5378 = vpop.f32.mrf.mxu0
    %5379 = vdwg.mxu0
    %5380 = vmatpush.bf16.msra.mxu0 %v4035
    %5381 = vmatpush.bf16.msra.mxu0 %v4019
    %5382 = vmatpush.bf16.msra.mxu0 %v4003
    %5383 = vmatpush.bf16.msra.mxu0 %v3987
    %5384 = vmatpush.bf16.msra.mxu0 %v3971
    %5385 = vmatpush.bf16.msra.mxu0 %v3955
    %5386 = vmatpush.bf16.msra.mxu0 %v3939
    %5387 = vmatpush.bf16.msra.mxu0 %v3923
    %5388 = vmatmul.bf16.gmra.mxu0 %v2082
    %v5389 = vpop.f32.mrf.mxu0
    %v5390 = vadd.f32 %v5377, %v5389
    %v5391 = vpop.f32.mrf.mxu0
    %5392 = vdwg.mxu0
    %5393 = vmatpush.bf16.msra.mxu0 %v4163
    %5394 = vmatpush.bf16.msra.mxu0 %v4147
    %5395 = vmatpush.bf16.msra.mxu0 %v4131
    %5396 = vmatpush.bf16.msra.mxu0 %v4115
    %5397 = vmatpush.bf16.msra.mxu0 %v4099
    %5398 = vmatpush.bf16.msra.mxu0 %v4083
    %5399 = vmatpush.bf16.msra.mxu0 %v4067
    %5400 = vmatpush.bf16.msra.mxu0 %v4051
    %5401 = vmatmul.bf16.gmra.mxu0 %v2083
    %v5402 = vpop.f32.mrf.mxu0
    %v5403 = vadd.f32 %v5390, %v5402
    %v5404 = vpop.f32.mrf.mxu0
    %5405 = vdwg.mxu0
    %5406 = vmatpush.bf16.msra.mxu0 %v3780
    %5407 = vmatpush.bf16.msra.mxu0 %v3764
    %5408 = vmatpush.bf16.msra.mxu0 %v3748
    %5409 = vmatpush.bf16.msra.mxu0 %v3732
    %5410 = vmatpush.bf16.msra.mxu0 %v3716
    %5411 = vmatpush.bf16.msra.mxu0 %v3700
    %5412 = vmatpush.bf16.msra.mxu0 %v3684
    %5413 = vmatpush.bf16.msra.mxu0 %v3668
    %5414 = vmatmul.bf16.gmra.mxu0 %v2080
    %v5415 = vpop.f32.mrf.mxu0
    %v5416 = vadd.f32 %v2100, %v5415
    %v5417 = vpop.f32.mrf.mxu0
    %5418 = vdwg.mxu0
    %5419 = vmatpush.bf16.msra.mxu0 %v3908
    %5420 = vmatpush.bf16.msra.mxu0 %v3892
    %5421 = vmatpush.bf16.msra.mxu0 %v3876
    %5422 = vmatpush.bf16.msra.mxu0 %v3860
    %5423 = vmatpush.bf16.msra.mxu0 %v3844
    %5424 = vmatpush.bf16.msra.mxu0 %v3828
    %5425 = vmatpush.bf16.msra.mxu0 %v3812
    %5426 = vmatpush.bf16.msra.mxu0 %v3796
    %5427 = vmatmul.bf16.gmra.mxu0 %v2081
    %v5428 = vpop.f32.mrf.mxu0
    %v5429 = vadd.f32 %v5416, %v5428
    %v5430 = vpop.f32.mrf.mxu0
    %5431 = vdwg.mxu0
    %5432 = vmatpush.bf16.msra.mxu0 %v4036
    %5433 = vmatpush.bf16.msra.mxu0 %v4020
    %5434 = vmatpush.bf16.msra.mxu0 %v4004
    %5435 = vmatpush.bf16.msra.mxu0 %v3988
    %5436 = vmatpush.bf16.msra.mxu0 %v3972
    %5437 = vmatpush.bf16.msra.mxu0 %v3956
    %5438 = vmatpush.bf16.msra.mxu0 %v3940
    %5439 = vmatpush.bf16.msra.mxu0 %v3924
    %5440 = vmatmul.bf16.gmra.mxu0 %v2082
    %v5441 = vpop.f32.mrf.mxu0
    %v5442 = vadd.f32 %v5429, %v5441
    %v5443 = vpop.f32.mrf.mxu0
    %5444 = vdwg.mxu0
    %5445 = vmatpush.bf16.msra.mxu0 %v4164
    %5446 = vmatpush.bf16.msra.mxu0 %v4148
    %5447 = vmatpush.bf16.msra.mxu0 %v4132
    %5448 = vmatpush.bf16.msra.mxu0 %v4116
    %5449 = vmatpush.bf16.msra.mxu0 %v4100
    %5450 = vmatpush.bf16.msra.mxu0 %v4084
    %5451 = vmatpush.bf16.msra.mxu0 %v4068
    %5452 = vmatpush.bf16.msra.mxu0 %v4052
    %5453 = vmatmul.bf16.gmra.mxu0 %v2083
    %v5454 = vpop.f32.mrf.mxu0
    %v5455 = vadd.f32 %v5442, %v5454
    %v5456 = vpop.f32.mrf.mxu0
    %5457 = vdwg.mxu0
    %5458 = vmatpush.bf16.msra.mxu0 %v3781
    %5459 = vmatpush.bf16.msra.mxu0 %v3765
    %5460 = vmatpush.bf16.msra.mxu0 %v3749
    %5461 = vmatpush.bf16.msra.mxu0 %v3733
    %5462 = vmatpush.bf16.msra.mxu0 %v3717
    %5463 = vmatpush.bf16.msra.mxu0 %v3701
    %5464 = vmatpush.bf16.msra.mxu0 %v3685
    %5465 = vmatpush.bf16.msra.mxu0 %v3669
    %5466 = vmatmul.bf16.gmra.mxu0 %v2080
    %v5467 = vpop.f32.mrf.mxu0
    %v5468 = vadd.f32 %v2101, %v5467
    %v5469 = vpop.f32.mrf.mxu0
    %5470 = vdwg.mxu0
    %5471 = vmatpush.bf16.msra.mxu0 %v3909
    %5472 = vmatpush.bf16.msra.mxu0 %v3893
    %5473 = vmatpush.bf16.msra.mxu0 %v3877
    %5474 = vmatpush.bf16.msra.mxu0 %v3861
    %5475 = vmatpush.bf16.msra.mxu0 %v3845
    %5476 = vmatpush.bf16.msra.mxu0 %v3829
    %5477 = vmatpush.bf16.msra.mxu0 %v3813
    %5478 = vmatpush.bf16.msra.mxu0 %v3797
    %5479 = vmatmul.bf16.gmra.mxu0 %v2081
    %v5480 = vpop.f32.mrf.mxu0
    %v5481 = vadd.f32 %v5468, %v5480
    %v5482 = vpop.f32.mrf.mxu0
    %5483 = vdwg.mxu0
    %5484 = vmatpush.bf16.msra.mxu0 %v4037
    %5485 = vmatpush.bf16.msra.mxu0 %v4021
    %5486 = vmatpush.bf16.msra.mxu0 %v4005
    %5487 = vmatpush.bf16.msra.mxu0 %v3989
    %5488 = vmatpush.bf16.msra.mxu0 %v3973
    %5489 = vmatpush.bf16.msra.mxu0 %v3957
    %5490 = vmatpush.bf16.msra.mxu0 %v3941
    %5491 = vmatpush.bf16.msra.mxu0 %v3925
    %5492 = vmatmul.bf16.gmra.mxu0 %v2082
    %v5493 = vpop.f32.mrf.mxu0
    %v5494 = vadd.f32 %v5481, %v5493
    %v5495 = vpop.f32.mrf.mxu0
    %5496 = vdwg.mxu0
    %5497 = vmatpush.bf16.msra.mxu0 %v4165
    %5498 = vmatpush.bf16.msra.mxu0 %v4149
    %5499 = vmatpush.bf16.msra.mxu0 %v4133
    %5500 = vmatpush.bf16.msra.mxu0 %v4117
    %5501 = vmatpush.bf16.msra.mxu0 %v4101
    %5502 = vmatpush.bf16.msra.mxu0 %v4085
    %5503 = vmatpush.bf16.msra.mxu0 %v4069
    %5504 = vmatpush.bf16.msra.mxu0 %v4053
    %5505 = vmatmul.bf16.gmra.mxu0 %v2083
    %v5506 = vpop.f32.mrf.mxu0
    %v5507 = vadd.f32 %v5494, %v5506
    %v5508 = vpop.f32.mrf.mxu0
    %5509 = vdwg.mxu0
    %v5510 = vmax.f32 %v4727, 0.0
    %v5511 = vmax.f32 %v4779, 0.0
    %v5512 = vmax.f32 %v4831, 0.0
    %v5513 = vmax.f32 %v4883, 0.0
    %v5514 = vmax.f32 %v4935, 0.0
    %v5515 = vmax.f32 %v4987, 0.0
    %v5516 = vmax.f32 %v5039, 0.0
    %v5517 = vmax.f32 %v5091, 0.0
    %v5518 = vmax.f32 %v5143, 0.0
    %v5519 = vmax.f32 %v5195, 0.0
    %v5520 = vmax.f32 %v5247, 0.0
    %v5521 = vmax.f32 %v5299, 0.0
    %v5522 = vmax.f32 %v5351, 0.0
    %v5523 = vmax.f32 %v5403, 0.0
    %v5524 = vmax.f32 %v5455, 0.0
    %v5525 = vmax.f32 %v5507, 0.0
    %v5526 = vpack.c.bf16 %v5510, %v5510
    %v5527 = vpack.c.bf16 %v5511, %v5511
    %v5528 = vpack.c.bf16 %v5512, %v5512
    %v5529 = vpack.c.bf16 %v5513, %v5513
    %v5530 = vpack.c.bf16 %v5514, %v5514
    %v5531 = vpack.c.bf16 %v5515, %v5515
    %v5532 = vpack.c.bf16 %v5516, %v5516
    %v5533 = vpack.c.bf16 %v5517, %v5517
    %v5534 = vpack.c.bf16 %v5518, %v5518
    %v5535 = vpack.c.bf16 %v5519, %v5519
    %v5536 = vpack.c.bf16 %v5520, %v5520
    %v5537 = vpack.c.bf16 %v5521, %v5521
    %v5538 = vpack.c.bf16 %v5522, %v5522
    %v5539 = vpack.c.bf16 %v5523, %v5523
    %v5540 = vpack.c.bf16 %v5524, %v5524
    %v5541 = vpack.c.bf16 %v5525, %v5525
    %v5798 = vunpack.c.l.b16 %v862
    %v5799 = vunpack.c.l.b16 %v863
    %v5800 = vunpack.c.l.b16 %v864
    %v5801 = vunpack.c.l.b16 %v865
    %v5802 = vunpack.c.l.b16 %v866
    %v5803 = vunpack.c.l.b16 %v867
    %v5804 = vunpack.c.l.b16 %v868
    %v5805 = vunpack.c.l.b16 %v869
    %v5806 = vunpack.c.l.b16 %v870
    %v5807 = vunpack.c.l.b16 %v871
    %v5808 = vunpack.c.l.b16 %v872
    %v5809 = vunpack.c.l.b16 %v873
    %v5810 = vunpack.c.l.b16 %v874
    %v5811 = vunpack.c.l.b16 %v875
    %v5812 = vunpack.c.l.b16 %v876
    %v5813 = vunpack.c.l.b16 %v877
    %v5814 = vunpack.c.l.b16 %v878
    %v5815 = vunpack.c.l.b16 %v879
    %v5816 = vunpack.c.l.b16 %v880
    %v5817 = vunpack.c.l.b16 %v881
    %v5818 = vunpack.c.l.b16 %v882
    %v5819 = vunpack.c.l.b16 %v883
    %v5820 = vunpack.c.l.b16 %v884
    %v5821 = vunpack.c.l.b16 %v885
    %v5822 = vunpack.c.l.b16 %v886
    %v5823 = vunpack.c.l.b16 %v887
    %v5824 = vunpack.c.l.b16 %v888
    %v5825 = vunpack.c.l.b16 %v889
    %v5826 = vunpack.c.l.b16 %v890
    %v5827 = vunpack.c.l.b16 %v891
    %v5828 = vunpack.c.l.b16 %v892
    %v5829 = vunpack.c.l.b16 %v893
    %v5830 = vunpack.c.l.b16 %v894
    %v5831 = vunpack.c.l.b16 %v895
    %v5832 = vunpack.c.l.b16 %v896
    %v5833 = vunpack.c.l.b16 %v897
    %v5834 = vunpack.c.l.b16 %v898
    %v5835 = vunpack.c.l.b16 %v899
    %v5836 = vunpack.c.l.b16 %v900
    %v5837 = vunpack.c.l.b16 %v901
    %v5838 = vunpack.c.l.b16 %v902
    %v5839 = vunpack.c.l.b16 %v903
    %v5840 = vunpack.c.l.b16 %v904
    %v5841 = vunpack.c.l.b16 %v905
    %v5842 = vunpack.c.l.b16 %v906
    %v5843 = vunpack.c.l.b16 %v907
    %v5844 = vunpack.c.l.b16 %v908
    %v5845 = vunpack.c.l.b16 %v909
    %v5846 = vunpack.c.l.b16 %v910
    %v5847 = vunpack.c.l.b16 %v911
    %v5848 = vunpack.c.l.b16 %v912
    %v5849 = vunpack.c.l.b16 %v913
    %v5850 = vunpack.c.l.b16 %v914
    %v5851 = vunpack.c.l.b16 %v915
    %v5852 = vunpack.c.l.b16 %v916
    %v5853 = vunpack.c.l.b16 %v917
    %v5854 = vunpack.c.l.b16 %v918
    %v5855 = vunpack.c.l.b16 %v919
    %v5856 = vunpack.c.l.b16 %v920
    %v5857 = vunpack.c.l.b16 %v921
    %v5858 = vunpack.c.l.b16 %v922
    %v5859 = vunpack.c.l.b16 %v923
    %v5860 = vunpack.c.l.b16 %v924
    %v5861 = vunpack.c.l.b16 %v925
    %v5862 = vunpack.c.l.b16 %v926
    %v5863 = vunpack.c.l.b16 %v927
    %v5864 = vunpack.c.l.b16 %v928
    %v5865 = vunpack.c.l.b16 %v929
    %v5866 = vunpack.c.l.b16 %v930
    %v5867 = vunpack.c.l.b16 %v931
    %v5868 = vunpack.c.l.b16 %v932
    %v5869 = vunpack.c.l.b16 %v933
    %v5870 = vunpack.c.l.b16 %v934
    %v5871 = vunpack.c.l.b16 %v935
    %v5872 = vunpack.c.l.b16 %v936
    %v5873 = vunpack.c.l.b16 %v937
    %v5874 = vunpack.c.l.b16 %v938
    %v5875 = vunpack.c.l.b16 %v939
    %v5876 = vunpack.c.l.b16 %v940
    %v5877 = vunpack.c.l.b16 %v941
    %v5878 = vunpack.c.l.b16 %v942
    %v5879 = vunpack.c.l.b16 %v943
    %v5880 = vunpack.c.l.b16 %v944
    %v5881 = vunpack.c.l.b16 %v945
    %v5882 = vunpack.c.l.b16 %v946
    %v5883 = vunpack.c.l.b16 %v947
    %v5884 = vunpack.c.l.b16 %v948
    %v5885 = vunpack.c.l.b16 %v949
    %v5886 = vunpack.c.l.b16 %v950
    %v5887 = vunpack.c.l.b16 %v951
    %v5888 = vunpack.c.l.b16 %v952
    %v5889 = vunpack.c.l.b16 %v953
    %v5890 = vunpack.c.l.b16 %v954
    %v5891 = vunpack.c.l.b16 %v955
    %v5892 = vunpack.c.l.b16 %v956
    %v5893 = vunpack.c.l.b16 %v957
    %v5894 = vunpack.c.l.b16 %v958
    %v5895 = vunpack.c.l.b16 %v959
    %v5896 = vunpack.c.l.b16 %v960
    %v5897 = vunpack.c.l.b16 %v961
    %v5898 = vunpack.c.l.b16 %v962
    %v5899 = vunpack.c.l.b16 %v963
    %v5900 = vunpack.c.l.b16 %v964
    %v5901 = vunpack.c.l.b16 %v965
    %v5902 = vunpack.c.l.b16 %v966
    %v5903 = vunpack.c.l.b16 %v967
    %v5904 = vunpack.c.l.b16 %v968
    %v5905 = vunpack.c.l.b16 %v969
    %v5906 = vunpack.c.l.b16 %v970
    %v5907 = vunpack.c.l.b16 %v971
    %v5908 = vunpack.c.l.b16 %v972
    %v5909 = vunpack.c.l.b16 %v973
    %v5910 = vunpack.c.l.b16 %v974
    %v5911 = vunpack.c.l.b16 %v975
    %v5912 = vunpack.c.l.b16 %v976
    %v5913 = vunpack.c.l.b16 %v977
    %v5914 = vunpack.c.l.b16 %v978
    %v5915 = vunpack.c.l.b16 %v979
    %v5916 = vunpack.c.l.b16 %v980
    %v5917 = vunpack.c.l.b16 %v981
    %v5918 = vunpack.c.l.b16 %v982
    %v5919 = vunpack.c.l.b16 %v983
    %v5920 = vunpack.c.l.b16 %v984
    %v5921 = vunpack.c.l.b16 %v985
    %v5922 = vunpack.c.l.b16 %v986
    %v5923 = vunpack.c.l.b16 %v987
    %v5924 = vunpack.c.l.b16 %v988
    %v5925 = vunpack.c.l.b16 %v989
    %v5926 = vunpack.c.l.b16 %v990
    %v5927 = vunpack.c.l.b16 %v991
    %v5928 = vunpack.c.l.b16 %v992
    %v5929 = vunpack.c.l.b16 %v993
    %v5930 = vunpack.c.l.b16 %v994
    %v5931 = vunpack.c.l.b16 %v995
    %v5932 = vunpack.c.l.b16 %v996
    %v5933 = vunpack.c.l.b16 %v997
    %v5934 = vunpack.c.l.b16 %v998
    %v5935 = vunpack.c.l.b16 %v999
    %v5936 = vunpack.c.l.b16 %v1000
    %v5937 = vunpack.c.l.b16 %v1001
    %v5938 = vunpack.c.l.b16 %v1002
    %v5939 = vunpack.c.l.b16 %v1003
    %v5940 = vunpack.c.l.b16 %v1004
    %v5941 = vunpack.c.l.b16 %v1005
    %v5942 = vunpack.c.l.b16 %v1006
    %v5943 = vunpack.c.l.b16 %v1007
    %v5944 = vunpack.c.l.b16 %v1008
    %v5945 = vunpack.c.l.b16 %v1009
    %v5946 = vunpack.c.l.b16 %v1010
    %v5947 = vunpack.c.l.b16 %v1011
    %v5948 = vunpack.c.l.b16 %v1012
    %v5949 = vunpack.c.l.b16 %v1013
    %v5950 = vunpack.c.l.b16 %v1014
    %v5951 = vunpack.c.l.b16 %v1015
    %v5952 = vunpack.c.l.b16 %v1016
    %v5953 = vunpack.c.l.b16 %v1017
    %v5954 = vunpack.c.l.b16 %v1018
    %v5955 = vunpack.c.l.b16 %v1019
    %v5956 = vunpack.c.l.b16 %v1020
    %v5957 = vunpack.c.l.b16 %v1021
    %v5958 = vunpack.c.l.b16 %v1022
    %v5959 = vunpack.c.l.b16 %v1023
    %v5960 = vunpack.c.l.b16 %v1024
    %v5961 = vunpack.c.l.b16 %v1025
    %v5962 = vunpack.c.l.b16 %v1026
    %v5963 = vunpack.c.l.b16 %v1027
    %v5964 = vunpack.c.l.b16 %v1028
    %v5965 = vunpack.c.l.b16 %v1029
    %v5966 = vunpack.c.l.b16 %v1030
    %v5967 = vunpack.c.l.b16 %v1031
    %v5968 = vunpack.c.l.b16 %v1032
    %v5969 = vunpack.c.l.b16 %v1033
    %v5970 = vunpack.c.l.b16 %v1034
    %v5971 = vunpack.c.l.b16 %v1035
    %v5972 = vunpack.c.l.b16 %v1036
    %v5973 = vunpack.c.l.b16 %v1037
    %v5974 = vunpack.c.l.b16 %v1038
    %v5975 = vunpack.c.l.b16 %v1039
    %v5976 = vunpack.c.l.b16 %v1040
    %v5977 = vunpack.c.l.b16 %v1041
    %v5978 = vunpack.c.l.b16 %v1042
    %v5979 = vunpack.c.l.b16 %v1043
    %v5980 = vunpack.c.l.b16 %v1044
    %v5981 = vunpack.c.l.b16 %v1045
    %v5982 = vunpack.c.l.b16 %v1046
    %v5983 = vunpack.c.l.b16 %v1047
    %v5984 = vunpack.c.l.b16 %v1048
    %v5985 = vunpack.c.l.b16 %v1049
    %v5986 = vunpack.c.l.b16 %v1050
    %v5987 = vunpack.c.l.b16 %v1051
    %v5988 = vunpack.c.l.b16 %v1052
    %v5989 = vunpack.c.l.b16 %v1053
    %v5990 = vunpack.c.l.b16 %v1054
    %v5991 = vunpack.c.l.b16 %v1055
    %v5992 = vunpack.c.l.b16 %v1056
    %v5993 = vunpack.c.l.b16 %v1057
    %v5994 = vunpack.c.l.b16 %v1058
    %v5995 = vunpack.c.l.b16 %v1059
    %v5996 = vunpack.c.l.b16 %v1060
    %v5997 = vunpack.c.l.b16 %v1061
    %v5998 = vunpack.c.l.b16 %v1062
    %v5999 = vunpack.c.l.b16 %v1063
    %v6000 = vunpack.c.l.b16 %v1064
    %v6001 = vunpack.c.l.b16 %v1065
    %v6002 = vunpack.c.l.b16 %v1066
    %v6003 = vunpack.c.l.b16 %v1067
    %v6004 = vunpack.c.l.b16 %v1068
    %v6005 = vunpack.c.l.b16 %v1069
    %v6006 = vunpack.c.l.b16 %v1070
    %v6007 = vunpack.c.l.b16 %v1071
    %v6008 = vunpack.c.l.b16 %v1072
    %v6009 = vunpack.c.l.b16 %v1073
    %v6010 = vunpack.c.l.b16 %v1074
    %v6011 = vunpack.c.l.b16 %v1075
    %v6012 = vunpack.c.l.b16 %v1076
    %v6013 = vunpack.c.l.b16 %v1077
    %v6014 = vunpack.c.l.b16 %v1078
    %v6015 = vunpack.c.l.b16 %v1079
    %v6016 = vunpack.c.l.b16 %v1080
    %v6017 = vunpack.c.l.b16 %v1081
    %v6018 = vunpack.c.l.b16 %v1082
    %v6019 = vunpack.c.l.b16 %v1083
    %v6020 = vunpack.c.l.b16 %v1084
    %v6021 = vunpack.c.l.b16 %v1085
    %v6022 = vunpack.c.l.b16 %v1086
    %v6023 = vunpack.c.l.b16 %v1087
    %v6024 = vunpack.c.l.b16 %v1088
    %v6025 = vunpack.c.l.b16 %v1089
    %v6026 = vunpack.c.l.b16 %v1090
    %v6027 = vunpack.c.l.b16 %v1091
    %v6028 = vunpack.c.l.b16 %v1092
    %v6029 = vunpack.c.l.b16 %v1093
    %v6030 = vunpack.c.l.b16 %v1094
    %v6031 = vunpack.c.l.b16 %v1095
    %v6032 = vunpack.c.l.b16 %v1096
    %v6033 = vunpack.c.l.b16 %v1097
    %v6034 = vunpack.c.l.b16 %v1098
    %v6035 = vunpack.c.l.b16 %v1099
    %v6036 = vunpack.c.l.b16 %v1100
    %v6037 = vunpack.c.l.b16 %v1101
    %v6038 = vunpack.c.l.b16 %v1102
    %v6039 = vunpack.c.l.b16 %v1103
    %v6040 = vunpack.c.l.b16 %v1104
    %v6041 = vunpack.c.l.b16 %v1105
    %v6042 = vunpack.c.l.b16 %v1106
    %v6043 = vunpack.c.l.b16 %v1107
    %v6044 = vunpack.c.l.b16 %v1108
    %v6045 = vunpack.c.l.b16 %v1109
    %v6046 = vunpack.c.l.b16 %v1110
    %v6047 = vunpack.c.l.b16 %v1111
    %v6048 = vunpack.c.l.b16 %v1112
    %v6049 = vunpack.c.l.b16 %v1113
    %v6050 = vunpack.c.l.b16 %v1114
    %v6051 = vunpack.c.l.b16 %v1115
    %v6052 = vunpack.c.l.b16 %v1116
    %v6053 = vunpack.c.l.b16 %v1117
    %v6054 = vpack.c.b16 %v5799, %v5798
    %v6055 = vpack.c.b16 %v5801, %v5800
    %v6056 = vpack.c.b16 %v5803, %v5802
    %v6057 = vpack.c.b16 %v5805, %v5804
    %v6058 = vpack.c.b16 %v5807, %v5806
    %v6059 = vpack.c.b16 %v5809, %v5808
    %v6060 = vpack.c.b16 %v5811, %v5810
    %v6061 = vpack.c.b16 %v5813, %v5812
    %v6062 = vpack.c.b16 %v5815, %v5814
    %v6063 = vpack.c.b16 %v5817, %v5816
    %v6064 = vpack.c.b16 %v5819, %v5818
    %v6065 = vpack.c.b16 %v5821, %v5820
    %v6066 = vpack.c.b16 %v5823, %v5822
    %v6067 = vpack.c.b16 %v5825, %v5824
    %v6068 = vpack.c.b16 %v5827, %v5826
    %v6069 = vpack.c.b16 %v5829, %v5828
    %v6070 = vpack.c.b16 %v5831, %v5830
    %v6071 = vpack.c.b16 %v5833, %v5832
    %v6072 = vpack.c.b16 %v5835, %v5834
    %v6073 = vpack.c.b16 %v5837, %v5836
    %v6074 = vpack.c.b16 %v5839, %v5838
    %v6075 = vpack.c.b16 %v5841, %v5840
    %v6076 = vpack.c.b16 %v5843, %v5842
    %v6077 = vpack.c.b16 %v5845, %v5844
    %v6078 = vpack.c.b16 %v5847, %v5846
    %v6079 = vpack.c.b16 %v5849, %v5848
    %v6080 = vpack.c.b16 %v5851, %v5850
    %v6081 = vpack.c.b16 %v5853, %v5852
    %v6082 = vpack.c.b16 %v5855, %v5854
    %v6083 = vpack.c.b16 %v5857, %v5856
    %v6084 = vpack.c.b16 %v5859, %v5858
    %v6085 = vpack.c.b16 %v5861, %v5860
    %v6086 = vpack.c.b16 %v5863, %v5862
    %v6087 = vpack.c.b16 %v5865, %v5864
    %v6088 = vpack.c.b16 %v5867, %v5866
    %v6089 = vpack.c.b16 %v5869, %v5868
    %v6090 = vpack.c.b16 %v5871, %v5870
    %v6091 = vpack.c.b16 %v5873, %v5872
    %v6092 = vpack.c.b16 %v5875, %v5874
    %v6093 = vpack.c.b16 %v5877, %v5876
    %v6094 = vpack.c.b16 %v5879, %v5878
    %v6095 = vpack.c.b16 %v5881, %v5880
    %v6096 = vpack.c.b16 %v5883, %v5882
    %v6097 = vpack.c.b16 %v5885, %v5884
    %v6098 = vpack.c.b16 %v5887, %v5886
    %v6099 = vpack.c.b16 %v5889, %v5888
    %v6100 = vpack.c.b16 %v5891, %v5890
    %v6101 = vpack.c.b16 %v5893, %v5892
    %v6102 = vpack.c.b16 %v5895, %v5894
    %v6103 = vpack.c.b16 %v5897, %v5896
    %v6104 = vpack.c.b16 %v5899, %v5898
    %v6105 = vpack.c.b16 %v5901, %v5900
    %v6106 = vpack.c.b16 %v5903, %v5902
    %v6107 = vpack.c.b16 %v5905, %v5904
    %v6108 = vpack.c.b16 %v5907, %v5906
    %v6109 = vpack.c.b16 %v5909, %v5908
    %v6110 = vpack.c.b16 %v5911, %v5910
    %v6111 = vpack.c.b16 %v5913, %v5912
    %v6112 = vpack.c.b16 %v5915, %v5914
    %v6113 = vpack.c.b16 %v5917, %v5916
    %v6114 = vpack.c.b16 %v5919, %v5918
    %v6115 = vpack.c.b16 %v5921, %v5920
    %v6116 = vpack.c.b16 %v5923, %v5922
    %v6117 = vpack.c.b16 %v5925, %v5924
    %v6118 = vpack.c.b16 %v5927, %v5926
    %v6119 = vpack.c.b16 %v5929, %v5928
    %v6120 = vpack.c.b16 %v5931, %v5930
    %v6121 = vpack.c.b16 %v5933, %v5932
    %v6122 = vpack.c.b16 %v5935, %v5934
    %v6123 = vpack.c.b16 %v5937, %v5936
    %v6124 = vpack.c.b16 %v5939, %v5938
    %v6125 = vpack.c.b16 %v5941, %v5940
    %v6126 = vpack.c.b16 %v5943, %v5942
    %v6127 = vpack.c.b16 %v5945, %v5944
    %v6128 = vpack.c.b16 %v5947, %v5946
    %v6129 = vpack.c.b16 %v5949, %v5948
    %v6130 = vpack.c.b16 %v5951, %v5950
    %v6131 = vpack.c.b16 %v5953, %v5952
    %v6132 = vpack.c.b16 %v5955, %v5954
    %v6133 = vpack.c.b16 %v5957, %v5956
    %v6134 = vpack.c.b16 %v5959, %v5958
    %v6135 = vpack.c.b16 %v5961, %v5960
    %v6136 = vpack.c.b16 %v5963, %v5962
    %v6137 = vpack.c.b16 %v5965, %v5964
    %v6138 = vpack.c.b16 %v5967, %v5966
    %v6139 = vpack.c.b16 %v5969, %v5968
    %v6140 = vpack.c.b16 %v5971, %v5970
    %v6141 = vpack.c.b16 %v5973, %v5972
    %v6142 = vpack.c.b16 %v5975, %v5974
    %v6143 = vpack.c.b16 %v5977, %v5976
    %v6144 = vpack.c.b16 %v5979, %v5978
    %v6145 = vpack.c.b16 %v5981, %v5980
    %v6146 = vpack.c.b16 %v5983, %v5982
    %v6147 = vpack.c.b16 %v5985, %v5984
    %v6148 = vpack.c.b16 %v5987, %v5986
    %v6149 = vpack.c.b16 %v5989, %v5988
    %v6150 = vpack.c.b16 %v5991, %v5990
    %v6151 = vpack.c.b16 %v5993, %v5992
    %v6152 = vpack.c.b16 %v5995, %v5994
    %v6153 = vpack.c.b16 %v5997, %v5996
    %v6154 = vpack.c.b16 %v5999, %v5998
    %v6155 = vpack.c.b16 %v6001, %v6000
    %v6156 = vpack.c.b16 %v6003, %v6002
    %v6157 = vpack.c.b16 %v6005, %v6004
    %v6158 = vpack.c.b16 %v6007, %v6006
    %v6159 = vpack.c.b16 %v6009, %v6008
    %v6160 = vpack.c.b16 %v6011, %v6010
    %v6161 = vpack.c.b16 %v6013, %v6012
    %v6162 = vpack.c.b16 %v6015, %v6014
    %v6163 = vpack.c.b16 %v6017, %v6016
    %v6164 = vpack.c.b16 %v6019, %v6018
    %v6165 = vpack.c.b16 %v6021, %v6020
    %v6166 = vpack.c.b16 %v6023, %v6022
    %v6167 = vpack.c.b16 %v6025, %v6024
    %v6168 = vpack.c.b16 %v6027, %v6026
    %v6169 = vpack.c.b16 %v6029, %v6028
    %v6170 = vpack.c.b16 %v6031, %v6030
    %v6171 = vpack.c.b16 %v6033, %v6032
    %v6172 = vpack.c.b16 %v6035, %v6034
    %v6173 = vpack.c.b16 %v6037, %v6036
    %v6174 = vpack.c.b16 %v6039, %v6038
    %v6175 = vpack.c.b16 %v6041, %v6040
    %v6176 = vpack.c.b16 %v6043, %v6042
    %v6177 = vpack.c.b16 %v6045, %v6044
    %v6178 = vpack.c.b16 %v6047, %v6046
    %v6179 = vpack.c.b16 %v6049, %v6048
    %v6180 = vpack.c.b16 %v6051, %v6050
    %v6181 = vpack.c.b16 %v6053, %v6052
    %6310 = vmatpush.bf16.msra.mxu0 %v6061
    %6311 = vmatpush.bf16.msra.mxu0 %v6060
    %6312 = vmatpush.bf16.msra.mxu0 %v6059
    %6313 = vmatpush.bf16.msra.mxu0 %v6058
    %6314 = vmatpush.bf16.msra.mxu0 %v6057
    %6315 = vmatpush.bf16.msra.mxu0 %v6056
    %6316 = vmatpush.bf16.msra.mxu0 %v6055
    %6317 = vmatpush.bf16.msra.mxu0 %v6054
    %6318 = vmatmul.bf16.gmra.mxu0 %v5526
    %v6319 = vpop.f32.mrf.mxu0
    %v6320 = vadd.f32 0.0, %v6319
    %v6321 = vpop.f32.mrf.mxu0
    %6322 = vdwg.mxu0
    %6323 = vmatpush.bf16.msra.mxu0 %v6069
    %6324 = vmatpush.bf16.msra.mxu0 %v6068
    %6325 = vmatpush.bf16.msra.mxu0 %v6067
    %6326 = vmatpush.bf16.msra.mxu0 %v6066
    %6327 = vmatpush.bf16.msra.mxu0 %v6065
    %6328 = vmatpush.bf16.msra.mxu0 %v6064
    %6329 = vmatpush.bf16.msra.mxu0 %v6063
    %6330 = vmatpush.bf16.msra.mxu0 %v6062
    %6331 = vmatmul.bf16.gmra.mxu0 %v5527
    %v6332 = vpop.f32.mrf.mxu0
    %v6333 = vadd.f32 %v6320, %v6332
    %v6334 = vpop.f32.mrf.mxu0
    %6335 = vdwg.mxu0
    %6336 = vmatpush.bf16.msra.mxu0 %v6077
    %6337 = vmatpush.bf16.msra.mxu0 %v6076
    %6338 = vmatpush.bf16.msra.mxu0 %v6075
    %6339 = vmatpush.bf16.msra.mxu0 %v6074
    %6340 = vmatpush.bf16.msra.mxu0 %v6073
    %6341 = vmatpush.bf16.msra.mxu0 %v6072
    %6342 = vmatpush.bf16.msra.mxu0 %v6071
    %6343 = vmatpush.bf16.msra.mxu0 %v6070
    %6344 = vmatmul.bf16.gmra.mxu0 %v5528
    %v6345 = vpop.f32.mrf.mxu0
    %v6346 = vadd.f32 %v6333, %v6345
    %v6347 = vpop.f32.mrf.mxu0
    %6348 = vdwg.mxu0
    %6349 = vmatpush.bf16.msra.mxu0 %v6085
    %6350 = vmatpush.bf16.msra.mxu0 %v6084
    %6351 = vmatpush.bf16.msra.mxu0 %v6083
    %6352 = vmatpush.bf16.msra.mxu0 %v6082
    %6353 = vmatpush.bf16.msra.mxu0 %v6081
    %6354 = vmatpush.bf16.msra.mxu0 %v6080
    %6355 = vmatpush.bf16.msra.mxu0 %v6079
    %6356 = vmatpush.bf16.msra.mxu0 %v6078
    %6357 = vmatmul.bf16.gmra.mxu0 %v5529
    %v6358 = vpop.f32.mrf.mxu0
    %v6359 = vadd.f32 %v6346, %v6358
    %v6360 = vpop.f32.mrf.mxu0
    %6361 = vdwg.mxu0
    %6362 = vmatpush.bf16.msra.mxu0 %v6093
    %6363 = vmatpush.bf16.msra.mxu0 %v6092
    %6364 = vmatpush.bf16.msra.mxu0 %v6091
    %6365 = vmatpush.bf16.msra.mxu0 %v6090
    %6366 = vmatpush.bf16.msra.mxu0 %v6089
    %6367 = vmatpush.bf16.msra.mxu0 %v6088
    %6368 = vmatpush.bf16.msra.mxu0 %v6087
    %6369 = vmatpush.bf16.msra.mxu0 %v6086
    %6370 = vmatmul.bf16.gmra.mxu0 %v5530
    %v6371 = vpop.f32.mrf.mxu0
    %v6372 = vadd.f32 %v6359, %v6371
    %v6373 = vpop.f32.mrf.mxu0
    %6374 = vdwg.mxu0
    %6375 = vmatpush.bf16.msra.mxu0 %v6101
    %6376 = vmatpush.bf16.msra.mxu0 %v6100
    %6377 = vmatpush.bf16.msra.mxu0 %v6099
    %6378 = vmatpush.bf16.msra.mxu0 %v6098
    %6379 = vmatpush.bf16.msra.mxu0 %v6097
    %6380 = vmatpush.bf16.msra.mxu0 %v6096
    %6381 = vmatpush.bf16.msra.mxu0 %v6095
    %6382 = vmatpush.bf16.msra.mxu0 %v6094
    %6383 = vmatmul.bf16.gmra.mxu0 %v5531
    %v6384 = vpop.f32.mrf.mxu0
    %v6385 = vadd.f32 %v6372, %v6384
    %v6386 = vpop.f32.mrf.mxu0
    %6387 = vdwg.mxu0
    %6388 = vmatpush.bf16.msra.mxu0 %v6109
    %6389 = vmatpush.bf16.msra.mxu0 %v6108
    %6390 = vmatpush.bf16.msra.mxu0 %v6107
    %6391 = vmatpush.bf16.msra.mxu0 %v6106
    %6392 = vmatpush.bf16.msra.mxu0 %v6105
    %6393 = vmatpush.bf16.msra.mxu0 %v6104
    %6394 = vmatpush.bf16.msra.mxu0 %v6103
    %6395 = vmatpush.bf16.msra.mxu0 %v6102
    %6396 = vmatmul.bf16.gmra.mxu0 %v5532
    %v6397 = vpop.f32.mrf.mxu0
    %v6398 = vadd.f32 %v6385, %v6397
    %v6399 = vpop.f32.mrf.mxu0
    %6400 = vdwg.mxu0
    %6401 = vmatpush.bf16.msra.mxu0 %v6117
    %6402 = vmatpush.bf16.msra.mxu0 %v6116
    %6403 = vmatpush.bf16.msra.mxu0 %v6115
    %6404 = vmatpush.bf16.msra.mxu0 %v6114
    %6405 = vmatpush.bf16.msra.mxu0 %v6113
    %6406 = vmatpush.bf16.msra.mxu0 %v6112
    %6407 = vmatpush.bf16.msra.mxu0 %v6111
    %6408 = vmatpush.bf16.msra.mxu0 %v6110
    %6409 = vmatmul.bf16.gmra.mxu0 %v5533
    %v6410 = vpop.f32.mrf.mxu0
    %v6411 = vadd.f32 %v6398, %v6410
    %v6412 = vpop.f32.mrf.mxu0
    %6413 = vdwg.mxu0
    %6414 = vmatpush.bf16.msra.mxu0 %v6125
    %6415 = vmatpush.bf16.msra.mxu0 %v6124
    %6416 = vmatpush.bf16.msra.mxu0 %v6123
    %6417 = vmatpush.bf16.msra.mxu0 %v6122
    %6418 = vmatpush.bf16.msra.mxu0 %v6121
    %6419 = vmatpush.bf16.msra.mxu0 %v6120
    %6420 = vmatpush.bf16.msra.mxu0 %v6119
    %6421 = vmatpush.bf16.msra.mxu0 %v6118
    %6422 = vmatmul.bf16.gmra.mxu0 %v5534
    %v6423 = vpop.f32.mrf.mxu0
    %v6424 = vadd.f32 %v6411, %v6423
    %v6425 = vpop.f32.mrf.mxu0
    %6426 = vdwg.mxu0
    %6427 = vmatpush.bf16.msra.mxu0 %v6133
    %6428 = vmatpush.bf16.msra.mxu0 %v6132
    %6429 = vmatpush.bf16.msra.mxu0 %v6131
    %6430 = vmatpush.bf16.msra.mxu0 %v6130
    %6431 = vmatpush.bf16.msra.mxu0 %v6129
    %6432 = vmatpush.bf16.msra.mxu0 %v6128
    %6433 = vmatpush.bf16.msra.mxu0 %v6127
    %6434 = vmatpush.bf16.msra.mxu0 %v6126
    %6435 = vmatmul.bf16.gmra.mxu0 %v5535
    %v6436 = vpop.f32.mrf.mxu0
    %v6437 = vadd.f32 %v6424, %v6436
    %v6438 = vpop.f32.mrf.mxu0
    %6439 = vdwg.mxu0
    %6440 = vmatpush.bf16.msra.mxu0 %v6141
    %6441 = vmatpush.bf16.msra.mxu0 %v6140
    %6442 = vmatpush.bf16.msra.mxu0 %v6139
    %6443 = vmatpush.bf16.msra.mxu0 %v6138
    %6444 = vmatpush.bf16.msra.mxu0 %v6137
    %6445 = vmatpush.bf16.msra.mxu0 %v6136
    %6446 = vmatpush.bf16.msra.mxu0 %v6135
    %6447 = vmatpush.bf16.msra.mxu0 %v6134
    %6448 = vmatmul.bf16.gmra.mxu0 %v5536
    %v6449 = vpop.f32.mrf.mxu0
    %v6450 = vadd.f32 %v6437, %v6449
    %v6451 = vpop.f32.mrf.mxu0
    %6452 = vdwg.mxu0
    %6453 = vmatpush.bf16.msra.mxu0 %v6149
    %6454 = vmatpush.bf16.msra.mxu0 %v6148
    %6455 = vmatpush.bf16.msra.mxu0 %v6147
    %6456 = vmatpush.bf16.msra.mxu0 %v6146
    %6457 = vmatpush.bf16.msra.mxu0 %v6145
    %6458 = vmatpush.bf16.msra.mxu0 %v6144
    %6459 = vmatpush.bf16.msra.mxu0 %v6143
    %6460 = vmatpush.bf16.msra.mxu0 %v6142
    %6461 = vmatmul.bf16.gmra.mxu0 %v5537
    %v6462 = vpop.f32.mrf.mxu0
    %v6463 = vadd.f32 %v6450, %v6462
    %v6464 = vpop.f32.mrf.mxu0
    %6465 = vdwg.mxu0
    %6466 = vmatpush.bf16.msra.mxu0 %v6157
    %6467 = vmatpush.bf16.msra.mxu0 %v6156
    %6468 = vmatpush.bf16.msra.mxu0 %v6155
    %6469 = vmatpush.bf16.msra.mxu0 %v6154
    %6470 = vmatpush.bf16.msra.mxu0 %v6153
    %6471 = vmatpush.bf16.msra.mxu0 %v6152
    %6472 = vmatpush.bf16.msra.mxu0 %v6151
    %6473 = vmatpush.bf16.msra.mxu0 %v6150
    %6474 = vmatmul.bf16.gmra.mxu0 %v5538
    %v6475 = vpop.f32.mrf.mxu0
    %v6476 = vadd.f32 %v6463, %v6475
    %v6477 = vpop.f32.mrf.mxu0
    %6478 = vdwg.mxu0
    %6479 = vmatpush.bf16.msra.mxu0 %v6165
    %6480 = vmatpush.bf16.msra.mxu0 %v6164
    %6481 = vmatpush.bf16.msra.mxu0 %v6163
    %6482 = vmatpush.bf16.msra.mxu0 %v6162
    %6483 = vmatpush.bf16.msra.mxu0 %v6161
    %6484 = vmatpush.bf16.msra.mxu0 %v6160
    %6485 = vmatpush.bf16.msra.mxu0 %v6159
    %6486 = vmatpush.bf16.msra.mxu0 %v6158
    %6487 = vmatmul.bf16.gmra.mxu0 %v5539
    %v6488 = vpop.f32.mrf.mxu0
    %v6489 = vadd.f32 %v6476, %v6488
    %v6490 = vpop.f32.mrf.mxu0
    %6491 = vdwg.mxu0
    %6492 = vmatpush.bf16.msra.mxu0 %v6173
    %6493 = vmatpush.bf16.msra.mxu0 %v6172
    %6494 = vmatpush.bf16.msra.mxu0 %v6171
    %6495 = vmatpush.bf16.msra.mxu0 %v6170
    %6496 = vmatpush.bf16.msra.mxu0 %v6169
    %6497 = vmatpush.bf16.msra.mxu0 %v6168
    %6498 = vmatpush.bf16.msra.mxu0 %v6167
    %6499 = vmatpush.bf16.msra.mxu0 %v6166
    %6500 = vmatmul.bf16.gmra.mxu0 %v5540
    %v6501 = vpop.f32.mrf.mxu0
    %v6502 = vadd.f32 %v6489, %v6501
    %v6503 = vpop.f32.mrf.mxu0
    %6504 = vdwg.mxu0
    %6505 = vmatpush.bf16.msra.mxu0 %v6181
    %6506 = vmatpush.bf16.msra.mxu0 %v6180
    %6507 = vmatpush.bf16.msra.mxu0 %v6179
    %6508 = vmatpush.bf16.msra.mxu0 %v6178
    %6509 = vmatpush.bf16.msra.mxu0 %v6177
    %6510 = vmatpush.bf16.msra.mxu0 %v6176
    %6511 = vmatpush.bf16.msra.mxu0 %v6175
    %6512 = vmatpush.bf16.msra.mxu0 %v6174
    %6513 = vmatmul.bf16.gmra.mxu0 %v5541
    %v6514 = vpop.f32.mrf.mxu0
    %v6515 = vadd.f32 %v6502, %v6514
    %v6516 = vpop.f32.mrf.mxu0
    %6517 = vdwg.mxu0
    %v6518 = vld [vmem:[%s1] sm:$0xf]
    %v6519 = vpack.c.bf16 %v6515, %v6515
    %v6520 = vld [vmem:[#allocation15] sm:$0x1]
    %v6522 = vperm.slane %v6520, 0
    %vm6524 = vcmask 64512
    %v6526 = vsel %vm6524, %v6518, 0
    %vm6528 = vcmask 1043456
    %v6530 = vsel %vm6528, %v6519, 0
    %6532 = vmatpush.bf16.msra.mxu0 0
    %6533 = vmatpush.bf16.msra.mxu0 0
    %6534 = vmatpush.bf16.msra.mxu0 0
    %6535 = vmatpush.bf16.msra.mxu0 0
    %6536 = vmatpush.bf16.msra.mxu0 0
    %6537 = vmatpush.bf16.msra.mxu0 0
    %6538 = vmatpush.bf16.msra.mxu0 0
    %6539 = vmatpush.bf16.msra.mxu0 %v6530
    %6540 = vmatmul.bf16.gmra.mxu0 %v6526
    %v6541 = vpop.f32.mrf.mxu0
    %v6542 = vadd.f32 %v6522, %v6541
    %v6543 = vpop.f32.mrf.mxu0
    %6544 = vdwg.mxu0
    %v6545 = vmax.f32 %v6542, 0.0
    %v6546 = vld [vmem:[#allocation16] sm:$0xff]
    %v6547 = vld [vmem:[#allocation16 + $0x8] sm:$0xff]
    %v6548 = vld [vmem:[#allocation16 + $0x10] sm:$0xff]
    %v6549 = vld [vmem:[#allocation16 + $0x18] sm:$0xff]
    %v6550 = vld [vmem:[#allocation16 + $0x20] sm:$0xff]
    %v6551 = vld [vmem:[#allocation16 + $0x28] sm:$0xff]
    %v6552 = vld [vmem:[#allocation16 + $0x30] sm:$0xff]
    %v6553 = vld [vmem:[#allocation16 + $0x38] sm:$0xff]
    %v6554 = vld [vmem:[#allocation16 + $0x40] sm:$0xff]
    %v6555 = vld [vmem:[#allocation16 + $0x48] sm:$0xff]
    %v6556 = vld [vmem:[#allocation16 + $0x50] sm:$0xff]
    %v6557 = vld [vmem:[#allocation16 + $0x58] sm:$0xff]
    %v6558 = vld [vmem:[#allocation16 + $0x60] sm:$0xff]
    %v6559 = vld [vmem:[#allocation16 + $0x68] sm:$0xff]
    %v6560 = vld [vmem:[#allocation16 + $0x70] sm:$0xff]
    %v6561 = vld [vmem:[#allocation16 + $0x78] sm:$0xff]
    %v6562 = vld [vmem:[#allocation16 + $0x80] sm:$0xff]
    %v6563 = vld [vmem:[#allocation16 + $0x88] sm:$0xff]
    %v6564 = vld [vmem:[#allocation16 + $0x90] sm:$0xff]
    %v6565 = vld [vmem:[#allocation16 + $0x98] sm:$0xff]
    %v6566 = vld [vmem:[#allocation16 + $0xa0] sm:$0xff]
    %v6567 = vld [vmem:[#allocation16 + $0xa8] sm:$0xff]
    %v6568 = vld [vmem:[#allocation16 + $0xb0] sm:$0xff]
    %v6569 = vld [vmem:[#allocation16 + $0xb8] sm:$0xff]
    %v6570 = vld [vmem:[#allocation16 + $0xc0] sm:$0xff]
    %v6571 = vld [vmem:[#allocation16 + $0xc8] sm:$0xff]
    %v6572 = vld [vmem:[#allocation16 + $0xd0] sm:$0xff]
    %v6573 = vld [vmem:[#allocation16 + $0xd8] sm:$0xff]
    %v6574 = vld [vmem:[#allocation16 + $0xe0] sm:$0xff]
    %v6575 = vld [vmem:[#allocation16 + $0xe8] sm:$0xff]
    %v6576 = vld [vmem:[#allocation16 + $0xf0] sm:$0xff]
    %v6577 = vld [vmem:[#allocation16 + $0xf8] sm:$0xff]
    %v6578 = vld [vmem:[#allocation18] sm:$0x3]
    %v6580 = vperm.slane %v6578, 0
    %v6581 = vperm.slane %v6578, 1
    %6584 = vmatpush.msra.mxu0 %v6576
    %6585 = vmatpush.msra.mxu0 %v6574
    %6586 = vmatpush.msra.mxu0 %v6572
    %6587 = vmatpush.msra.mxu0 %v6570
    %6588 = vmatpush.msra.mxu0 %v6568
    %6589 = vmatpush.msra.mxu0 %v6566
    %6590 = vmatpush.msra.mxu0 %v6564
    %6591 = vmatpush.msra.mxu0 %v6562
    %6592 = vmatpush.msra.mxu0 %v6560
    %6593 = vmatpush.msra.mxu0 %v6558
    %6594 = vmatpush.msra.mxu0 %v6556
    %6595 = vmatpush.msra.mxu0 %v6554
    %6596 = vmatpush.msra.mxu0 %v6552
    %6597 = vmatpush.msra.mxu0 %v6550
    %6598 = vmatpush.msra.mxu0 %v6548
    %6599 = vmatpush.msra.mxu0 %v6546
    %6600 = vmatmul.f32.gmra.mxu0 %v6545
    %v6601 = vpop.f32.mrf.mxu0
    %v6602 = vadd.f32 %v6580, %v6601
    %6603 = vdwg.mxu0
    %6604 = vmatpush.msra.mxu0 %v6577
    %6605 = vmatpush.msra.mxu0 %v6575
    %6606 = vmatpush.msra.mxu0 %v6573
    %6607 = vmatpush.msra.mxu0 %v6571
    %6608 = vmatpush.msra.mxu0 %v6569
    %6609 = vmatpush.msra.mxu0 %v6567
    %6610 = vmatpush.msra.mxu0 %v6565
    %6611 = vmatpush.msra.mxu0 %v6563
    %6612 = vmatpush.msra.mxu0 %v6561
    %6613 = vmatpush.msra.mxu0 %v6559
    %6614 = vmatpush.msra.mxu0 %v6557
    %6615 = vmatpush.msra.mxu0 %v6555
    %6616 = vmatpush.msra.mxu0 %v6553
    %6617 = vmatpush.msra.mxu0 %v6551
    %6618 = vmatpush.msra.mxu0 %v6549
    %6619 = vmatpush.msra.mxu0 %v6547
    %6620 = vmatmul.f32.gmra.mxu0 %v6545
    %v6621 = vpop.f32.mrf.mxu0
    %v6622 = vadd.f32 %v6581, %v6621
    %6623 = vdwg.mxu0
    %v6624 = vmax.f32 %v6622, 0.0
    %v6625 = vand.u32 2147483647, %v6622
    %v6626 = vsub.f32 0.0, %v6625
    %v6627 = vmul.f32 %v6626, 1.442695
    %v6628 = vpow.pop %v6627
    %v6629 = vadd.f32 %v6628, 1.0
    %v6630 = vlog2.pop %v6629
    %v6631 = vmul.f32 %v6630, 0.6931472
    %v6632 = vmul.f32 -0.5, %v6628
    %v6633 = vadd.f32 %v6632, 1.0
    %v6634 = vmul.f32 %v6633, %v6628
    %v6635 = vand.u32 2147483647, %v6628
    %vm6636 = vcmp.lt.f32.partialorder %v6635, 0.0004427343
    %v6637 = vsel %vm6636, %v6634, %v6631
    %v6638 = vadd.f32 %v6624, %v6637
    %6639 = vst [vmem:[%s12] sm:$0xff] %v6602
    %6640 = vst [vmem:[%s12 + $0x8] sm:$0xff] %v6638
    // Predicated region
    $region94: #{view_specific_encoder_gaussian.1} parent=1 // pred_check
      _
    $region95: #{view_specific_encoder_gaussian.1} parent=1 // pred_check_branch
      %6642 = sbr.rel (0) target = $region97
    $region96: #{view_specific_encoder_gaussian.1} parent=1 // pred_region
      _
    $region97: #{view_specific_encoder_gaussian.1} parent=1 // pred_fallthru
      _
    // Predicated region
    $region98: #{view_specific_encoder_gaussian.1} parent=1 // pred_check
      _
    $region99: #{view_specific_encoder_gaussian.1} parent=1 // pred_check_branch
      %6644 = sbr.rel (0) target = $region101
    $region100: #{view_specific_encoder_gaussian.1} parent=1 // pred_region
      _
    $region101: #{view_specific_encoder_gaussian.1} parent=1 // pred_fallthru
      _
    %6645 = vsyncpa [#allocation3], 1
    %6646 = vsyncpa [#allocation5], 1
    %6647 = vsyncpa [#allocation8], 1
    %6648 = vsyncpa [#allocation11], 1
    %6649 = vsyncpa [#allocation14], 1
    %6650 = vsyncpa [#allocation17], 1

</llo_original>
